<compile_context>
chip_gen: v6e
topology: v6e:2x2x1
jax: 0.10.0
libtpu: 0.0.40
codegen_flags: <defaults>
</compile_context>

<pallas_src>
import math
import functools

import jax
import jax.numpy as jnp
from jax import lax
from jax.experimental import pallas as pl
from jax.experimental.pallas import tpu as pltpu

NEG_INF = -1e18


# ----------------------------- in-kernel helpers -----------------------------

def _gelu(x):
    # PALM/PreSumm gelu (tanh approximation), computed in f32.
    return 0.5 * x * (1.0 + jnp.tanh(
        math.sqrt(2.0 / math.pi) * (x + 0.044715 * x * x * x)))


def _layer_norm(x, g, b, eps=1e-6):
    # x: [M, D] f32, g/b: [1, D] f32
    mu = jnp.mean(x, axis=-1, keepdims=True)
    xc = x - mu
    var = jnp.mean(xc * xc, axis=-1, keepdims=True)
    return xc * lax.rsqrt(var + eps) * g + b


def _split_heads(x, heads, use_einshape):
    # [T, D] -> [heads, T, D // heads]
    T, D = x.shape
    hd = D // heads
    if use_einshape:
        return pltpu.einshape("q(hd)->hqd", x, h=heads)
    # fallback: per-head lane slices (previously validated lowering path)
    return jnp.stack([x[:, h * hd:(h + 1) * hd] for h in range(heads)], axis=0)


def _merge_heads(x, use_einshape):
    # [heads, T, hd] -> [T, heads * hd]
    H, T, hd = x.shape
    if use_einshape:
        return pltpu.einshape("hqd->q(hd)", x)
    return jnp.concatenate([x[h] for h in range(H)], axis=-1)


def _attend(q, k, v, bias, heads, use_einshape):
    """Multi-head attention core for one batch row.

    q: [Tq, D] f32, k/v: [Tk, D] f32, bias: additive f32 broadcastable to [Tq, Tk].
    Returns (context [Tq, D] bf16 - before the output projection, head-0 probs [Tq, Tk] f32).
    """
    Tq, D = q.shape
    hd = D // heads

    qs = _split_heads(q.astype(jnp.bfloat16), heads, use_einshape)   # [H, Tq, hd]
    ks = _split_heads(k.astype(jnp.bfloat16), heads, use_einshape)   # [H, Tk, hd]
    vs = _split_heads(v.astype(jnp.bfloat16), heads, use_einshape)   # [H, Tk, hd]

    scores = jnp.einsum('hqd,hkd->hqk', qs, ks,
                        preferred_element_type=jnp.float32)          # [H, Tq, Tk]
    # scale applied once in f32 + additive mask (no full-size select)
    scores = scores * (1.0 / math.sqrt(hd)) + bias[None]

    m = jnp.max(scores, axis=-1, keepdims=True)
    e = jnp.exp(scores - m)
    p = e * pl.reciprocal(jnp.sum(e, axis=-1, keepdims=True), approx=True)

    ctx = jnp.einsum('hqk,hkd->hqd', p.astype(jnp.bfloat16), vs,
                     preferred_element_type=jnp.float32)             # [H, Tq, hd]
    return _merge_heads(ctx.astype(jnp.bfloat16), use_einshape), p[0]


# ----------------------------- fused decoder kernel ---------------------------

def fused_decoder_kernel(heads, collect_aux, use_einshape,
                         x_ref, mem_ref, tpad_ref, spad_ref, ln_ref,
                         sqkv_w_ref, sqkv_b_ref, so_w_ref, so_b_ref,
                         cq_w_ref, cq_b_ref, ckv_w_ref, ckv_b_ref,
                         co_w_ref, co_b_ref,
                         w1_ref, b1_ref, w2_ref, b2_ref,
                         *refs):
    if collect_aux:
        out_ref, attn_ref, saved_ref, resid_ref = refs
    else:
        out_ref, resid_ref = refs

    layer = pl.program_id(1)
    n_layers = pl.num_programs(1)

    # residual stream lives in f32 VMEM scratch across the (sequential) layer axis
    @pl.when(layer == 0)
    def _():
        resid_ref[...] = x_ref[...].astype(jnp.float32)

    x = resid_ref[...]                           # [Bb, T, D] f32
    Bb, T, D = x.shape
    S = mem_ref.shape[1]
    x2 = x.reshape(Bb * T, D)                    # flatten batch rows -> bigger MXU M

    ln = ln_ref[0]                               # [4, 2, D] f32

    # ---- additive masks rebuilt in-kernel (no dense HBM masks) ----
    tpad = tpad_ref[...]                         # [Bb, 1, T] (1.0 => pad)
    spad = spad_ref[...]                         # [Bb, 1, S]
    row = lax.broadcasted_iota(jnp.int32, (T, T), 0)
    col = lax.broadcasted_iota(jnp.int32, (T, T), 1)
    causal_bias = jnp.where(col > row, NEG_INF, 0.0)        # [T, T]
    dec_bias = causal_bias[None, :, :] + tpad * NEG_INF     # [Bb, T, T]
    src_bias = spad * NEG_INF                               # [Bb, 1, S]

    # ---- self attention block ----
    input_norm = _layer_norm(x2, ln[0, 0:1, :], ln[0, 1:2, :])       # [Bb*T, D]
    if collect_aux:
        saved_ref[0] = input_norm.reshape(Bb, T, D).astype(saved_ref.dtype)

    qkv = jnp.dot(input_norm.astype(jnp.bfloat16), sqkv_w_ref[0],
                  preferred_element_type=jnp.float32) + sqkv_b_ref[0]
    q3 = qkv[:, 0 * D:1 * D].reshape(Bb, T, D)
    k3 = qkv[:, 1 * D:2 * D].reshape(Bb, T, D)
    v3 = qkv[:, 2 * D:3 * D].reshape(Bb, T, D)

    ctx_rows = []
    for b in range(Bb):                                               # static, small
        c_b, _ = _attend(q3[b], k3[b], v3[b], dec_bias[b], heads, use_einshape)
        ctx_rows.append(c_b)
    sa_ctx = jnp.stack(ctx_rows, axis=0).reshape(Bb * T, D)           # bf16
    sa_out = jnp.dot(sa_ctx, so_w_ref[0],
                     preferred_element_type=jnp.float32) + so_b_ref[0]
    query = sa_out + x2                                               # drop(.) + inputs

    # ---- cross attention block ----
    query_norm = _layer_norm(query, ln[1, 0:1, :], ln[1, 1:2, :])
    cq = jnp.dot(query_norm.astype(jnp.bfloat16), cq_w_ref[0],
                 preferred_element_type=jnp.float32) + cq_b_ref[0]
    cq3 = cq.reshape(Bb, T, D)
    mem2 = mem_ref[...].reshape(Bb * S, D)                            # bf16
    ckv = jnp.dot(mem2, ckv_w_ref[0],
                  preferred_element_type=jnp.float32) + ckv_b_ref[0]
    ck3 = ckv[:, 0 * D:1 * D].reshape(Bb, S, D)
    cv3 = ckv[:, 1 * D:2 * D].reshape(Bb, S, D)

    ctx_rows = []
    attn_rows = []
    for b in range(Bb):
        c_b, p_b = _attend(cq3[b], ck3[b], cv3[b], src_bias[b], heads, use_einshape)
        ctx_rows.append(c_b)
        attn_rows.append(p_b)
    ca_ctx = jnp.stack(ctx_rows, axis=0).reshape(Bb * T, D)           # bf16
    mid = jnp.dot(ca_ctx, co_w_ref[0],
                  preferred_element_type=jnp.float32) + co_b_ref[0]
    if collect_aux:
        attn_ref[0] = jnp.stack(attn_rows, axis=0).astype(attn_ref.dtype)

    # ---- position-wise feed forward (own LayerNorm + residual) ----
    y = mid + query
    y_norm = _layer_norm(y, ln[2, 0:1, :], ln[2, 1:2, :])
    h1 = _gelu(jnp.dot(y_norm.astype(jnp.bfloat16), w1_ref[0],
                       preferred_element_type=jnp.float32) + b1_ref[0])
    h2 = jnp.dot(h1.astype(jnp.bfloat16), w2_ref[0],
                 preferred_element_type=jnp.float32) + b2_ref[0]
    out = h2 + y                                                      # [Bb*T, D] f32

    resid_ref[...] = out.reshape(Bb, T, D)

    # ---- fused final decoder LayerNorm on the last layer only ----
    @pl.when(layer == n_layers - 1)
    def _():
        final = _layer_norm(out, ln[3, 0:1, :], ln[3, 1:2, :])
        out_ref[...] = final.reshape(Bb, T, D).astype(out_ref.dtype)


# ------------------------------ host-side wrapper ------------------------------

def _vmem_limit_bytes():
    # Generation-aware scoped-VMEM cap (v5e/v6e: 128 MiB, v7x: 64 MiB/TC), ~25% headroom.
    try:
        cap = int(pltpu.get_tpu_info().vmem_capacity_bytes)
    except Exception:
        cap = 64 << 20          # conservative fallback (v7x per-TC VMEM)
    return max(32 << 20, (cap * 3) // 4)


def _pick_block_b(B, T, target_m=256):
    """Batch rows per grid step: fill MXU M (>=128/256) but keep >=2 parallel blocks."""
    bb = min(B, max(1, target_m // T))
    while B % bb:
        bb -= 1
    while bb > 1 and B // bb < 2:       # leave work for v7x's second TensorCore
        bb //= 2
        while B % bb:
            bb -= 1
    return bb


def fused_decoder(x, mem, tpad, spad, p, heads, *, use_einshape, collect_aux=True):
    B, T, D = x.shape
    S = mem.shape[1]
    L = p['ln'].shape[0]
    d_ff = p['ff_w1'].shape[-1]
    assert D % heads == 0

    block_b = _pick_block_b(B, T)
    n_b = B // block_b

    kernel = functools.partial(fused_decoder_kernel, heads, collect_aux, use_einshape)

    act = lambda b, l: (b, 0, 0)        # activations: vary only with batch block
    wl3 = lambda b, l: (l, 0, 0)        # weights: vary only with layer (prefetched)
    wl4 = lambda b, l: (l, 0, 0, 0)
    aux = lambda b, l: (l, b, 0, 0)

    in_specs = [
        pl.BlockSpec((block_b, T, D), act),      # residual-stream input (bf16)
        pl.BlockSpec((block_b, S, D), act),      # memory bank (bf16)
        pl.BlockSpec((block_b, 1, T), act),      # tgt pad vector
        pl.BlockSpec((block_b, 1, S), act),      # src pad vector
        pl.BlockSpec((1, 4, 2, D), wl4),         # LNs: 3 per-layer + folded final LN
        pl.BlockSpec((1, D, 3 * D), wl3),        # self-attn fused QKV weight
        pl.BlockSpec((1, 1, 3 * D), wl3),        # self-attn fused QKV bias
        pl.BlockSpec((1, D, D), wl3),            # self-attn out proj
        pl.BlockSpec((1, 1, D), wl3),
        pl.BlockSpec((1, D, D), wl3),            # cross-attn Q
        pl.BlockSpec((1, 1, D), wl3),
        pl.BlockSpec((1, D, 2 * D), wl3),        # cross-attn fused KV
        pl.BlockSpec((1, 1, 2 * D), wl3),
        pl.BlockSpec((1, D, D), wl3),            # cross-attn out proj
        pl.BlockSpec((1, 1, D), wl3),
        pl.BlockSpec((1, D, d_ff), wl3),         # FFN w1
        pl.BlockSpec((1, 1, d_ff), wl3),
        pl.BlockSpec((1, d_ff, D), wl3),         # FFN w2
        pl.BlockSpec((1, 1, D), wl3),
    ]

    out_shape = [jax.ShapeDtypeStruct((B, T, D), jnp.float32)]
    out_specs = [pl.BlockSpec((block_b, T, D), act)]
    if collect_aux:
        out_shape += [jax.ShapeDtypeStruct((L, B, T, S), jnp.bfloat16),   # head-0 attn
                      jax.ShapeDtypeStruct((L, B, T, D), jnp.bfloat16)]   # all_input
        out_specs += [pl.BlockSpec((1, block_b, T, S), aux),
                      pl.BlockSpec((1, block_b, T, D), aux)]

    return pl.pallas_call(
        kernel,
        out_shape=tuple(out_shape),
        grid_spec=pltpu.PrefetchScalarGridSpec(
            num_scalar_prefetch=0,
            grid=(n_b, L),                        # layer axis innermost, sequential
            in_specs=in_specs,
            out_specs=tuple(out_specs),
            scratch_shapes=[pltpu.VMEM((block_b, T, D), jnp.float32)]),
        compiler_params=pltpu.CompilerParams(
            dimension_semantics=("parallel", "arbitrary"),
            vmem_limit_bytes=_vmem_limit_bytes()),
    )(x, mem, tpad, spad, p['ln'],
      p['self_qkv_w'], p['self_qkv_b'], p['self_out_w'], p['self_out_b'],
      p['ctx_q_w'], p['ctx_q_b'], p['ctx_kv_w'], p['ctx_kv_b'],
      p['ctx_out_w'], p['ctx_out_b'],
      p['ff_w1'], p['ff_b1'], p['ff_w2'], p['ff_b2'])


def transformer_decoder_forward(tgt, src, memory_bank, params, heads, padding_idx):
    """Equivalent of TransformerDecoder.forward (cache is None, previous_input is None,
    memory_masks is None, step is None)."""
    B, T = tgt.shape
    S = src.shape[1]
    D = params['embedding'].shape[1]
    L = params['ln'].shape[0]

    # embeddings + sinusoidal PositionalEncoding (dropout = 0)
    emb = params['embedding'][tgt]                                    # [B, T, D] f32
    x_in = (emb * math.sqrt(D) + params['pe'][:T][None, :, :]).astype(jnp.bfloat16)
    mem = memory_bank.astype(jnp.bfloat16)

    # only pad *vectors* go to the kernel; masks are rebuilt in-kernel
    tgt_pad = (tgt == padding_idx).astype(jnp.float32).reshape(B, 1, T)
    src_pad = (src == padding_idx).astype(jnp.float32).reshape(B, 1, S)

    res = None
    for use_einshape in (True, False):
        try:
            res = fused_decoder(x_in, mem, tgt_pad, src_pad, params, heads,
                                use_einshape=use_einshape)
            res = jax.block_until_ready(res)
            break
        except Exception:
            if not use_einshape:
                raise
            # TODO(synk): pltpu.einshape head split/merge rejected by this toolchain ->
            #             retry with the previously-validated lane-slice path.
            res = None

    output, attn, saved = res
    attns = [attn[i].astype(jnp.float32) for i in range(L)]           # list of [B, T, S]
    saved_inputs = saved.astype(jnp.float32)                          # [L, B, T, D]
    return output, attns, saved_inputs


# ------------------------------ parameter init ---------------------------------

def init_params(key, num_layers, vocab, d_model, d_ff, padding_idx, max_len=512):
    k_emb, k_w = jax.random.split(key)

    emb = 0.02 * jax.random.normal(k_emb, (vocab, d_model), jnp.float32)
    emb = emb.at[padding_idx].set(0.0)

    # sinusoidal positional-encoding table
    position = jnp.arange(max_len, dtype=jnp.float32)[:, None]
    div_term = jnp.exp(jnp.arange(0, d_model, 2, dtype=jnp.float32) *
                       -(math.log(10000.0) / d_model))
    pe = jnp.zeros((max_len, d_model), jnp.float32)
    pe = pe.at[:, 0::2].set(jnp.sin(position * div_term))
    pe = pe.at[:, 1::2].set(jnp.cos(position * div_term))

    def nrm(k, shape):
        return (0.02 * jax.random.normal(k, shape, jnp.float32)).astype(jnp.bfloat16)

    L = num_layers
    ws = jax.random.split(k_w, 7)

    # LayerNorms: [L, 4, 2, D]; slots 0..2 are each layer's three LNs, slot 3 is the
    # decoder-level final LayerNorm (only read on the last layer of the fused kernel).
    ln = jnp.concatenate([jnp.ones((L, 4, 1, d_model), jnp.float32),
                          jnp.zeros((L, 4, 1, d_model), jnp.float32)], axis=2)

    return dict(
        embedding=emb, pe=pe, ln=ln,
        self_qkv_w=nrm(ws[0], (L, d_model, 3 * d_model)),
        self_qkv_b=jnp.zeros((L, 1, 3 * d_model), jnp.float32),
        self_out_w=nrm(ws[1], (L, d_model, d_model)),
        self_out_b=jnp.zeros((L, 1, d_model), jnp.float32),
        ctx_q_w=nrm(ws[2], (L, d_model, d_model)),
        ctx_q_b=jnp.zeros((L, 1, d_model), jnp.float32),
        ctx_kv_w=nrm(ws[3], (L, d_model, 2 * d_model)),
        ctx_kv_b=jnp.zeros((L, 1, 2 * d_model), jnp.float32),
        ctx_out_w=nrm(ws[4], (L, d_model, d_model)),
        ctx_out_b=jnp.zeros((L, 1, d_model), jnp.float32),
        ff_w1=nrm(ws[5], (L, d_model, d_ff)),
        ff_b1=jnp.zeros((L, 1, d_ff), jnp.float32),
        ff_w2=nrm(ws[6], (L, d_ff, d_model)),
        ff_b2=jnp.zeros((L, 1, d_model), jnp.float32),
    )


# ------------------------------------ main --------------------------------------

if __name__ == "__main__":
    key = jax.random.PRNGKey(0)
    B, T, S = 4, 16, 16
    D, H, D_FF = 128, 4, 256
    VOCAB, PAD = 50, 0
    NUM_LAYERS = 2

    k_par, k_tgt, k_src, k_mem = jax.random.split(key, 4)
    params = init_params(k_par, NUM_LAYERS, VOCAB, D, D_FF, PAD)

    tgt = jax.random.randint(k_tgt, (B, T), 1, VOCAB, dtype=jnp.int32)
    tgt = tgt.at[:, -2:].set(PAD)                       # some target padding
    src = jax.random.randint(k_src, (B, S), 1, VOCAB, dtype=jnp.int32)
    src = src.at[1, -3:].set(PAD)                       # some source padding
    memory_bank = jax.random.normal(k_mem, (B, S, D), jnp.float32)

    output, attns, saved_inputs = transformer_decoder_forward(
        tgt, src, memory_bank, params, H, PAD)

    jax.block_until_ready(output)
    jax.block_until_ready(attns)
    jax.block_until_ready(saved_inputs)

    assert output.shape == (B, T, D) and output.dtype == jnp.float32
    assert len(attns) == NUM_LAYERS and all(a.shape == (B, T, S) for a in attns)
    assert saved_inputs.shape == (NUM_LAYERS, B, T, D)
    assert bool(jnp.isfinite(output).all())
    assert bool(jnp.isfinite(saved_inputs).all())
    assert bool(jnp.isfinite(attns[-1]).all())
    # exported cross-attention rows are probabilities (bf16 storage + approx reciprocal)
    row_sums = attns[-1].sum(-1)
    assert bool(jnp.all(jnp.abs(row_sums - 1.0) < 0.08))
    # fused final LayerNorm (gamma=1, beta=0) => per-row mean ~ 0
    assert bool(jnp.all(jnp.abs(output.mean(-1)) < 1e-2))
    print("KERNEL_OK")
</pallas_src>

<mosaic_0001>
module attributes {stable_mosaic.version = 11 : i64} {
  func.func @fused_decoder_kernel(%arg0: i32, %arg1: i32, %arg2: memref<2x16x128xbf16, #tpu.memory_space<vmem>>, %arg3: memref<2x16x128xbf16, #tpu.memory_space<vmem>>, %arg4: memref<2x1x16xf32, #tpu.memory_space<vmem>>, %arg5: memref<2x1x16xf32, #tpu.memory_space<vmem>>, %arg6: memref<1x4x2x128xf32, #tpu.memory_space<vmem>>, %arg7: memref<1x128x384xbf16, #tpu.memory_space<vmem>>, %arg8: memref<1x1x384xf32, #tpu.memory_space<vmem>>, %arg9: memref<1x128x128xbf16, #tpu.memory_space<vmem>>, %arg10: memref<1x1x128xf32, #tpu.memory_space<vmem>>, %arg11: memref<1x128x128xbf16, #tpu.memory_space<vmem>>, %arg12: memref<1x1x128xf32, #tpu.memory_space<vmem>>, %arg13: memref<1x128x256xbf16, #tpu.memory_space<vmem>>, %arg14: memref<1x1x256xf32, #tpu.memory_space<vmem>>, %arg15: memref<1x128x128xbf16, #tpu.memory_space<vmem>>, %arg16: memref<1x1x128xf32, #tpu.memory_space<vmem>>, %arg17: memref<1x128x256xbf16, #tpu.memory_space<vmem>>, %arg18: memref<1x1x256xf32, #tpu.memory_space<vmem>>, %arg19: memref<1x256x128xbf16, #tpu.memory_space<vmem>>, %arg20: memref<1x1x128xf32, #tpu.memory_space<vmem>>, %arg21: memref<2x16x128xf32, #tpu.memory_space<vmem>>, %arg22: memref<1x2x16x16xbf16, #tpu.memory_space<vmem>>, %arg23: memref<1x2x16x128xbf16, #tpu.memory_space<vmem>>, %arg24: memref<2x16x128xf32, #tpu.memory_space<vmem>>) attributes {dimension_semantics = [#tpu.dimension_semantics<parallel>, #tpu.dimension_semantics<arbitrary>], iteration_bounds = array<i64: 2, 2>, scalar_prefetch = 0 : i64, scratch_operands = 1 : i64, tpu.core_type = #tpu.core_type<tc>, window_params = [{transform_indices = @transform_0, window_bounds = array<i64: 2, 16, 128>}, {transform_indices = @transform_1, window_bounds = array<i64: 2, 16, 128>}, {transform_indices = @transform_2, window_bounds = array<i64: 2, 1, 16>}, {transform_indices = @transform_3, window_bounds = array<i64: 2, 1, 16>}, {transform_indices = @transform_4, window_bounds = array<i64: 1, 4, 2, 128>}, {transform_indices = @transform_5, window_bounds = array<i64: 1, 128, 384>}, {transform_indices = @transform_6, window_bounds = array<i64: 1, 1, 384>}, {transform_indices = @transform_7, window_bounds = array<i64: 1, 128, 128>}, {transform_indices = @transform_8, window_bounds = array<i64: 1, 1, 128>}, {transform_indices = @transform_9, window_bounds = array<i64: 1, 128, 128>}, {transform_indices = @transform_10, window_bounds = array<i64: 1, 1, 128>}, {transform_indices = @transform_11, window_bounds = array<i64: 1, 128, 256>}, {transform_indices = @transform_12, window_bounds = array<i64: 1, 1, 256>}, {transform_indices = @transform_13, window_bounds = array<i64: 1, 128, 128>}, {transform_indices = @transform_14, window_bounds = array<i64: 1, 1, 128>}, {transform_indices = @transform_15, window_bounds = array<i64: 1, 128, 256>}, {transform_indices = @transform_16, window_bounds = array<i64: 1, 1, 256>}, {transform_indices = @transform_17, window_bounds = array<i64: 1, 256, 128>}, {transform_indices = @transform_18, window_bounds = array<i64: 1, 1, 128>}, {transform_indices = @transform_19, window_bounds = array<i64: 2, 16, 128>}, {transform_indices = @transform_20, window_bounds = array<i64: 1, 2, 16, 16>}, {transform_indices = @transform_21, window_bounds = array<i64: 1, 2, 16, 128>}]} {
    %c0_i32 = arith.constant 0 : i32
    %0 = arith.cmpi eq, %arg1, %c0_i32 : i32
    %1 = arith.extui %0 : i1 to i32
    %c0_i32_0 = arith.constant 0 : i32
    %2 = arith.cmpi ne, %1, %c0_i32_0 : i32
    scf.if %2 {
      %c0_119 = arith.constant 0 : index
      %c0_120 = arith.constant 0 : index
      %c0_121 = arith.constant 0 : index
      %470 = vector.load %arg2[%c0_119, %c0_120, %c0_121] : memref<2x16x128xbf16, #tpu.memory_space<vmem>>, vector<2x16x128xbf16>
      %471 = arith.extf %470 : vector<2x16x128xbf16> to vector<2x16x128xf32>
      %c0_122 = arith.constant 0 : index
      %c0_123 = arith.constant 0 : index
      %c0_124 = arith.constant 0 : index
      %472 = vector.load %arg24[%c0_122, %c0_123, %c0_124] : memref<2x16x128xf32, #tpu.memory_space<vmem>>, vector<2x16x128xf32>
      tpu.vector_store %arg24[%c0_122, %c0_123, %c0_124], %471 {strides = array<i32>} : memref<2x16x128xf32, #tpu.memory_space<vmem>>, vector<2x16x128xf32>,
    } else {
    }
    %c0 = arith.constant 0 : index
    %c0_1 = arith.constant 0 : index
    %c0_2 = arith.constant 0 : index
    %3 = vector.load %arg24[%c0, %c0_1, %c0_2] : memref<2x16x128xf32, #tpu.memory_space<vmem>>, vector<2x16x128xf32>
    %4 = vector.shape_cast %3 : vector<2x16x128xf32> to vector<32x128xf32>
    %c0_3 = arith.constant 0 : index
    %c0_4 = arith.constant 0 : index
    %c0_5 = arith.constant 0 : index
    %c0_6 = arith.constant 0 : index
    %5 = vector.load %arg6[%c0_3, %c0_4, %c0_5, %c0_6] : memref<1x4x2x128xf32, #tpu.memory_space<vmem>>, vector<1x4x2x128xf32>
    %6 = vector.shape_cast %5 : vector<1x4x2x128xf32> to vector<4x2x128xf32>
    %c0_7 = arith.constant 0 : index
    %c0_8 = arith.constant 0 : index
    %c0_9 = arith.constant 0 : index
    %7 = vector.load %arg4[%c0_7, %c0_8, %c0_9] : memref<2x1x16xf32, #tpu.memory_space<vmem>>, vector<2x1x16xf32>
    %c0_10 = arith.constant 0 : index
    %c0_11 = arith.constant 0 : index
    %c0_12 = arith.constant 0 : index
    %8 = vector.load %arg5[%c0_10, %c0_11, %c0_12] : memref<2x1x16xf32, #tpu.memory_space<vmem>>, vector<2x1x16xf32>
    %9 = tpu.iota {dimensions = array<i32: 0>} : vector<16x16xi32>
    %10 = tpu.iota {dimensions = array<i32: 1>} : vector<16x16xi32>
    %11 = arith.cmpi sgt, %10, %9 : vector<16x16xi32>
    %cst = arith.constant -9.99999984E+17 : f32
    %cst_13 = arith.constant 0.000000e+00 : f32
    %12 = vector.broadcast %cst : f32 to vector<16x16xf32>
    %13 = vector.broadcast %cst_13 : f32 to vector<16x16xf32>
    %14 = arith.select %11, %12, %13 : vector<16x16xi1>, vector<16x16xf32>
    %15 = vector.shape_cast %14 : vector<16x16xf32> to vector<1x16x16xf32>
    %cst_14 = arith.constant -9.99999984E+17 : f32
    %16 = vector.broadcast %cst_14 : f32 to vector<2x1x16xf32>
    %17 = arith.mulf %7, %16 : vector<2x1x16xf32>
    %18 = vector.broadcast %15 : vector<1x16x16xf32> to vector<2x16x16xf32>
    %19 = vector.broadcast %17 : vector<2x1x16xf32> to vector<2x16x16xf32>
    %20 = arith.addf %18, %19 : vector<2x16x16xf32>
    %cst_15 = arith.constant -9.99999984E+17 : f32
    %21 = vector.broadcast %cst_15 : f32 to vector<2x1x16xf32>
    %22 = arith.mulf %8, %21 : vector<2x1x16xf32>
    %23 = vector.extract_strided_slice %6 {offsets = [0, 0, 0], sizes = [1, 1, 128], strides = [1, 1, 1]} : vector<4x2x128xf32> to vector<1x1x128xf32>
    %24 = vector.shape_cast %23 : vector<1x1x128xf32> to vector<1x128xf32>
    %25 = vector.extract_strided_slice %6 {offsets = [0, 1, 0], sizes = [1, 1, 128], strides = [1, 1, 1]} : vector<4x2x128xf32> to vector<1x1x128xf32>
    %26 = vector.shape_cast %25 : vector<1x1x128xf32> to vector<1x128xf32>
    %cst_16 = arith.constant dense<0.000000e+00> : vector<32xf32>
    %27 = vector.multi_reduction <add>, %4, %cst_16 [1] : vector<32x128xf32> to vector<32xf32>
    %28 = vector.shape_cast %27 : vector<32xf32> to vector<32x1xf32>
    %cst_17 = arith.constant 1.280000e+02 : f32
    %29 = vector.broadcast %cst_17 : f32 to vector<32x1xf32>
    %30 = arith.divf %28, %29 : vector<32x1xf32>
    %31 = vector.broadcast %30 : vector<32x1xf32> to vector<32x128xf32>
    %32 = arith.subf %4, %31 : vector<32x128xf32>
    %33 = arith.mulf %32, %32 : vector<32x128xf32>
    %cst_18 = arith.constant dense<0.000000e+00> : vector<32xf32>
    %34 = vector.multi_reduction <add>, %33, %cst_18 [1] : vector<32x128xf32> to vector<32xf32>
    %35 = vector.shape_cast %34 : vector<32xf32> to vector<32x1xf32>
    %cst_19 = arith.constant 1.280000e+02 : f32
    %36 = vector.broadcast %cst_19 : f32 to vector<32x1xf32>
    %37 = arith.divf %35, %36 : vector<32x1xf32>
    %cst_20 = arith.constant 9.99999997E-7 : f32
    %38 = vector.broadcast %cst_20 : f32 to vector<32x1xf32>
    %39 = arith.addf %37, %38 : vector<32x1xf32>
    %40 = math.rsqrt %39 : vector<32x1xf32>
    %41 = vector.broadcast %40 : vector<32x1xf32> to vector<32x128xf32>
    %42 = arith.mulf %32, %41 : vector<32x128xf32>
    %43 = vector.broadcast %24 : vector<1x128xf32> to vector<32x128xf32>
    %44 = arith.mulf %42, %43 : vector<32x128xf32>
    %45 = vector.broadcast %26 : vector<1x128xf32> to vector<32x128xf32>
    %46 = arith.addf %44, %45 : vector<32x128xf32>
    %47 = vector.shape_cast %46 : vector<32x128xf32> to vector<2x16x128xf32>
    %48 = arith.truncf %47 : vector<2x16x128xf32> to vector<2x16x128xbf16>
    %c0_21 = arith.constant 0 : index
    %c0_22 = arith.constant 0 : index
    %c0_23 = arith.constant 0 : index
    %c0_24 = arith.constant 0 : index
    %49 = vector.load %arg23[%c0_21, %c0_22, %c0_23, %c0_24] : memref<1x2x16x128xbf16, #tpu.memory_space<vmem>>, vector<1x2x16x128xbf16>
    %50 = vector.shape_cast %49 : vector<1x2x16x128xbf16> to vector<2x16x128xbf16>
    %51 = vector.shape_cast %48 : vector<2x16x128xbf16> to vector<1x2x16x128xbf16>
    tpu.vector_store %arg23[%c0_21, %c0_22, %c0_23, %c0_24], %51 {strides = array<i32>} : memref<1x2x16x128xbf16, #tpu.memory_space<vmem>>, vector<1x2x16x128xbf16>,
    %52 = arith.truncf %46 : vector<32x128xf32> to vector<32x128xbf16>
    %c0_25 = arith.constant 0 : index
    %c0_26 = arith.constant 0 : index
    %c0_27 = arith.constant 0 : index
    %53 = vector.load %arg7[%c0_25, %c0_26, %c0_27] : memref<1x128x384xbf16, #tpu.memory_space<vmem>>, vector<1x128x384xbf16>
    %54 = vector.shape_cast %53 : vector<1x128x384xbf16> to vector<128x384xbf16>
    %cst_28 = arith.constant dense<0.000000e+00> : vector<32x384xf32>
    %55 = tpu.matmul %52, %54, %cst_28 {dimension_numbers = #tpu.dot_dimension_numbers<[1], [0], [0], [1], [0, 0, 1, 1], [], []>} : vector<32x128xbf16>, vector<128x384xbf16>, vector<32x384xf32> -> vector<32x384xf32>
    %c0_29 = arith.constant 0 : index
    %c0_30 = arith.constant 0 : index
    %c0_31 = arith.constant 0 : index
    %56 = vector.load %arg8[%c0_29, %c0_30, %c0_31] : memref<1x1x384xf32, #tpu.memory_space<vmem>>, vector<1x1x384xf32>
    %57 = vector.shape_cast %56 : vector<1x1x384xf32> to vector<1x384xf32>
    %58 = vector.broadcast %57 : vector<1x384xf32> to vector<32x384xf32>
    %59 = arith.addf %55, %58 : vector<32x384xf32>
    %60 = vector.extract_strided_slice %59 {offsets = [0, 0], sizes = [32, 128], strides = [1, 1]} : vector<32x384xf32> to vector<32x128xf32>
    %61 = vector.shape_cast %60 : vector<32x128xf32> to vector<2x16x128xf32>
    %62 = vector.extract_strided_slice %59 {offsets = [0, 128], sizes = [32, 128], strides = [1, 1]} : vector<32x384xf32> to vector<32x128xf32>
    %63 = vector.shape_cast %62 : vector<32x128xf32> to vector<2x16x128xf32>
    %64 = vector.extract_strided_slice %59 {offsets = [0, 256], sizes = [32, 128], strides = [1, 1]} : vector<32x384xf32> to vector<32x128xf32>
    %65 = vector.shape_cast %64 : vector<32x128xf32> to vector<2x16x128xf32>
    %66 = vector.extract_strided_slice %61 {offsets = [0, 0, 0], sizes = [1, 16, 128], strides = [1, 1, 1]} : vector<2x16x128xf32> to vector<1x16x128xf32>
    %67 = vector.shape_cast %66 : vector<1x16x128xf32> to vector<16x128xf32>
    %68 = vector.extract_strided_slice %63 {offsets = [0, 0, 0], sizes = [1, 16, 128], strides = [1, 1, 1]} : vector<2x16x128xf32> to vector<1x16x128xf32>
    %69 = vector.shape_cast %68 : vector<1x16x128xf32> to vector<16x128xf32>
    %70 = vector.extract_strided_slice %65 {offsets = [0, 0, 0], sizes = [1, 16, 128], strides = [1, 1, 1]} : vector<2x16x128xf32> to vector<1x16x128xf32>
    %71 = vector.shape_cast %70 : vector<1x16x128xf32> to vector<16x128xf32>
    %72 = vector.extract_strided_slice %20 {offsets = [0, 0, 0], sizes = [1, 16, 16], strides = [1, 1, 1]} : vector<2x16x16xf32> to vector<1x16x16xf32>
    %73 = vector.shape_cast %72 : vector<1x16x16xf32> to vector<16x16xf32>
    %74 = arith.truncf %67 : vector<16x128xf32> to vector<16x128xbf16>
    %75 = vector.extract_strided_slice %74 {offsets = [0, 0], sizes = [16, 32], strides = [1, 1]} : vector<16x128xbf16> to vector<16x32xbf16>
    %76 = vector.extract_strided_slice %74 {offsets = [0, 32], sizes = [16, 32], strides = [1, 1]} : vector<16x128xbf16> to vector<16x32xbf16>
    %77 = vector.extract_strided_slice %74 {offsets = [0, 64], sizes = [16, 32], strides = [1, 1]} : vector<16x128xbf16> to vector<16x32xbf16>
    %78 = vector.extract_strided_slice %74 {offsets = [0, 96], sizes = [16, 32], strides = [1, 1]} : vector<16x128xbf16> to vector<16x32xbf16>
    %79 = vector.shape_cast %75 : vector<16x32xbf16> to vector<1x16x32xbf16>
    %80 = vector.shape_cast %76 : vector<16x32xbf16> to vector<1x16x32xbf16>
    %81 = vector.shape_cast %77 : vector<16x32xbf16> to vector<1x16x32xbf16>
    %82 = vector.shape_cast %78 : vector<16x32xbf16> to vector<1x16x32xbf16>
    %83 = tpu.concatenate %79, %80, %81, %82 in 0 : vector<1x16x32xbf16>, vector<1x16x32xbf16>, vector<1x16x32xbf16>, vector<1x16x32xbf16> -> vector<4x16x32xbf16>
    %84 = arith.truncf %69 : vector<16x128xf32> to vector<16x128xbf16>
    %85 = vector.extract_strided_slice %84 {offsets = [0, 0], sizes = [16, 32], strides = [1, 1]} : vector<16x128xbf16> to vector<16x32xbf16>
    %86 = vector.extract_strided_slice %84 {offsets = [0, 32], sizes = [16, 32], strides = [1, 1]} : vector<16x128xbf16> to vector<16x32xbf16>
    %87 = vector.extract_strided_slice %84 {offsets = [0, 64], sizes = [16, 32], strides = [1, 1]} : vector<16x128xbf16> to vector<16x32xbf16>
    %88 = vector.extract_strided_slice %84 {offsets = [0, 96], sizes = [16, 32], strides = [1, 1]} : vector<16x128xbf16> to vector<16x32xbf16>
    %89 = vector.shape_cast %85 : vector<16x32xbf16> to vector<1x16x32xbf16>
    %90 = vector.shape_cast %86 : vector<16x32xbf16> to vector<1x16x32xbf16>
    %91 = vector.shape_cast %87 : vector<16x32xbf16> to vector<1x16x32xbf16>
    %92 = vector.shape_cast %88 : vector<16x32xbf16> to vector<1x16x32xbf16>
    %93 = tpu.concatenate %89, %90, %91, %92 in 0 : vector<1x16x32xbf16>, vector<1x16x32xbf16>, vector<1x16x32xbf16>, vector<1x16x32xbf16> -> vector<4x16x32xbf16>
    %94 = arith.truncf %71 : vector<16x128xf32> to vector<16x128xbf16>
    %95 = vector.extract_strided_slice %94 {offsets = [0, 0], sizes = [16, 32], strides = [1, 1]} : vector<16x128xbf16> to vector<16x32xbf16>
    %96 = vector.extract_strided_slice %94 {offsets = [0, 32], sizes = [16, 32], strides = [1, 1]} : vector<16x128xbf16> to vector<16x32xbf16>
    %97 = vector.extract_strided_slice %94 {offsets = [0, 64], sizes = [16, 32], strides = [1, 1]} : vector<16x128xbf16> to vector<16x32xbf16>
    %98 = vector.extract_strided_slice %94 {offsets = [0, 96], sizes = [16, 32], strides = [1, 1]} : vector<16x128xbf16> to vector<16x32xbf16>
    %99 = vector.shape_cast %95 : vector<16x32xbf16> to vector<1x16x32xbf16>
    %100 = vector.shape_cast %96 : vector<16x32xbf16> to vector<1x16x32xbf16>
    %101 = vector.shape_cast %97 : vector<16x32xbf16> to vector<1x16x32xbf16>
    %102 = vector.shape_cast %98 : vector<16x32xbf16> to vector<1x16x32xbf16>
    %103 = tpu.concatenate %99, %100, %101, %102 in 0 : vector<1x16x32xbf16>, vector<1x16x32xbf16>, vector<1x16x32xbf16>, vector<1x16x32xbf16> -> vector<4x16x32xbf16>
    "tpu.trace_start"() <{level = 10 : i32, message = "hqd,hkd->hqk"}> : () -> ()
    %cst_32 = arith.constant dense<0.000000e+00> : vector<4x16x16xf32>
    %104 = tpu.matmul %83, %93, %cst_32 {dimension_numbers = #tpu.dot_dimension_numbers<[2], [2], [1], [1], [0, 0, 0, 1, 1, 1], [0], [0]>} : vector<4x16x32xbf16>, vector<4x16x32xbf16>, vector<4x16x16xf32> -> vector<4x16x16xf32>
    "tpu.trace_stop"() : () -> ()
    %cst_33 = arith.constant 0.176776692 : f32
    %105 = vector.broadcast %cst_33 : f32 to vector<4x16x16xf32>
    %106 = arith.mulf %104, %105 : vector<4x16x16xf32>
    %107 = vector.shape_cast %73 : vector<16x16xf32> to vector<1x16x16xf32>
    %108 = vector.broadcast %107 : vector<1x16x16xf32> to vector<4x16x16xf32>
    %109 = arith.addf %106, %108 : vector<4x16x16xf32>
    %cst_34 = arith.constant dense<0xFF800000> : vector<4x16xf32>
    %110 = vector.multi_reduction <maximumf>, %109, %cst_34 [2] : vector<4x16x16xf32> to vector<4x16xf32>
    %111 = vector.shape_cast %110 : vector<4x16xf32> to vector<4x16x1xf32>
    %112 = vector.broadcast %111 : vector<4x16x1xf32> to vector<4x16x16xf32>
    %113 = arith.subf %109, %112 : vector<4x16x16xf32>
    %114 = math.exp %113 : vector<4x16x16xf32>
    %cst_35 = arith.constant dense<0.000000e+00> : vector<4x16xf32>
    %115 = vector.multi_reduction <add>, %114, %cst_35 [2] : vector<4x16x16xf32> to vector<4x16xf32>
    %116 = vector.shape_cast %115 : vector<4x16xf32> to vector<4x16x1xf32>
    %117 = tpu.reciprocal %116 {approx = true} : vector<4x16x1xf32> -> vector<4x16x1xf32>
    %118 = vector.broadcast %117 : vector<4x16x1xf32> to vector<4x16x16xf32>
    %119 = arith.mulf %114, %118 : vector<4x16x16xf32>
    %120 = arith.truncf %119 : vector<4x16x16xf32> to vector<4x16x16xbf16>
    "tpu.trace_start"() <{level = 10 : i32, message = "hqk,hkd->hqd"}> : () -> ()
    %cst_36 = arith.constant dense<0.000000e+00> : vector<4x16x32xf32>
    %121 = tpu.matmul %120, %103, %cst_36 {dimension_numbers = #tpu.dot_dimension_numbers<[2], [1], [1], [2], [0, 0, 0, 1, 1, 2], [0], [0]>} : vector<4x16x16xbf16>, vector<4x16x32xbf16>, vector<4x16x32xf32> -> vector<4x16x32xf32>
    "tpu.trace_stop"() : () -> ()
    %122 = arith.truncf %121 : vector<4x16x32xf32> to vector<4x16x32xbf16>
    %123 = vector.extract_strided_slice %122 {offsets = [0, 0, 0], sizes = [1, 16, 32], strides = [1, 1, 1]} : vector<4x16x32xbf16> to vector<1x16x32xbf16>
    %124 = vector.shape_cast %123 : vector<1x16x32xbf16> to vector<16x32xbf16>
    %125 = vector.extract_strided_slice %122 {offsets = [1, 0, 0], sizes = [1, 16, 32], strides = [1, 1, 1]} : vector<4x16x32xbf16> to vector<1x16x32xbf16>
    %126 = vector.shape_cast %125 : vector<1x16x32xbf16> to vector<16x32xbf16>
    %127 = vector.extract_strided_slice %122 {offsets = [2, 0, 0], sizes = [1, 16, 32], strides = [1, 1, 1]} : vector<4x16x32xbf16> to vector<1x16x32xbf16>
    %128 = vector.shape_cast %127 : vector<1x16x32xbf16> to vector<16x32xbf16>
    %129 = vector.extract_strided_slice %122 {offsets = [3, 0, 0], sizes = [1, 16, 32], strides = [1, 1, 1]} : vector<4x16x32xbf16> to vector<1x16x32xbf16>
    %130 = vector.shape_cast %129 : vector<1x16x32xbf16> to vector<16x32xbf16>
    %131 = tpu.concatenate %124, %126, %128, %130 in 1 : vector<16x32xbf16>, vector<16x32xbf16>, vector<16x32xbf16>, vector<16x32xbf16> -> vector<16x128xbf16>
    %132 = vector.extract_strided_slice %61 {offsets = [1, 0, 0], sizes = [1, 16, 128], strides = [1, 1, 1]} : vector<2x16x128xf32> to vector<1x16x128xf32>
    %133 = vector.shape_cast %132 : vector<1x16x128xf32> to vector<16x128xf32>
    %134 = vector.extract_strided_slice %63 {offsets = [1, 0, 0], sizes = [1, 16, 128], strides = [1, 1, 1]} : vector<2x16x128xf32> to vector<1x16x128xf32>
    %135 = vector.shape_cast %134 : vector<1x16x128xf32> to vector<16x128xf32>
    %136 = vector.extract_strided_slice %65 {offsets = [1, 0, 0], sizes = [1, 16, 128], strides = [1, 1, 1]} : vector<2x16x128xf32> to vector<1x16x128xf32>
    %137 = vector.shape_cast %136 : vector<1x16x128xf32> to vector<16x128xf32>
    %138 = vector.extract_strided_slice %20 {offsets = [1, 0, 0], sizes = [1, 16, 16], strides = [1, 1, 1]} : vector<2x16x16xf32> to vector<1x16x16xf32>
    %139 = vector.shape_cast %138 : vector<1x16x16xf32> to vector<16x16xf32>
    %140 = arith.truncf %133 : vector<16x128xf32> to vector<16x128xbf16>
    %141 = vector.extract_strided_slice %140 {offsets = [0, 0], sizes = [16, 32], strides = [1, 1]} : vector<16x128xbf16> to vector<16x32xbf16>
    %142 = vector.extract_strided_slice %140 {offsets = [0, 32], sizes = [16, 32], strides = [1, 1]} : vector<16x128xbf16> to vector<16x32xbf16>
    %143 = vector.extract_strided_slice %140 {offsets = [0, 64], sizes = [16, 32], strides = [1, 1]} : vector<16x128xbf16> to vector<16x32xbf16>
    %144 = vector.extract_strided_slice %140 {offsets = [0, 96], sizes = [16, 32], strides = [1, 1]} : vector<16x128xbf16> to vector<16x32xbf16>
    %145 = vector.shape_cast %141 : vector<16x32xbf16> to vector<1x16x32xbf16>
    %146 = vector.shape_cast %142 : vector<16x32xbf16> to vector<1x16x32xbf16>
    %147 = vector.shape_cast %143 : vector<16x32xbf16> to vector<1x16x32xbf16>
    %148 = vector.shape_cast %144 : vector<16x32xbf16> to vector<1x16x32xbf16>
    %149 = tpu.concatenate %145, %146, %147, %148 in 0 : vector<1x16x32xbf16>, vector<1x16x32xbf16>, vector<1x16x32xbf16>, vector<1x16x32xbf16> -> vector<4x16x32xbf16>
    %150 = arith.truncf %135 : vector<16x128xf32> to vector<16x128xbf16>
    %151 = vector.extract_strided_slice %150 {offsets = [0, 0], sizes = [16, 32], strides = [1, 1]} : vector<16x128xbf16> to vector<16x32xbf16>
    %152 = vector.extract_strided_slice %150 {offsets = [0, 32], sizes = [16, 32], strides = [1, 1]} : vector<16x128xbf16> to vector<16x32xbf16>
    %153 = vector.extract_strided_slice %150 {offsets = [0, 64], sizes = [16, 32], strides = [1, 1]} : vector<16x128xbf16> to vector<16x32xbf16>
    %154 = vector.extract_strided_slice %150 {offsets = [0, 96], sizes = [16, 32], strides = [1, 1]} : vector<16x128xbf16> to vector<16x32xbf16>
    %155 = vector.shape_cast %151 : vector<16x32xbf16> to vector<1x16x32xbf16>
    %156 = vector.shape_cast %152 : vector<16x32xbf16> to vector<1x16x32xbf16>
    %157 = vector.shape_cast %153 : vector<16x32xbf16> to vector<1x16x32xbf16>
    %158 = vector.shape_cast %154 : vector<16x32xbf16> to vector<1x16x32xbf16>
    %159 = tpu.concatenate %155, %156, %157, %158 in 0 : vector<1x16x32xbf16>, vector<1x16x32xbf16>, vector<1x16x32xbf16>, vector<1x16x32xbf16> -> vector<4x16x32xbf16>
    %160 = arith.truncf %137 : vector<16x128xf32> to vector<16x128xbf16>
    %161 = vector.extract_strided_slice %160 {offsets = [0, 0], sizes = [16, 32], strides = [1, 1]} : vector<16x128xbf16> to vector<16x32xbf16>
    %162 = vector.extract_strided_slice %160 {offsets = [0, 32], sizes = [16, 32], strides = [1, 1]} : vector<16x128xbf16> to vector<16x32xbf16>
    %163 = vector.extract_strided_slice %160 {offsets = [0, 64], sizes = [16, 32], strides = [1, 1]} : vector<16x128xbf16> to vector<16x32xbf16>
    %164 = vector.extract_strided_slice %160 {offsets = [0, 96], sizes = [16, 32], strides = [1, 1]} : vector<16x128xbf16> to vector<16x32xbf16>
    %165 = vector.shape_cast %161 : vector<16x32xbf16> to vector<1x16x32xbf16>
    %166 = vector.shape_cast %162 : vector<16x32xbf16> to vector<1x16x32xbf16>
    %167 = vector.shape_cast %163 : vector<16x32xbf16> to vector<1x16x32xbf16>
    %168 = vector.shape_cast %164 : vector<16x32xbf16> to vector<1x16x32xbf16>
    %169 = tpu.concatenate %165, %166, %167, %168 in 0 : vector<1x16x32xbf16>, vector<1x16x32xbf16>, vector<1x16x32xbf16>, vector<1x16x32xbf16> -> vector<4x16x32xbf16>
    "tpu.trace_start"() <{level = 10 : i32, message = "hqd,hkd->hqk"}> : () -> ()
    %cst_37 = arith.constant dense<0.000000e+00> : vector<4x16x16xf32>
    %170 = tpu.matmul %149, %159, %cst_37 {dimension_numbers = #tpu.dot_dimension_numbers<[2], [2], [1], [1], [0, 0, 0, 1, 1, 1], [0], [0]>} : vector<4x16x32xbf16>, vector<4x16x32xbf16>, vector<4x16x16xf32> -> vector<4x16x16xf32>
    "tpu.trace_stop"() : () -> ()
    %cst_38 = arith.constant 0.176776692 : f32
    %171 = vector.broadcast %cst_38 : f32 to vector<4x16x16xf32>
    %172 = arith.mulf %170, %171 : vector<4x16x16xf32>
    %173 = vector.shape_cast %139 : vector<16x16xf32> to vector<1x16x16xf32>
    %174 = vector.broadcast %173 : vector<1x16x16xf32> to vector<4x16x16xf32>
    %175 = arith.addf %172, %174 : vector<4x16x16xf32>
    %cst_39 = arith.constant dense<0xFF800000> : vector<4x16xf32>
    %176 = vector.multi_reduction <maximumf>, %175, %cst_39 [2] : vector<4x16x16xf32> to vector<4x16xf32>
    %177 = vector.shape_cast %176 : vector<4x16xf32> to vector<4x16x1xf32>
    %178 = vector.broadcast %177 : vector<4x16x1xf32> to vector<4x16x16xf32>
    %179 = arith.subf %175, %178 : vector<4x16x16xf32>
    %180 = math.exp %179 : vector<4x16x16xf32>
    %cst_40 = arith.constant dense<0.000000e+00> : vector<4x16xf32>
    %181 = vector.multi_reduction <add>, %180, %cst_40 [2] : vector<4x16x16xf32> to vector<4x16xf32>
    %182 = vector.shape_cast %181 : vector<4x16xf32> to vector<4x16x1xf32>
    %183 = tpu.reciprocal %182 {approx = true} : vector<4x16x1xf32> -> vector<4x16x1xf32>
    %184 = vector.broadcast %183 : vector<4x16x1xf32> to vector<4x16x16xf32>
    %185 = arith.mulf %180, %184 : vector<4x16x16xf32>
    %186 = arith.truncf %185 : vector<4x16x16xf32> to vector<4x16x16xbf16>
    "tpu.trace_start"() <{level = 10 : i32, message = "hqk,hkd->hqd"}> : () -> ()
    %cst_41 = arith.constant dense<0.000000e+00> : vector<4x16x32xf32>
    %187 = tpu.matmul %186, %169, %cst_41 {dimension_numbers = #tpu.dot_dimension_numbers<[2], [1], [1], [2], [0, 0, 0, 1, 1, 2], [0], [0]>} : vector<4x16x16xbf16>, vector<4x16x32xbf16>, vector<4x16x32xf32> -> vector<4x16x32xf32>
    "tpu.trace_stop"() : () -> ()
    %188 = arith.truncf %187 : vector<4x16x32xf32> to vector<4x16x32xbf16>
    %189 = vector.extract_strided_slice %188 {offsets = [0, 0, 0], sizes = [1, 16, 32], strides = [1, 1, 1]} : vector<4x16x32xbf16> to vector<1x16x32xbf16>
    %190 = vector.shape_cast %189 : vector<1x16x32xbf16> to vector<16x32xbf16>
    %191 = vector.extract_strided_slice %188 {offsets = [1, 0, 0], sizes = [1, 16, 32], strides = [1, 1, 1]} : vector<4x16x32xbf16> to vector<1x16x32xbf16>
    %192 = vector.shape_cast %191 : vector<1x16x32xbf16> to vector<16x32xbf16>
    %193 = vector.extract_strided_slice %188 {offsets = [2, 0, 0], sizes = [1, 16, 32], strides = [1, 1, 1]} : vector<4x16x32xbf16> to vector<1x16x32xbf16>
    %194 = vector.shape_cast %193 : vector<1x16x32xbf16> to vector<16x32xbf16>
    %195 = vector.extract_strided_slice %188 {offsets = [3, 0, 0], sizes = [1, 16, 32], strides = [1, 1, 1]} : vector<4x16x32xbf16> to vector<1x16x32xbf16>
    %196 = vector.shape_cast %195 : vector<1x16x32xbf16> to vector<16x32xbf16>
    %197 = tpu.concatenate %190, %192, %194, %196 in 1 : vector<16x32xbf16>, vector<16x32xbf16>, vector<16x32xbf16>, vector<16x32xbf16> -> vector<16x128xbf16>
    %198 = vector.shape_cast %131 : vector<16x128xbf16> to vector<1x16x128xbf16>
    %199 = vector.shape_cast %197 : vector<16x128xbf16> to vector<1x16x128xbf16>
    %200 = tpu.concatenate %198, %199 in 0 : vector<1x16x128xbf16>, vector<1x16x128xbf16> -> vector<2x16x128xbf16>
    %201 = vector.shape_cast %200 : vector<2x16x128xbf16> to vector<32x128xbf16>
    %c0_42 = arith.constant 0 : index
    %c0_43 = arith.constant 0 : index
    %c0_44 = arith.constant 0 : index
    %202 = vector.load %arg9[%c0_42, %c0_43, %c0_44] : memref<1x128x128xbf16, #tpu.memory_space<vmem>>, vector<1x128x128xbf16>
    %203 = vector.shape_cast %202 : vector<1x128x128xbf16> to vector<128x128xbf16>
    %cst_45 = arith.constant dense<0.000000e+00> : vector<32x128xf32>
    %204 = tpu.matmul %201, %203, %cst_45 {dimension_numbers = #tpu.dot_dimension_numbers<[1], [0], [0], [1], [0, 0, 1, 1], [], []>} : vector<32x128xbf16>, vector<128x128xbf16>, vector<32x128xf32> -> vector<32x128xf32>
    %c0_46 = arith.constant 0 : index
    %c0_47 = arith.constant 0 : index
    %c0_48 = arith.constant 0 : index
    %205 = vector.load %arg10[%c0_46, %c0_47, %c0_48] : memref<1x1x128xf32, #tpu.memory_space<vmem>>, vector<1x1x128xf32>
    %206 = vector.shape_cast %205 : vector<1x1x128xf32> to vector<1x128xf32>
    %207 = vector.broadcast %206 : vector<1x128xf32> to vector<32x128xf32>
    %208 = arith.addf %204, %207 : vector<32x128xf32>
    %209 = arith.addf %208, %4 : vector<32x128xf32>
    %210 = vector.extract_strided_slice %6 {offsets = [1, 0, 0], sizes = [1, 1, 128], strides = [1, 1, 1]} : vector<4x2x128xf32> to vector<1x1x128xf32>
    %211 = vector.shape_cast %210 : vector<1x1x128xf32> to vector<1x128xf32>
    %212 = vector.extract_strided_slice %6 {offsets = [1, 1, 0], sizes = [1, 1, 128], strides = [1, 1, 1]} : vector<4x2x128xf32> to vector<1x1x128xf32>
    %213 = vector.shape_cast %212 : vector<1x1x128xf32> to vector<1x128xf32>
    %cst_49 = arith.constant dense<0.000000e+00> : vector<32xf32>
    %214 = vector.multi_reduction <add>, %209, %cst_49 [1] : vector<32x128xf32> to vector<32xf32>
    %215 = vector.shape_cast %214 : vector<32xf32> to vector<32x1xf32>
    %cst_50 = arith.constant 1.280000e+02 : f32
    %216 = vector.broadcast %cst_50 : f32 to vector<32x1xf32>
    %217 = arith.divf %215, %216 : vector<32x1xf32>
    %218 = vector.broadcast %217 : vector<32x1xf32> to vector<32x128xf32>
    %219 = arith.subf %209, %218 : vector<32x128xf32>
    %220 = arith.mulf %219, %219 : vector<32x128xf32>
    %cst_51 = arith.constant dense<0.000000e+00> : vector<32xf32>
    %221 = vector.multi_reduction <add>, %220, %cst_51 [1] : vector<32x128xf32> to vector<32xf32>
    %222 = vector.shape_cast %221 : vector<32xf32> to vector<32x1xf32>
    %cst_52 = arith.constant 1.280000e+02 : f32
    %223 = vector.broadcast %cst_52 : f32 to vector<32x1xf32>
    %224 = arith.divf %222, %223 : vector<32x1xf32>
    %cst_53 = arith.constant 9.99999997E-7 : f32
    %225 = vector.broadcast %cst_53 : f32 to vector<32x1xf32>
    %226 = arith.addf %224, %225 : vector<32x1xf32>
    %227 = math.rsqrt %226 : vector<32x1xf32>
    %228 = vector.broadcast %227 : vector<32x1xf32> to vector<32x128xf32>
    %229 = arith.mulf %219, %228 : vector<32x128xf32>
    %230 = vector.broadcast %211 : vector<1x128xf32> to vector<32x128xf32>
    %231 = arith.mulf %229, %230 : vector<32x128xf32>
    %232 = vector.broadcast %213 : vector<1x128xf32> to vector<32x128xf32>
    %233 = arith.addf %231, %232 : vector<32x128xf32>
    %234 = arith.truncf %233 : vector<32x128xf32> to vector<32x128xbf16>
    %c0_54 = arith.constant 0 : index
    %c0_55 = arith.constant 0 : index
    %c0_56 = arith.constant 0 : index
    %235 = vector.load %arg11[%c0_54, %c0_55, %c0_56] : memref<1x128x128xbf16, #tpu.memory_space<vmem>>, vector<1x128x128xbf16>
    %236 = vector.shape_cast %235 : vector<1x128x128xbf16> to vector<128x128xbf16>
    %cst_57 = arith.constant dense<0.000000e+00> : vector<32x128xf32>
    %237 = tpu.matmul %234, %236, %cst_57 {dimension_numbers = #tpu.dot_dimension_numbers<[1], [0], [0], [1], [0, 0, 1, 1], [], []>} : vector<32x128xbf16>, vector<128x128xbf16>, vector<32x128xf32> -> vector<32x128xf32>
    %c0_58 = arith.constant 0 : index
    %c0_59 = arith.constant 0 : index
    %c0_60 = arith.constant 0 : index
    %238 = vector.load %arg12[%c0_58, %c0_59, %c0_60] : memref<1x1x128xf32, #tpu.memory_space<vmem>>, vector<1x1x128xf32>
    %239 = vector.shape_cast %238 : vector<1x1x128xf32> to vector<1x128xf32>
    %240 = vector.broadcast %239 : vector<1x128xf32> to vector<32x128xf32>
    %241 = arith.addf %237, %240 : vector<32x128xf32>
    %242 = vector.shape_cast %241 : vector<32x128xf32> to vector<2x16x128xf32>
    %c0_61 = arith.constant 0 : index
    %c0_62 = arith.constant 0 : index
    %c0_63 = arith.constant 0 : index
    %243 = vector.load %arg3[%c0_61, %c0_62, %c0_63] : memref<2x16x128xbf16, #tpu.memory_space<vmem>>, vector<2x16x128xbf16>
    %244 = vector.shape_cast %243 : vector<2x16x128xbf16> to vector<32x128xbf16>
    %c0_64 = arith.constant 0 : index
    %c0_65 = arith.constant 0 : index
    %c0_66 = arith.constant 0 : index
    %245 = vector.load %arg13[%c0_64, %c0_65, %c0_66] : memref<1x128x256xbf16, #tpu.memory_space<vmem>>, vector<1x128x256xbf16>
    %246 = vector.shape_cast %245 : vector<1x128x256xbf16> to vector<128x256xbf16>
    %cst_67 = arith.constant dense<0.000000e+00> : vector<32x256xf32>
    %247 = tpu.matmul %244, %246, %cst_67 {dimension_numbers = #tpu.dot_dimension_numbers<[1], [0], [0], [1], [0, 0, 1, 1], [], []>} : vector<32x128xbf16>, vector<128x256xbf16>, vector<32x256xf32> -> vector<32x256xf32>
    %c0_68 = arith.constant 0 : index
    %c0_69 = arith.constant 0 : index
    %c0_70 = arith.constant 0 : index
    %248 = vector.load %arg14[%c0_68, %c0_69, %c0_70] : memref<1x1x256xf32, #tpu.memory_space<vmem>>, vector<1x1x256xf32>
    %249 = vector.shape_cast %248 : vector<1x1x256xf32> to vector<1x256xf32>
    %250 = vector.broadcast %249 : vector<1x256xf32> to vector<32x256xf32>
    %251 = arith.addf %247, %250 : vector<32x256xf32>
    %252 = vector.extract_strided_slice %251 {offsets = [0, 0], sizes = [32, 128], strides = [1, 1]} : vector<32x256xf32> to vector<32x128xf32>
    %253 = vector.shape_cast %252 : vector<32x128xf32> to vector<2x16x128xf32>
    %254 = vector.extract_strided_slice %251 {offsets = [0, 128], sizes = [32, 128], strides = [1, 1]} : vector<32x256xf32> to vector<32x128xf32>
    %255 = vector.shape_cast %254 : vector<32x128xf32> to vector<2x16x128xf32>
    %256 = vector.extract_strided_slice %242 {offsets = [0, 0, 0], sizes = [1, 16, 128], strides = [1, 1, 1]} : vector<2x16x128xf32> to vector<1x16x128xf32>
    %257 = vector.shape_cast %256 : vector<1x16x128xf32> to vector<16x128xf32>
    %258 = vector.extract_strided_slice %253 {offsets = [0, 0, 0], sizes = [1, 16, 128], strides = [1, 1, 1]} : vector<2x16x128xf32> to vector<1x16x128xf32>
    %259 = vector.shape_cast %258 : vector<1x16x128xf32> to vector<16x128xf32>
    %260 = vector.extract_strided_slice %255 {offsets = [0, 0, 0], sizes = [1, 16, 128], strides = [1, 1, 1]} : vector<2x16x128xf32> to vector<1x16x128xf32>
    %261 = vector.shape_cast %260 : vector<1x16x128xf32> to vector<16x128xf32>
    %262 = vector.extract_strided_slice %22 {offsets = [0, 0, 0], sizes = [1, 1, 16], strides = [1, 1, 1]} : vector<2x1x16xf32> to vector<1x1x16xf32>
    %263 = vector.shape_cast %262 : vector<1x1x16xf32> to vector<1x16xf32>
    %264 = arith.truncf %257 : vector<16x128xf32> to vector<16x128xbf16>
    %265 = vector.extract_strided_slice %264 {offsets = [0, 0], sizes = [16, 32], strides = [1, 1]} : vector<16x128xbf16> to vector<16x32xbf16>
    %266 = vector.extract_strided_slice %264 {offsets = [0, 32], sizes = [16, 32], strides = [1, 1]} : vector<16x128xbf16> to vector<16x32xbf16>
    %267 = vector.extract_strided_slice %264 {offsets = [0, 64], sizes = [16, 32], strides = [1, 1]} : vector<16x128xbf16> to vector<16x32xbf16>
    %268 = vector.extract_strided_slice %264 {offsets = [0, 96], sizes = [16, 32], strides = [1, 1]} : vector<16x128xbf16> to vector<16x32xbf16>
    %269 = vector.shape_cast %265 : vector<16x32xbf16> to vector<1x16x32xbf16>
    %270 = vector.shape_cast %266 : vector<16x32xbf16> to vector<1x16x32xbf16>
    %271 = vector.shape_cast %267 : vector<16x32xbf16> to vector<1x16x32xbf16>
    %272 = vector.shape_cast %268 : vector<16x32xbf16> to vector<1x16x32xbf16>
    %273 = tpu.concatenate %269, %270, %271, %272 in 0 : vector<1x16x32xbf16>, vector<1x16x32xbf16>, vector<1x16x32xbf16>, vector<1x16x32xbf16> -> vector<4x16x32xbf16>
    %274 = arith.truncf %259 : vector<16x128xf32> to vector<16x128xbf16>
    %275 = vector.extract_strided_slice %274 {offsets = [0, 0], sizes = [16, 32], strides = [1, 1]} : vector<16x128xbf16> to vector<16x32xbf16>
    %276 = vector.extract_strided_slice %274 {offsets = [0, 32], sizes = [16, 32], strides = [1, 1]} : vector<16x128xbf16> to vector<16x32xbf16>
    %277 = vector.extract_strided_slice %274 {offsets = [0, 64], sizes = [16, 32], strides = [1, 1]} : vector<16x128xbf16> to vector<16x32xbf16>
    %278 = vector.extract_strided_slice %274 {offsets = [0, 96], sizes = [16, 32], strides = [1, 1]} : vector<16x128xbf16> to vector<16x32xbf16>
    %279 = vector.shape_cast %275 : vector<16x32xbf16> to vector<1x16x32xbf16>
    %280 = vector.shape_cast %276 : vector<16x32xbf16> to vector<1x16x32xbf16>
    %281 = vector.shape_cast %277 : vector<16x32xbf16> to vector<1x16x32xbf16>
    %282 = vector.shape_cast %278 : vector<16x32xbf16> to vector<1x16x32xbf16>
    %283 = tpu.concatenate %279, %280, %281, %282 in 0 : vector<1x16x32xbf16>, vector<1x16x32xbf16>, vector<1x16x32xbf16>, vector<1x16x32xbf16> -> vector<4x16x32xbf16>
    %284 = arith.truncf %261 : vector<16x128xf32> to vector<16x128xbf16>
    %285 = vector.extract_strided_slice %284 {offsets = [0, 0], sizes = [16, 32], strides = [1, 1]} : vector<16x128xbf16> to vector<16x32xbf16>
    %286 = vector.extract_strided_slice %284 {offsets = [0, 32], sizes = [16, 32], strides = [1, 1]} : vector<16x128xbf16> to vector<16x32xbf16>
    %287 = vector.extract_strided_slice %284 {offsets = [0, 64], sizes = [16, 32], strides = [1, 1]} : vector<16x128xbf16> to vector<16x32xbf16>
    %288 = vector.extract_strided_slice %284 {offsets = [0, 96], sizes = [16, 32], strides = [1, 1]} : vector<16x128xbf16> to vector<16x32xbf16>
    %289 = vector.shape_cast %285 : vector<16x32xbf16> to vector<1x16x32xbf16>
    %290 = vector.shape_cast %286 : vector<16x32xbf16> to vector<1x16x32xbf16>
    %291 = vector.shape_cast %287 : vector<16x32xbf16> to vector<1x16x32xbf16>
    %292 = vector.shape_cast %288 : vector<16x32xbf16> to vector<1x16x32xbf16>
    %293 = tpu.concatenate %289, %290, %291, %292 in 0 : vector<1x16x32xbf16>, vector<1x16x32xbf16>, vector<1x16x32xbf16>, vector<1x16x32xbf16> -> vector<4x16x32xbf16>
    "tpu.trace_start"() <{level = 10 : i32, message = "hqd,hkd->hqk"}> : () -> ()
    %cst_71 = arith.constant dense<0.000000e+00> : vector<4x16x16xf32>
    %294 = tpu.matmul %273, %283, %cst_71 {dimension_numbers = #tpu.dot_dimension_numbers<[2], [2], [1], [1], [0, 0, 0, 1, 1, 1], [0], [0]>} : vector<4x16x32xbf16>, vector<4x16x32xbf16>, vector<4x16x16xf32> -> vector<4x16x16xf32>
    "tpu.trace_stop"() : () -> ()
    %cst_72 = arith.constant 0.176776692 : f32
    %295 = vector.broadcast %cst_72 : f32 to vector<4x16x16xf32>
    %296 = arith.mulf %294, %295 : vector<4x16x16xf32>
    %297 = vector.shape_cast %263 : vector<1x16xf32> to vector<1x1x16xf32>
    %298 = vector.broadcast %297 : vector<1x1x16xf32> to vector<4x16x16xf32>
    %299 = arith.addf %296, %298 : vector<4x16x16xf32>
    %cst_73 = arith.constant dense<0xFF800000> : vector<4x16xf32>
    %300 = vector.multi_reduction <maximumf>, %299, %cst_73 [2] : vector<4x16x16xf32> to vector<4x16xf32>
    %301 = vector.shape_cast %300 : vector<4x16xf32> to vector<4x16x1xf32>
    %302 = vector.broadcast %301 : vector<4x16x1xf32> to vector<4x16x16xf32>
    %303 = arith.subf %299, %302 : vector<4x16x16xf32>
    %304 = math.exp %303 : vector<4x16x16xf32>
    %cst_74 = arith.constant dense<0.000000e+00> : vector<4x16xf32>
    %305 = vector.multi_reduction <add>, %304, %cst_74 [2] : vector<4x16x16xf32> to vector<4x16xf32>
    %306 = vector.shape_cast %305 : vector<4x16xf32> to vector<4x16x1xf32>
    %307 = tpu.reciprocal %306 {approx = true} : vector<4x16x1xf32> -> vector<4x16x1xf32>
    %308 = vector.broadcast %307 : vector<4x16x1xf32> to vector<4x16x16xf32>
    %309 = arith.mulf %304, %308 : vector<4x16x16xf32>
    %310 = arith.truncf %309 : vector<4x16x16xf32> to vector<4x16x16xbf16>
    "tpu.trace_start"() <{level = 10 : i32, message = "hqk,hkd->hqd"}> : () -> ()
    %cst_75 = arith.constant dense<0.000000e+00> : vector<4x16x32xf32>
    %311 = tpu.matmul %310, %293, %cst_75 {dimension_numbers = #tpu.dot_dimension_numbers<[2], [1], [1], [2], [0, 0, 0, 1, 1, 2], [0], [0]>} : vector<4x16x16xbf16>, vector<4x16x32xbf16>, vector<4x16x32xf32> -> vector<4x16x32xf32>
    "tpu.trace_stop"() : () -> ()
    %312 = arith.truncf %311 : vector<4x16x32xf32> to vector<4x16x32xbf16>
    %313 = vector.extract_strided_slice %312 {offsets = [0, 0, 0], sizes = [1, 16, 32], strides = [1, 1, 1]} : vector<4x16x32xbf16> to vector<1x16x32xbf16>
    %314 = vector.shape_cast %313 : vector<1x16x32xbf16> to vector<16x32xbf16>
    %315 = vector.extract_strided_slice %312 {offsets = [1, 0, 0], sizes = [1, 16, 32], strides = [1, 1, 1]} : vector<4x16x32xbf16> to vector<1x16x32xbf16>
    %316 = vector.shape_cast %315 : vector<1x16x32xbf16> to vector<16x32xbf16>
    %317 = vector.extract_strided_slice %312 {offsets = [2, 0, 0], sizes = [1, 16, 32], strides = [1, 1, 1]} : vector<4x16x32xbf16> to vector<1x16x32xbf16>
    %318 = vector.shape_cast %317 : vector<1x16x32xbf16> to vector<16x32xbf16>
    %319 = vector.extract_strided_slice %312 {offsets = [3, 0, 0], sizes = [1, 16, 32], strides = [1, 1, 1]} : vector<4x16x32xbf16> to vector<1x16x32xbf16>
    %320 = vector.shape_cast %319 : vector<1x16x32xbf16> to vector<16x32xbf16>
    %321 = tpu.concatenate %314, %316, %318, %320 in 1 : vector<16x32xbf16>, vector<16x32xbf16>, vector<16x32xbf16>, vector<16x32xbf16> -> vector<16x128xbf16>
    %322 = vector.extract_strided_slice %309 {offsets = [0, 0, 0], sizes = [1, 16, 16], strides = [1, 1, 1]} : vector<4x16x16xf32> to vector<1x16x16xf32>
    %323 = vector.shape_cast %322 : vector<1x16x16xf32> to vector<16x16xf32>
    %324 = vector.extract_strided_slice %242 {offsets = [1, 0, 0], sizes = [1, 16, 128], strides = [1, 1, 1]} : vector<2x16x128xf32> to vector<1x16x128xf32>
    %325 = vector.shape_cast %324 : vector<1x16x128xf32> to vector<16x128xf32>
    %326 = vector.extract_strided_slice %253 {offsets = [1, 0, 0], sizes = [1, 16, 128], strides = [1, 1, 1]} : vector<2x16x128xf32> to vector<1x16x128xf32>
    %327 = vector.shape_cast %326 : vector<1x16x128xf32> to vector<16x128xf32>
    %328 = vector.extract_strided_slice %255 {offsets = [1, 0, 0], sizes = [1, 16, 128], strides = [1, 1, 1]} : vector<2x16x128xf32> to vector<1x16x128xf32>
    %329 = vector.shape_cast %328 : vector<1x16x128xf32> to vector<16x128xf32>
    %330 = vector.extract_strided_slice %22 {offsets = [1, 0, 0], sizes = [1, 1, 16], strides = [1, 1, 1]} : vector<2x1x16xf32> to vector<1x1x16xf32>
    %331 = vector.shape_cast %330 : vector<1x1x16xf32> to vector<1x16xf32>
    %332 = arith.truncf %325 : vector<16x128xf32> to vector<16x128xbf16>
    %333 = vector.extract_strided_slice %332 {offsets = [0, 0], sizes = [16, 32], strides = [1, 1]} : vector<16x128xbf16> to vector<16x32xbf16>
    %334 = vector.extract_strided_slice %332 {offsets = [0, 32], sizes = [16, 32], strides = [1, 1]} : vector<16x128xbf16> to vector<16x32xbf16>
    %335 = vector.extract_strided_slice %332 {offsets = [0, 64], sizes = [16, 32], strides = [1, 1]} : vector<16x128xbf16> to vector<16x32xbf16>
    %336 = vector.extract_strided_slice %332 {offsets = [0, 96], sizes = [16, 32], strides = [1, 1]} : vector<16x128xbf16> to vector<16x32xbf16>
    %337 = vector.shape_cast %333 : vector<16x32xbf16> to vector<1x16x32xbf16>
    %338 = vector.shape_cast %334 : vector<16x32xbf16> to vector<1x16x32xbf16>
    %339 = vector.shape_cast %335 : vector<16x32xbf16> to vector<1x16x32xbf16>
    %340 = vector.shape_cast %336 : vector<16x32xbf16> to vector<1x16x32xbf16>
    %341 = tpu.concatenate %337, %338, %339, %340 in 0 : vector<1x16x32xbf16>, vector<1x16x32xbf16>, vector<1x16x32xbf16>, vector<1x16x32xbf16> -> vector<4x16x32xbf16>
    %342 = arith.truncf %327 : vector<16x128xf32> to vector<16x128xbf16>
    %343 = vector.extract_strided_slice %342 {offsets = [0, 0], sizes = [16, 32], strides = [1, 1]} : vector<16x128xbf16> to vector<16x32xbf16>
    %344 = vector.extract_strided_slice %342 {offsets = [0, 32], sizes = [16, 32], strides = [1, 1]} : vector<16x128xbf16> to vector<16x32xbf16>
    %345 = vector.extract_strided_slice %342 {offsets = [0, 64], sizes = [16, 32], strides = [1, 1]} : vector<16x128xbf16> to vector<16x32xbf16>
    %346 = vector.extract_strided_slice %342 {offsets = [0, 96], sizes = [16, 32], strides = [1, 1]} : vector<16x128xbf16> to vector<16x32xbf16>
    %347 = vector.shape_cast %343 : vector<16x32xbf16> to vector<1x16x32xbf16>
    %348 = vector.shape_cast %344 : vector<16x32xbf16> to vector<1x16x32xbf16>
    %349 = vector.shape_cast %345 : vector<16x32xbf16> to vector<1x16x32xbf16>
    %350 = vector.shape_cast %346 : vector<16x32xbf16> to vector<1x16x32xbf16>
    %351 = tpu.concatenate %347, %348, %349, %350 in 0 : vector<1x16x32xbf16>, vector<1x16x32xbf16>, vector<1x16x32xbf16>, vector<1x16x32xbf16> -> vector<4x16x32xbf16>
    %352 = arith.truncf %329 : vector<16x128xf32> to vector<16x128xbf16>
    %353 = vector.extract_strided_slice %352 {offsets = [0, 0], sizes = [16, 32], strides = [1, 1]} : vector<16x128xbf16> to vector<16x32xbf16>
    %354 = vector.extract_strided_slice %352 {offsets = [0, 32], sizes = [16, 32], strides = [1, 1]} : vector<16x128xbf16> to vector<16x32xbf16>
    %355 = vector.extract_strided_slice %352 {offsets = [0, 64], sizes = [16, 32], strides = [1, 1]} : vector<16x128xbf16> to vector<16x32xbf16>
    %356 = vector.extract_strided_slice %352 {offsets = [0, 96], sizes = [16, 32], strides = [1, 1]} : vector<16x128xbf16> to vector<16x32xbf16>
    %357 = vector.shape_cast %353 : vector<16x32xbf16> to vector<1x16x32xbf16>
    %358 = vector.shape_cast %354 : vector<16x32xbf16> to vector<1x16x32xbf16>
    %359 = vector.shape_cast %355 : vector<16x32xbf16> to vector<1x16x32xbf16>
    %360 = vector.shape_cast %356 : vector<16x32xbf16> to vector<1x16x32xbf16>
    %361 = tpu.concatenate %357, %358, %359, %360 in 0 : vector<1x16x32xbf16>, vector<1x16x32xbf16>, vector<1x16x32xbf16>, vector<1x16x32xbf16> -> vector<4x16x32xbf16>
    "tpu.trace_start"() <{level = 10 : i32, message = "hqd,hkd->hqk"}> : () -> ()
    %cst_76 = arith.constant dense<0.000000e+00> : vector<4x16x16xf32>
    %362 = tpu.matmul %341, %351, %cst_76 {dimension_numbers = #tpu.dot_dimension_numbers<[2], [2], [1], [1], [0, 0, 0, 1, 1, 1], [0], [0]>} : vector<4x16x32xbf16>, vector<4x16x32xbf16>, vector<4x16x16xf32> -> vector<4x16x16xf32>
    "tpu.trace_stop"() : () -> ()
    %cst_77 = arith.constant 0.176776692 : f32
    %363 = vector.broadcast %cst_77 : f32 to vector<4x16x16xf32>
    %364 = arith.mulf %362, %363 : vector<4x16x16xf32>
    %365 = vector.shape_cast %331 : vector<1x16xf32> to vector<1x1x16xf32>
    %366 = vector.broadcast %365 : vector<1x1x16xf32> to vector<4x16x16xf32>
    %367 = arith.addf %364, %366 : vector<4x16x16xf32>
    %cst_78 = arith.constant dense<0xFF800000> : vector<4x16xf32>
    %368 = vector.multi_reduction <maximumf>, %367, %cst_78 [2] : vector<4x16x16xf32> to vector<4x16xf32>
    %369 = vector.shape_cast %368 : vector<4x16xf32> to vector<4x16x1xf32>
    %370 = vector.broadcast %369 : vector<4x16x1xf32> to vector<4x16x16xf32>
    %371 = arith.subf %367, %370 : vector<4x16x16xf32>
    %372 = math.exp %371 : vector<4x16x16xf32>
    %cst_79 = arith.constant dense<0.000000e+00> : vector<4x16xf32>
    %373 = vector.multi_reduction <add>, %372, %cst_79 [2] : vector<4x16x16xf32> to vector<4x16xf32>
    %374 = vector.shape_cast %373 : vector<4x16xf32> to vector<4x16x1xf32>
    %375 = tpu.reciprocal %374 {approx = true} : vector<4x16x1xf32> -> vector<4x16x1xf32>
    %376 = vector.broadcast %375 : vector<4x16x1xf32> to vector<4x16x16xf32>
    %377 = arith.mulf %372, %376 : vector<4x16x16xf32>
    %378 = arith.truncf %377 : vector<4x16x16xf32> to vector<4x16x16xbf16>
    "tpu.trace_start"() <{level = 10 : i32, message = "hqk,hkd->hqd"}> : () -> ()
    %cst_80 = arith.constant dense<0.000000e+00> : vector<4x16x32xf32>
    %379 = tpu.matmul %378, %361, %cst_80 {dimension_numbers = #tpu.dot_dimension_numbers<[2], [1], [1], [2], [0, 0, 0, 1, 1, 2], [0], [0]>} : vector<4x16x16xbf16>, vector<4x16x32xbf16>, vector<4x16x32xf32> -> vector<4x16x32xf32>
    "tpu.trace_stop"() : () -> ()
    %380 = arith.truncf %379 : vector<4x16x32xf32> to vector<4x16x32xbf16>
    %381 = vector.extract_strided_slice %380 {offsets = [0, 0, 0], sizes = [1, 16, 32], strides = [1, 1, 1]} : vector<4x16x32xbf16> to vector<1x16x32xbf16>
    %382 = vector.shape_cast %381 : vector<1x16x32xbf16> to vector<16x32xbf16>
    %383 = vector.extract_strided_slice %380 {offsets = [1, 0, 0], sizes = [1, 16, 32], strides = [1, 1, 1]} : vector<4x16x32xbf16> to vector<1x16x32xbf16>
    %384 = vector.shape_cast %383 : vector<1x16x32xbf16> to vector<16x32xbf16>
    %385 = vector.extract_strided_slice %380 {offsets = [2, 0, 0], sizes = [1, 16, 32], strides = [1, 1, 1]} : vector<4x16x32xbf16> to vector<1x16x32xbf16>
    %386 = vector.shape_cast %385 : vector<1x16x32xbf16> to vector<16x32xbf16>
    %387 = vector.extract_strided_slice %380 {offsets = [3, 0, 0], sizes = [1, 16, 32], strides = [1, 1, 1]} : vector<4x16x32xbf16> to vector<1x16x32xbf16>
    %388 = vector.shape_cast %387 : vector<1x16x32xbf16> to vector<16x32xbf16>
    %389 = tpu.concatenate %382, %384, %386, %388 in 1 : vector<16x32xbf16>, vector<16x32xbf16>, vector<16x32xbf16>, vector<16x32xbf16> -> vector<16x128xbf16>
    %390 = vector.extract_strided_slice %377 {offsets = [0, 0, 0], sizes = [1, 16, 16], strides = [1, 1, 1]} : vector<4x16x16xf32> to vector<1x16x16xf32>
    %391 = vector.shape_cast %390 : vector<1x16x16xf32> to vector<16x16xf32>
    %392 = vector.shape_cast %321 : vector<16x128xbf16> to vector<1x16x128xbf16>
    %393 = vector.shape_cast %389 : vector<16x128xbf16> to vector<1x16x128xbf16>
    %394 = tpu.concatenate %392, %393 in 0 : vector<1x16x128xbf16>, vector<1x16x128xbf16> -> vector<2x16x128xbf16>
    %395 = vector.shape_cast %394 : vector<2x16x128xbf16> to vector<32x128xbf16>
    %c0_81 = arith.constant 0 : index
    %c0_82 = arith.constant 0 : index
    %c0_83 = arith.constant 0 : index
    %396 = vector.load %arg15[%c0_81, %c0_82, %c0_83] : memref<1x128x128xbf16, #tpu.memory_space<vmem>>, vector<1x128x128xbf16>
    %397 = vector.shape_cast %396 : vector<1x128x128xbf16> to vector<128x128xbf16>
    %cst_84 = arith.constant dense<0.000000e+00> : vector<32x128xf32>
    %398 = tpu.matmul %395, %397, %cst_84 {dimension_numbers = #tpu.dot_dimension_numbers<[1], [0], [0], [1], [0, 0, 1, 1], [], []>} : vector<32x128xbf16>, vector<128x128xbf16>, vector<32x128xf32> -> vector<32x128xf32>
    %c0_85 = arith.constant 0 : index
    %c0_86 = arith.constant 0 : index
    %c0_87 = arith.constant 0 : index
    %399 = vector.load %arg16[%c0_85, %c0_86, %c0_87] : memref<1x1x128xf32, #tpu.memory_space<vmem>>, vector<1x1x128xf32>
    %400 = vector.shape_cast %399 : vector<1x1x128xf32> to vector<1x128xf32>
    %401 = vector.broadcast %400 : vector<1x128xf32> to vector<32x128xf32>
    %402 = arith.addf %398, %401 : vector<32x128xf32>
    %403 = vector.shape_cast %323 : vector<16x16xf32> to vector<1x16x16xf32>
    %404 = vector.shape_cast %391 : vector<16x16xf32> to vector<1x16x16xf32>
    %405 = tpu.concatenate %403, %404 in 0 : vector<1x16x16xf32>, vector<1x16x16xf32> -> vector<2x16x16xf32>
    %406 = arith.truncf %405 : vector<2x16x16xf32> to vector<2x16x16xbf16>
    %c0_88 = arith.constant 0 : index
    %c0_89 = arith.constant 0 : index
    %c0_90 = arith.constant 0 : index
    %c0_91 = arith.constant 0 : index
    %407 = vector.load %arg22[%c0_88, %c0_89, %c0_90, %c0_91] : memref<1x2x16x16xbf16, #tpu.memory_space<vmem>>, vector<1x2x16x16xbf16>
    %408 = vector.shape_cast %407 : vector<1x2x16x16xbf16> to vector<2x16x16xbf16>
    %409 = vector.shape_cast %406 : vector<2x16x16xbf16> to vector<1x2x16x16xbf16>
    tpu.vector_store %arg22[%c0_88, %c0_89, %c0_90, %c0_91], %409 {strides = array<i32>} : memref<1x2x16x16xbf16, #tpu.memory_space<vmem>>, vector<1x2x16x16xbf16>,
    %410 = arith.addf %402, %209 : vector<32x128xf32>
    %411 = vector.extract_strided_slice %6 {offsets = [2, 0, 0], sizes = [1, 1, 128], strides = [1, 1, 1]} : vector<4x2x128xf32> to vector<1x1x128xf32>
    %412 = vector.shape_cast %411 : vector<1x1x128xf32> to vector<1x128xf32>
    %413 = vector.extract_strided_slice %6 {offsets = [2, 1, 0], sizes = [1, 1, 128], strides = [1, 1, 1]} : vector<4x2x128xf32> to vector<1x1x128xf32>
    %414 = vector.shape_cast %413 : vector<1x1x128xf32> to vector<1x128xf32>
    %cst_92 = arith.constant dense<0.000000e+00> : vector<32xf32>
    %415 = vector.multi_reduction <add>, %410, %cst_92 [1] : vector<32x128xf32> to vector<32xf32>
    %416 = vector.shape_cast %415 : vector<32xf32> to vector<32x1xf32>
    %cst_93 = arith.constant 1.280000e+02 : f32
    %417 = vector.broadcast %cst_93 : f32 to vector<32x1xf32>
    %418 = arith.divf %416, %417 : vector<32x1xf32>
    %419 = vector.broadcast %418 : vector<32x1xf32> to vector<32x128xf32>
    %420 = arith.subf %410, %419 : vector<32x128xf32>
    %421 = arith.mulf %420, %420 : vector<32x128xf32>
    %cst_94 = arith.constant dense<0.000000e+00> : vector<32xf32>
    %422 = vector.multi_reduction <add>, %421, %cst_94 [1] : vector<32x128xf32> to vector<32xf32>
    %423 = vector.shape_cast %422 : vector<32xf32> to vector<32x1xf32>
    %cst_95 = arith.constant 1.280000e+02 : f32
    %424 = vector.broadcast %cst_95 : f32 to vector<32x1xf32>
    %425 = arith.divf %423, %424 : vector<32x1xf32>
    %cst_96 = arith.constant 9.99999997E-7 : f32
    %426 = vector.broadcast %cst_96 : f32 to vector<32x1xf32>
    %427 = arith.addf %425, %426 : vector<32x1xf32>
    %428 = math.rsqrt %427 : vector<32x1xf32>
    %429 = vector.broadcast %428 : vector<32x1xf32> to vector<32x128xf32>
    %430 = arith.mulf %420, %429 : vector<32x128xf32>
    %431 = vector.broadcast %412 : vector<1x128xf32> to vector<32x128xf32>
    %432 = arith.mulf %430, %431 : vector<32x128xf32>
    %433 = vector.broadcast %414 : vector<1x128xf32> to vector<32x128xf32>
    %434 = arith.addf %432, %433 : vector<32x128xf32>
    %435 = arith.truncf %434 : vector<32x128xf32> to vector<32x128xbf16>
    %c0_97 = arith.constant 0 : index
    %c0_98 = arith.constant 0 : index
    %c0_99 = arith.constant 0 : index
    %436 = vector.load %arg17[%c0_97, %c0_98, %c0_99] : memref<1x128x256xbf16, #tpu.memory_space<vmem>>, vector<1x128x256xbf16>
    %437 = vector.shape_cast %436 : vector<1x128x256xbf16> to vector<128x256xbf16>
    %cst_100 = arith.constant dense<0.000000e+00> : vector<32x256xf32>
    %438 = tpu.matmul %435, %437, %cst_100 {dimension_numbers = #tpu.dot_dimension_numbers<[1], [0], [0], [1], [0, 0, 1, 1], [], []>} : vector<32x128xbf16>, vector<128x256xbf16>, vector<32x256xf32> -> vector<32x256xf32>
    %c0_101 = arith.constant 0 : index
    %c0_102 = arith.constant 0 : index
    %c0_103 = arith.constant 0 : index
    %439 = vector.load %arg18[%c0_101, %c0_102, %c0_103] : memref<1x1x256xf32, #tpu.memory_space<vmem>>, vector<1x1x256xf32>
    %440 = vector.shape_cast %439 : vector<1x1x256xf32> to vector<1x256xf32>
    %441 = vector.broadcast %440 : vector<1x256xf32> to vector<32x256xf32>
    %442 = arith.addf %438, %441 : vector<32x256xf32>
    %cst_104 = arith.constant 5.000000e-01 : f32
    %443 = vector.broadcast %cst_104 : f32 to vector<32x256xf32>
    %444 = arith.mulf %443, %442 : vector<32x256xf32>
    %cst_105 = arith.constant 4.471500e-02 : f32
    %445 = vector.broadcast %cst_105 : f32 to vector<32x256xf32>
    %446 = arith.mulf %445, %442 : vector<32x256xf32>
    %447 = arith.mulf %446, %442 : vector<32x256xf32>
    %448 = arith.mulf %447, %442 : vector<32x256xf32>
    %449 = arith.addf %442, %448 : vector<32x256xf32>
    %cst_106 = arith.constant 0.797884583 : f32
    %450 = vector.broadcast %cst_106 : f32 to vector<32x256xf32>
    %451 = arith.mulf %450, %449 : vector<32x256xf32>
    %452 = math.tanh %451 : vector<32x256xf32>
    %cst_107 = arith.constant 1.000000e+00 : f32
    %453 = vector.broadcast %cst_107 : f32 to vector<32x256xf32>
    %454 = arith.addf %453, %452 : vector<32x256xf32>
    %455 = arith.mulf %444, %454 : vector<32x256xf32>
    %456 = arith.truncf %455 : vector<32x256xf32> to vector<32x256xbf16>
    %c0_108 = arith.constant 0 : index
    %c0_109 = arith.constant 0 : index
    %c0_110 = arith.constant 0 : index
    %457 = vector.load %arg19[%c0_108, %c0_109, %c0_110] : memref<1x256x128xbf16, #tpu.memory_space<vmem>>, vector<1x256x128xbf16>
    %458 = vector.shape_cast %457 : vector<1x256x128xbf16> to vector<256x128xbf16>
    %cst_111 = arith.constant dense<0.000000e+00> : vector<32x128xf32>
    %459 = tpu.matmul %456, %458, %cst_111 {dimension_numbers = #tpu.dot_dimension_numbers<[1], [0], [0], [1], [0, 0, 1, 1], [], []>} : vector<32x256xbf16>, vector<256x128xbf16>, vector<32x128xf32> -> vector<32x128xf32>
    %c0_112 = arith.constant 0 : index
    %c0_113 = arith.constant 0 : index
    %c0_114 = arith.constant 0 : index
    %460 = vector.load %arg20[%c0_112, %c0_113, %c0_114] : memref<1x1x128xf32, #tpu.memory_space<vmem>>, vector<1x1x128xf32>
    %461 = vector.shape_cast %460 : vector<1x1x128xf32> to vector<1x128xf32>
    %462 = vector.broadcast %461 : vector<1x128xf32> to vector<32x128xf32>
    %463 = arith.addf %459, %462 : vector<32x128xf32>
    %464 = arith.addf %463, %410 : vector<32x128xf32>
    %465 = vector.shape_cast %464 : vector<32x128xf32> to vector<2x16x128xf32>
    %c0_115 = arith.constant 0 : index
    %c0_116 = arith.constant 0 : index
    %c0_117 = arith.constant 0 : index
    %466 = vector.load %arg24[%c0_115, %c0_116, %c0_117] : memref<2x16x128xf32, #tpu.memory_space<vmem>>, vector<2x16x128xf32>
    tpu.vector_store %arg24[%c0_115, %c0_116, %c0_117], %465 {strides = array<i32>} : memref<2x16x128xf32, #tpu.memory_space<vmem>>, vector<2x16x128xf32>,
    %c1_i32 = arith.constant 1 : i32
    %467 = arith.cmpi eq, %arg1, %c1_i32 : i32
    %468 = arith.extui %467 : i1 to i32
    %c0_i32_118 = arith.constant 0 : i32
    %469 = arith.cmpi ne, %468, %c0_i32_118 : i32
    scf.if %469 {
      %470 = vector.extract_strided_slice %6 {offsets = [3, 0, 0], sizes = [1, 1, 128], strides = [1, 1, 1]} : vector<4x2x128xf32> to vector<1x1x128xf32>
      %471 = vector.shape_cast %470 : vector<1x1x128xf32> to vector<1x128xf32>
      %472 = vector.extract_strided_slice %6 {offsets = [3, 1, 0], sizes = [1, 1, 128], strides = [1, 1, 1]} : vector<4x2x128xf32> to vector<1x1x128xf32>
      %473 = vector.shape_cast %472 : vector<1x1x128xf32> to vector<1x128xf32>
      %cst_119 = arith.constant dense<0.000000e+00> : vector<32xf32>
      %474 = vector.multi_reduction <add>, %464, %cst_119 [1] : vector<32x128xf32> to vector<32xf32>
      %475 = vector.shape_cast %474 : vector<32xf32> to vector<32x1xf32>
      %cst_120 = arith.constant 1.280000e+02 : f32
      %476 = vector.broadcast %cst_120 : f32 to vector<32x1xf32>
      %477 = arith.divf %475, %476 : vector<32x1xf32>
      %478 = vector.broadcast %477 : vector<32x1xf32> to vector<32x128xf32>
      %479 = arith.subf %464, %478 : vector<32x128xf32>
      %480 = arith.mulf %479, %479 : vector<32x128xf32>
      %cst_121 = arith.constant dense<0.000000e+00> : vector<32xf32>
      %481 = vector.multi_reduction <add>, %480, %cst_121 [1] : vector<32x128xf32> to vector<32xf32>
      %482 = vector.shape_cast %481 : vector<32xf32> to vector<32x1xf32>
      %cst_122 = arith.constant 1.280000e+02 : f32
      %483 = vector.broadcast %cst_122 : f32 to vector<32x1xf32>
      %484 = arith.divf %482, %483 : vector<32x1xf32>
      %cst_123 = arith.constant 9.99999997E-7 : f32
      %485 = vector.broadcast %cst_123 : f32 to vector<32x1xf32>
      %486 = arith.addf %484, %485 : vector<32x1xf32>
      %487 = math.rsqrt %486 : vector<32x1xf32>
      %488 = vector.broadcast %487 : vector<32x1xf32> to vector<32x128xf32>
      %489 = arith.mulf %479, %488 : vector<32x128xf32>
      %490 = vector.broadcast %471 : vector<1x128xf32> to vector<32x128xf32>
      %491 = arith.mulf %489, %490 : vector<32x128xf32>
      %492 = vector.broadcast %473 : vector<1x128xf32> to vector<32x128xf32>
      %493 = arith.addf %491, %492 : vector<32x128xf32>
      %494 = vector.shape_cast %493 : vector<32x128xf32> to vector<2x16x128xf32>
      %c0_124 = arith.constant 0 : index
      %c0_125 = arith.constant 0 : index
      %c0_126 = arith.constant 0 : index
      %495 = vector.load %arg21[%c0_124, %c0_125, %c0_126] : memref<2x16x128xf32, #tpu.memory_space<vmem>>, vector<2x16x128xf32>
      tpu.vector_store %arg21[%c0_124, %c0_125, %c0_126], %494 {strides = array<i32>} : memref<2x16x128xf32, #tpu.memory_space<vmem>>, vector<2x16x128xf32>,
    } else {
    }
    return
  }
  func.func @transform_0(%arg0: i32, %arg1: i32) -> (i32, i32, i32) {
    %c0_i32 = arith.constant 0 : i32
    %c0_i32_0 = arith.constant 0 : i32
    %c0_i32_1 = arith.constant 0 : i32
    return %arg0, %c0_i32, %c0_i32_0 : i32, i32, i32
  }
  func.func @transform_1(%arg0: i32, %arg1: i32) -> (i32, i32, i32) {
    %c0_i32 = arith.constant 0 : i32
    %c0_i32_0 = arith.constant 0 : i32
    %c0_i32_1 = arith.constant 0 : i32
    return %arg0, %c0_i32, %c0_i32_0 : i32, i32, i32
  }
  func.func @transform_2(%arg0: i32, %arg1: i32) -> (i32, i32, i32) {
    %c0_i32 = arith.constant 0 : i32
    %c0_i32_0 = arith.constant 0 : i32
    %c0_i32_1 = arith.constant 0 : i32
    return %arg0, %c0_i32, %c0_i32_0 : i32, i32, i32
  }
  func.func @transform_3(%arg0: i32, %arg1: i32) -> (i32, i32, i32) {
    %c0_i32 = arith.constant 0 : i32
    %c0_i32_0 = arith.constant 0 : i32
    %c0_i32_1 = arith.constant 0 : i32
    return %arg0, %c0_i32, %c0_i32_0 : i32, i32, i32
  }
  func.func @transform_4(%arg0: i32, %arg1: i32) -> (i32, i32, i32, i32) {
    %c0_i32 = arith.constant 0 : i32
    %c0_i32_0 = arith.constant 0 : i32
    %c0_i32_1 = arith.constant 0 : i32
    %c0_i32_2 = arith.constant 0 : i32
    return %arg1, %c0_i32, %c0_i32_0, %c0_i32_1 : i32, i32, i32, i32
  }
  func.func @transform_5(%arg0: i32, %arg1: i32) -> (i32, i32, i32) {
    %c0_i32 = arith.constant 0 : i32
    %c0_i32_0 = arith.constant 0 : i32
    %c0_i32_1 = arith.constant 0 : i32
    return %arg1, %c0_i32, %c0_i32_0 : i32, i32, i32
  }
  func.func @transform_6(%arg0: i32, %arg1: i32) -> (i32, i32, i32) {
    %c0_i32 = arith.constant 0 : i32
    %c0_i32_0 = arith.constant 0 : i32
    %c0_i32_1 = arith.constant 0 : i32
    return %arg1, %c0_i32, %c0_i32_0 : i32, i32, i32
  }
  func.func @transform_7(%arg0: i32, %arg1: i32) -> (i32, i32, i32) {
    %c0_i32 = arith.constant 0 : i32
    %c0_i32_0 = arith.constant 0 : i32
    %c0_i32_1 = arith.constant 0 : i32
    return %arg1, %c0_i32, %c0_i32_0 : i32, i32, i32
  }
  func.func @transform_8(%arg0: i32, %arg1: i32) -> (i32, i32, i32) {
    %c0_i32 = arith.constant 0 : i32
    %c0_i32_0 = arith.constant 0 : i32
    %c0_i32_1 = arith.constant 0 : i32
    return %arg1, %c0_i32, %c0_i32_0 : i32, i32, i32
  }
  func.func @transform_9(%arg0: i32, %arg1: i32) -> (i32, i32, i32) {
    %c0_i32 = arith.constant 0 : i32
    %c0_i32_0 = arith.constant 0 : i32
    %c0_i32_1 = arith.constant 0 : i32
    return %arg1, %c0_i32, %c0_i32_0 : i32, i32, i32
  }
  func.func @transform_10(%arg0: i32, %arg1: i32) -> (i32, i32, i32) {
    %c0_i32 = arith.constant 0 : i32
    %c0_i32_0 = arith.constant 0 : i32
    %c0_i32_1 = arith.constant 0 : i32
    return %arg1, %c0_i32, %c0_i32_0 : i32, i32, i32
  }
  func.func @transform_11(%arg0: i32, %arg1: i32) -> (i32, i32, i32) {
    %c0_i32 = arith.constant 0 : i32
    %c0_i32_0 = arith.constant 0 : i32
    %c0_i32_1 = arith.constant 0 : i32
    return %arg1, %c0_i32, %c0_i32_0 : i32, i32, i32
  }
  func.func @transform_12(%arg0: i32, %arg1: i32) -> (i32, i32, i32) {
    %c0_i32 = arith.constant 0 : i32
    %c0_i32_0 = arith.constant 0 : i32
    %c0_i32_1 = arith.constant 0 : i32
    return %arg1, %c0_i32, %c0_i32_0 : i32, i32, i32
  }
  func.func @transform_13(%arg0: i32, %arg1: i32) -> (i32, i32, i32) {
    %c0_i32 = arith.constant 0 : i32
    %c0_i32_0 = arith.constant 0 : i32
    %c0_i32_1 = arith.constant 0 : i32
    return %arg1, %c0_i32, %c0_i32_0 : i32, i32, i32
  }
  func.func @transform_14(%arg0: i32, %arg1: i32) -> (i32, i32, i32) {
    %c0_i32 = arith.constant 0 : i32
    %c0_i32_0 = arith.constant 0 : i32
    %c0_i32_1 = arith.constant 0 : i32
    return %arg1, %c0_i32, %c0_i32_0 : i32, i32, i32
  }
  func.func @transform_15(%arg0: i32, %arg1: i32) -> (i32, i32, i32) {
    %c0_i32 = arith.constant 0 : i32
    %c0_i32_0 = arith.constant 0 : i32
    %c0_i32_1 = arith.constant 0 : i32
    return %arg1, %c0_i32, %c0_i32_0 : i32, i32, i32
  }
  func.func @transform_16(%arg0: i32, %arg1: i32) -> (i32, i32, i32) {
    %c0_i32 = arith.constant 0 : i32
    %c0_i32_0 = arith.constant 0 : i32
    %c0_i32_1 = arith.constant 0 : i32
    return %arg1, %c0_i32, %c0_i32_0 : i32, i32, i32
  }
  func.func @transform_17(%arg0: i32, %arg1: i32) -> (i32, i32, i32) {
    %c0_i32 = arith.constant 0 : i32
    %c0_i32_0 = arith.constant 0 : i32
    %c0_i32_1 = arith.constant 0 : i32
    return %arg1, %c0_i32, %c0_i32_0 : i32, i32, i32
  }
  func.func @transform_18(%arg0: i32, %arg1: i32) -> (i32, i32, i32) {
    %c0_i32 = arith.constant 0 : i32
    %c0_i32_0 = arith.constant 0 : i32
    %c0_i32_1 = arith.constant 0 : i32
    return %arg1, %c0_i32, %c0_i32_0 : i32, i32, i32
  }
  func.func @transform_19(%arg0: i32, %arg1: i32) -> (i32, i32, i32) {
    %c0_i32 = arith.constant 0 : i32
    %c0_i32_0 = arith.constant 0 : i32
    %c0_i32_1 = arith.constant 0 : i32
    return %arg0, %c0_i32, %c0_i32_0 : i32, i32, i32
  }
  func.func @transform_20(%arg0: i32, %arg1: i32) -> (i32, i32, i32, i32) {
    %c0_i32 = arith.constant 0 : i32
    %c0_i32_0 = arith.constant 0 : i32
    %c0_i32_1 = arith.constant 0 : i32
    return %arg1, %arg0, %c0_i32, %c0_i32_0 : i32, i32, i32, i32
  }
  func.func @transform_21(%arg0: i32, %arg1: i32) -> (i32, i32, i32, i32) {
    %c0_i32 = arith.constant 0 : i32
    %c0_i32_0 = arith.constant 0 : i32
    %c0_i32_1 = arith.constant 0 : i32
    return %arg1, %arg0, %c0_i32, %c0_i32_0 : i32, i32, i32, i32
  }
}

</mosaic_0001>

<llo_original>
// kernel: tpu_custom_call.1
$region0: #{tpu_custom_call.1}
  #allocation0 [shape = 'u32[]', space=smem, size = 0x4, offset = 0x4, fixed_abs, tag = 'smem constant byte address 0x4 - core index']
  #allocation1 [shape = 'u32[144,128]{1,0:T(1,128)}', space=vmem, size = 0x12000, scoped, tag = 'internal scratch']
  #allocation2 [shape = 'f32[2,16,128]{2,1,0:T(8,128)}', space=vmem, size = 0x4000, scoped, tag = 'scratch operand']
  %s0 = inlined_call_operand.hbm [shape: bf16[4,16,128], index: 0, kind: input, shape index: {}]
  %s1 = inlined_call_operand.hbm [shape: bf16[4,16,128], index: 1, kind: input, shape index: {}]
  %s2 = inlined_call_operand.hbm [shape: f32[4,1,16], index: 2, kind: input, shape index: {}]
  %s3 = inlined_call_operand.vmem [shape: f32[4,1,16], index: 3, kind: input, shape index: {}]
  %s4 = inlined_call_operand.hbm [shape: f32[2,4,2,128], index: 4, kind: input, shape index: {}]
  %s5 = inlined_call_operand.hbm [shape: bf16[2,128,384], index: 5, kind: input, shape index: {}]
  %s6 = inlined_call_operand.vmem [shape: f32[2,1,384], index: 6, kind: input, shape index: {}]
  %s7 = inlined_call_operand.hbm [shape: bf16[2,128,128], index: 7, kind: input, shape index: {}]
  %s8 = inlined_call_operand.hbm [shape: f32[2,1,128], index: 8, kind: input, shape index: {}]
  %s9 = inlined_call_operand.hbm [shape: bf16[2,128,128], index: 9, kind: input, shape index: {}]
  %s10 = inlined_call_operand.hbm [shape: f32[2,1,128], index: 10, kind: input, shape index: {}]
  %s11 = inlined_call_operand.hbm [shape: bf16[2,128,256], index: 11, kind: input, shape index: {}]
  %s12 = inlined_call_operand.vmem [shape: f32[2,1,256], index: 12, kind: input, shape index: {}]
  %s13 = inlined_call_operand.hbm [shape: bf16[2,128,128], index: 13, kind: input, shape index: {}]
  %s14 = inlined_call_operand.vmem [shape: f32[2,1,128], index: 14, kind: input, shape index: {}]
  %s15 = inlined_call_operand.hbm [shape: bf16[2,128,256], index: 15, kind: input, shape index: {}]
  %s16 = inlined_call_operand.vmem [shape: f32[2,1,256], index: 16, kind: input, shape index: {}]
  %s17 = inlined_call_operand.hbm [shape: bf16[2,256,128], index: 17, kind: input, shape index: {}]
  %s18 = inlined_call_operand.vmem [shape: f32[2,1,128], index: 18, kind: input, shape index: {}]
  %s19 = inlined_call_operand.hbm [shape: f32[4,16,128], index: 19, kind: output, shape index: {0}]
  %s20 = inlined_call_operand.hbm [shape: bf16[2,4,16,16], index: 20, kind: output, shape index: {1}]
  %s21 = inlined_call_operand.hbm [shape: bf16[2,4,16,128], index: 21, kind: output, shape index: {2}]
  %22 = xla_tuple %s19, %s20, %s21
  %s23 = sld [smem:[#allocation0]]
  $region185: #{tpu_custom_call.1} parent=0
    _
  %s25 = ssub.s32 1, %s23
  %s26 = scalar_select 0, %s25, %s23
  $region1: #{tpu_custom_call.1} parent=0
    #allocation3 [shape = 'u8[16384]{0}', space=vmem, size = 0x4000, scoped, tag = 'input window, operand 0']
    #allocation4 [shape = 's32[2]{0}', space=sflag, size = 0x8, scoped, tag = 'scoped memory for tpu_custom_call.1']
    #allocation5 [shape = 's32[2]{0}', space=sflag, size = 0x8, scoped, tag = 'scoped memory for tpu_custom_call.1']
    #allocation6 [shape = 'u8[16384]{0}', space=vmem, size = 0x4000, scoped, tag = 'input window, operand 1']
    #allocation7 [shape = 's32[2]{0}', space=sflag, size = 0x8, scoped, tag = 'scoped memory for tpu_custom_call.1']
    #allocation8 [shape = 'u8[2048]{0}', space=vmem, size = 0x800, scoped, tag = 'input window, operand 2']
    #allocation9 [shape = 'u8[8192]{0}', space=vmem, size = 0x2000, scoped, tag = 'input window, operand 4']
    #allocation10 [shape = 's32[2]{0}', space=sflag, size = 0x8, scoped, tag = 'scoped memory for tpu_custom_call.1']
    #allocation11 [shape = 'u8[196608]{0}', space=vmem, size = 0x30000, scoped, tag = 'input window, operand 5']
    #allocation12 [shape = 'u8[65536]{0}', space=vmem, size = 0x10000, scoped, tag = 'input window, operand 7']
    #allocation13 [shape = 's32[2]{0}', space=sflag, size = 0x8, scoped, tag = 'scoped memory for tpu_custom_call.1']
    #allocation14 [shape = 'u8[1024]{0}', space=vmem, size = 0x400, scoped, tag = 'input window, operand 8']
    #allocation15 [shape = 'u8[65536]{0}', space=vmem, size = 0x10000, scoped, tag = 'input window, operand 9']
    #allocation16 [shape = 's32[2]{0}', space=sflag, size = 0x8, scoped, tag = 'scoped memory for tpu_custom_call.1']
    #allocation17 [shape = 'u8[1024]{0}', space=vmem, size = 0x400, scoped, tag = 'input window, operand 10']
    #allocation18 [shape = 'u8[131072]{0}', space=vmem, size = 0x20000, scoped, tag = 'input window, operand 11']
    #allocation19 [shape = 's32[2]{0}', space=sflag, size = 0x8, scoped, tag = 'scoped memory for tpu_custom_call.1']
    #allocation20 [shape = 'u8[65536]{0}', space=vmem, size = 0x10000, scoped, tag = 'input window, operand 13']
    #allocation21 [shape = 'u8[131072]{0}', space=vmem, size = 0x20000, scoped, tag = 'input window, operand 15']
    #allocation22 [shape = 's32[2]{0}', space=sflag, size = 0x8, scoped, tag = 'scoped memory for tpu_custom_call.1']
    #allocation23 [shape = 'u8[131072]{0}', space=vmem, size = 0x20000, scoped, tag = 'input window, operand 17']
    #allocation24 [shape = 'u8[32768]{0}', space=vmem, size = 0x8000, scoped, tag = 'output window, operand 0']
    #allocation25 [shape = 'u8[16384]{0}', space=vmem, size = 0x4000, scoped, tag = 'output window, operand 1']
    #allocation26 [shape = 's32[2]{0}', space=sflag, size = 0x8, scoped, tag = 'scoped memory for tpu_custom_call.1']
    #allocation27 [shape = 'u8[16384]{0}', space=vmem, size = 0x4000, scoped, tag = 'output window, operand 2']
    %27 = vsyncpa [#allocation4], 0
    %s28 = scalar_lea.sflag [#allocation4], 1
    %29 = vsyncpa %s28, 0
    %30 = vsyncpa [#allocation7], 0
    %s31 = scalar_lea.sflag [#allocation7], 1
    %32 = vsyncpa %s31, 0
    %33 = vsyncpa [#allocation10], 0
    %s34 = scalar_lea.sflag [#allocation10], 1
    %35 = vsyncpa %s34, 0
    %36 = vsyncpa [#allocation13], 0
    %s37 = scalar_lea.sflag [#allocation13], 1
    %38 = vsyncpa %s37, 0
    %39 = vsyncpa [#allocation16], 0
    %s40 = scalar_lea.sflag [#allocation16], 1
    %41 = vsyncpa %s40, 0
    %42 = vsyncpa [#allocation19], 0
    %s43 = scalar_lea.sflag [#allocation19], 1
    %44 = vsyncpa %s43, 0
    %45 = vsyncpa [#allocation22], 0
    %s46 = scalar_lea.sflag [#allocation22], 1
    %47 = vsyncpa %s46, 0
    %48 = vsyncpa [#allocation5], 0
    %s49 = scalar_lea.sflag [#allocation5], 1
    %50 = vsyncpa %s49, 0
    %51 = vsyncpa [#allocation26], 0
    %s52 = scalar_lea.sflag [#allocation26], 1
    %53 = vsyncpa %s52, 0
    loop: start=0, step=1, limit=6
    $region2: #{tpu_custom_call.1} parent=1 // loop_pre_header
      _
    $region3: #{tpu_custom_call.1} parent=1 // loop_header
      %s55 = sphi 0, %s59
      %p56 = scmp.ge.s32.totalorder %s55, 6
      %s62 = sphi 0, %s74
      %s63 = sphi 0, %s70
      %s64 = sphi 0, %s62
      %s65 = sphi 0, %s63
      %s66 = sphi 0, %s64
      %s67 = sphi 0, %s65
      %s77 = sphi 0, %s79
      %s80 = sphi 0, %s77
      %s81 = sphi 0, %s80
      %s97 = sphi 0, %s81
      %s103 = sphi 0, %s105
      %s106 = sphi 0, %s103
      %s107 = sphi 0, %s106
      %s123 = sphi 0, %s107
      %s129 = sphi 0, %s131
      %s132 = sphi 0, %s129
      %s133 = sphi 0, %s132
      %s149 = sphi 0, %s133
      %s155 = sphi 0, %s157
      %s158 = sphi 0, %s155
      %s159 = sphi 0, %s158
      %s175 = sphi 0, %s159
      %s181 = sphi 0, %s183
      %s184 = sphi 0, %s181
      %s185 = sphi 0, %s184
      %s201 = sphi 0, %s185
      %s207 = sphi 0, %s209
      %s210 = sphi 0, %s207
      %s211 = sphi 0, %s210
      %s227 = sphi 0, %s211
      %s233 = sphi 0, %s235
      %s236 = sphi 0, %s233
      %s237 = sphi 0, %s236
      %s253 = sphi 0, %s237
      %s259 = sphi 0, %s261
      %s262 = sphi 0, %s259
      %s263 = sphi 0, %s262
      %s279 = sphi 0, %s263
      %s285 = sphi 0, %s287
      %s288 = sphi 0, %s285
      %s289 = sphi 0, %s288
      %s305 = sphi 0, %s289
      %s311 = sphi 0, %s313
      %s314 = sphi 0, %s311
      %s315 = sphi 0, %s314
      %s331 = sphi 0, %s315
      %s337 = sphi 0, %s339
      %s340 = sphi 0, %s337
      %s341 = sphi 0, %s340
      %s357 = sphi 0, %s341
      %s363 = sphi 0, %s365
      %s366 = sphi 0, %s363
      %s367 = sphi 0, %s366
      %s383 = sphi 0, %s367
      %s389 = sphi 0, %s391
      %s392 = sphi 0, %s389
      %s393 = sphi 0, %s392
      %s409 = sphi 0, %s393
      %s415 = sphi 0, %s417
      %s418 = sphi 0, %s415
      %s419 = sphi 0, %s418
      %s435 = sphi 0, %s419
      %s441 = sphi 0, %s443
      %s444 = sphi 0, %s441
      %s445 = sphi 0, %s444
      %s461 = sphi 0, %s445
      %s467 = sphi 0, %s469
      %s470 = sphi 0, %s467
      %s471 = sphi 0, %s470
      %s487 = sphi 0, %s471
      %s493 = sphi 0, %s495
      %s496 = sphi 0, %s493
      %s497 = sphi 0, %s496
      %s513 = sphi 0, %s497
      %s519 = sphi 0, %s521
      %s522 = sphi 0, %s519
      %s523 = sphi 0, %s522
      %s539 = sphi 0, %s523
      %s545 = sphi 0, %s547
      %s548 = sphi 0, %s545
      %s549 = sphi 0, %s548
      %s565 = sphi 0, %s549
      %s571 = sphi 0, %s573
      %s574 = sphi 0, %s571
      %s575 = sphi 0, %s574
      %s591 = sphi 0, %s575
      %s599 = sphi 0, %s601
      %s602 = sphi 0, %s599
      %s603 = sphi 0, %s602
      %s619 = sphi 0, %s603
      %s627 = sphi 0, %s629
      %s630 = sphi 0, %s627
      %s631 = sphi 0, %s630
      %s647 = sphi 0, %s631
    $region4: #{tpu_custom_call.1} parent=1 // loop_header_branch
      %58 = sbr.rel (%p56) target = $region8
    $region5: #{tpu_custom_call.1} parent=1 // loop_body
      %s60 = ssub.s32 %s55, 1
      %s61 = ssub.s32 %s55, 2
      %s68 = sadd.s32 1, %s63
      %p69 = scmp.ge.s32.totalorder %s68, 2
      %s70 = scalar_select %p69, 0, %s68
      %s71 = sadd.s32 1, %s62
      %s72 = scalar_select %p69, %s71, %s62
      %p73 = scmp.ge.s32.totalorder %s72, 2
      %s74 = scalar_select %p73, 0, %s72
      %s75 = ssub.s32 %s62, %s74
      %p76 = scmp.eq.s32.totalorder %s75, 0
      %s78 = sadd.s32 %s77, 1
      %s79 = scalar_select %p76, %s77, %s78
      %p82 = pneg %p76
      %p83 = scmp.eq.s32.totalorder %s55, 3
      %p84 = por %p82, %p83
      %p85 = scmp.ne.s32.totalorder %s77, %s80
      %p86 = scmp.eq.s32.totalorder %s55, 0
      %p87 = por %p85, %p86
      %p88 = scmp.ne.s32.totalorder %s77, %s80
      %p89 = scmp.eq.s32.totalorder %s60, 3
      %p90 = por %p88, %p89
      %p91 = scmp.ne.s32.totalorder %s80, %s81
      %p92 = scmp.eq.s32.totalorder %s60, 0
      %p93 = por %p91, %p92
      %p94 = scmp.ne.s32.totalorder %s80, %s81
      %p95 = scmp.eq.s32.totalorder %s61, 3
      %p96 = por %p94, %p95
      %p98 = scmp.ne.s32.totalorder %s81, %s97
      %p99 = scmp.eq.s32.totalorder %s61, 0
      %p100 = por %p98, %p99
      %s101 = ssub.s32 %s62, %s74
      %p102 = scmp.eq.s32.totalorder %s101, 0
      %s104 = sadd.s32 %s103, 1
      %s105 = scalar_select %p102, %s103, %s104
      %p108 = pneg %p102
      %p109 = scmp.eq.s32.totalorder %s55, 3
      %p110 = por %p108, %p109
      %p111 = scmp.ne.s32.totalorder %s103, %s106
      %p112 = scmp.eq.s32.totalorder %s55, 0
      %p113 = por %p111, %p112
      %p114 = scmp.ne.s32.totalorder %s103, %s106
      %p115 = scmp.eq.s32.totalorder %s60, 3
      %p116 = por %p114, %p115
      %p117 = scmp.ne.s32.totalorder %s106, %s107
      %p118 = scmp.eq.s32.totalorder %s60, 0
      %p119 = por %p117, %p118
      %p120 = scmp.ne.s32.totalorder %s106, %s107
      %p121 = scmp.eq.s32.totalorder %s61, 3
      %p122 = por %p120, %p121
      %p124 = scmp.ne.s32.totalorder %s107, %s123
      %p125 = scmp.eq.s32.totalorder %s61, 0
      %p126 = por %p124, %p125
      %s127 = ssub.s32 %s62, %s74
      %p128 = scmp.eq.s32.totalorder %s127, 0
      %s130 = sadd.s32 %s129, 1
      %s131 = scalar_select %p128, %s129, %s130
      %p134 = pneg %p128
      %p135 = scmp.eq.s32.totalorder %s55, 3
      %p136 = por %p134, %p135
      %p137 = scmp.ne.s32.totalorder %s129, %s132
      %p138 = scmp.eq.s32.totalorder %s55, 0
      %p139 = por %p137, %p138
      %p140 = scmp.ne.s32.totalorder %s129, %s132
      %p141 = scmp.eq.s32.totalorder %s60, 3
      %p142 = por %p140, %p141
      %p143 = scmp.ne.s32.totalorder %s132, %s133
      %p144 = scmp.eq.s32.totalorder %s60, 0
      %p145 = por %p143, %p144
      %p146 = scmp.ne.s32.totalorder %s132, %s133
      %p147 = scmp.eq.s32.totalorder %s61, 3
      %p148 = por %p146, %p147
      %p150 = scmp.ne.s32.totalorder %s133, %s149
      %p151 = scmp.eq.s32.totalorder %s61, 0
      %p152 = por %p150, %p151
      %s153 = ssub.s32 %s62, %s74
      %p154 = scmp.eq.s32.totalorder %s153, 0
      %s156 = sadd.s32 %s155, 1
      %s157 = scalar_select %p154, %s155, %s156
      %p160 = pneg %p154
      %p161 = scmp.eq.s32.totalorder %s55, 3
      %p162 = por %p160, %p161
      %p163 = scmp.ne.s32.totalorder %s155, %s158
      %p164 = scmp.eq.s32.totalorder %s55, 0
      %p165 = por %p163, %p164
      %p166 = scmp.ne.s32.totalorder %s155, %s158
      %p167 = scmp.eq.s32.totalorder %s60, 3
      %p168 = por %p166, %p167
      %p169 = scmp.ne.s32.totalorder %s158, %s159
      %p170 = scmp.eq.s32.totalorder %s60, 0
      %p171 = por %p169, %p170
      %p172 = scmp.ne.s32.totalorder %s158, %s159
      %p173 = scmp.eq.s32.totalorder %s61, 3
      %p174 = por %p172, %p173
      %p176 = scmp.ne.s32.totalorder %s159, %s175
      %p177 = scmp.eq.s32.totalorder %s61, 0
      %p178 = por %p176, %p177
      %s179 = ssub.s32 %s63, %s70
      %p180 = scmp.eq.s32.totalorder %s179, 0
      %s182 = sadd.s32 %s181, 1
      %s183 = scalar_select %p180, %s181, %s182
      %p186 = pneg %p180
      %p187 = scmp.eq.s32.totalorder %s55, 3
      %p188 = por %p186, %p187
      %p189 = scmp.ne.s32.totalorder %s181, %s184
      %p190 = scmp.eq.s32.totalorder %s55, 0
      %p191 = por %p189, %p190
      %p192 = scmp.ne.s32.totalorder %s181, %s184
      %p193 = scmp.eq.s32.totalorder %s60, 3
      %p194 = por %p192, %p193
      %p195 = scmp.ne.s32.totalorder %s184, %s185
      %p196 = scmp.eq.s32.totalorder %s60, 0
      %p197 = por %p195, %p196
      %p198 = scmp.ne.s32.totalorder %s184, %s185
      %p199 = scmp.eq.s32.totalorder %s61, 3
      %p200 = por %p198, %p199
      %p202 = scmp.ne.s32.totalorder %s185, %s201
      %p203 = scmp.eq.s32.totalorder %s61, 0
      %p204 = por %p202, %p203
      %s205 = ssub.s32 %s63, %s70
      %p206 = scmp.eq.s32.totalorder %s205, 0
      %s208 = sadd.s32 %s207, 1
      %s209 = scalar_select %p206, %s207, %s208
      %p212 = pneg %p206
      %p213 = scmp.eq.s32.totalorder %s55, 3
      %p214 = por %p212, %p213
      %p215 = scmp.ne.s32.totalorder %s207, %s210
      %p216 = scmp.eq.s32.totalorder %s55, 0
      %p217 = por %p215, %p216
      %p218 = scmp.ne.s32.totalorder %s207, %s210
      %p219 = scmp.eq.s32.totalorder %s60, 3
      %p220 = por %p218, %p219
      %p221 = scmp.ne.s32.totalorder %s210, %s211
      %p222 = scmp.eq.s32.totalorder %s60, 0
      %p223 = por %p221, %p222
      %p224 = scmp.ne.s32.totalorder %s210, %s211
      %p225 = scmp.eq.s32.totalorder %s61, 3
      %p226 = por %p224, %p225
      %p228 = scmp.ne.s32.totalorder %s211, %s227
      %p229 = scmp.eq.s32.totalorder %s61, 0
      %p230 = por %p228, %p229
      %s231 = ssub.s32 %s63, %s70
      %p232 = scmp.eq.s32.totalorder %s231, 0
      %s234 = sadd.s32 %s233, 1
      %s235 = scalar_select %p232, %s233, %s234
      %p238 = pneg %p232
      %p239 = scmp.eq.s32.totalorder %s55, 3
      %p240 = por %p238, %p239
      %p241 = scmp.ne.s32.totalorder %s233, %s236
      %p242 = scmp.eq.s32.totalorder %s55, 0
      %p243 = por %p241, %p242
      %p244 = scmp.ne.s32.totalorder %s233, %s236
      %p245 = scmp.eq.s32.totalorder %s60, 3
      %p246 = por %p244, %p245
      %p247 = scmp.ne.s32.totalorder %s236, %s237
      %p248 = scmp.eq.s32.totalorder %s60, 0
      %p249 = por %p247, %p248
      %p250 = scmp.ne.s32.totalorder %s236, %s237
      %p251 = scmp.eq.s32.totalorder %s61, 3
      %p252 = por %p250, %p251
      %p254 = scmp.ne.s32.totalorder %s237, %s253
      %p255 = scmp.eq.s32.totalorder %s61, 0
      %p256 = por %p254, %p255
      %s257 = ssub.s32 %s63, %s70
      %p258 = scmp.eq.s32.totalorder %s257, 0
      %s260 = sadd.s32 %s259, 1
      %s261 = scalar_select %p258, %s259, %s260
      %p264 = pneg %p258
      %p265 = scmp.eq.s32.totalorder %s55, 3
      %p266 = por %p264, %p265
      %p267 = scmp.ne.s32.totalorder %s259, %s262
      %p268 = scmp.eq.s32.totalorder %s55, 0
      %p269 = por %p267, %p268
      %p270 = scmp.ne.s32.totalorder %s259, %s262
      %p271 = scmp.eq.s32.totalorder %s60, 3
      %p272 = por %p270, %p271
      %p273 = scmp.ne.s32.totalorder %s262, %s263
      %p274 = scmp.eq.s32.totalorder %s60, 0
      %p275 = por %p273, %p274
      %p276 = scmp.ne.s32.totalorder %s262, %s263
      %p277 = scmp.eq.s32.totalorder %s61, 3
      %p278 = por %p276, %p277
      %p280 = scmp.ne.s32.totalorder %s263, %s279
      %p281 = scmp.eq.s32.totalorder %s61, 0
      %p282 = por %p280, %p281
      %s283 = ssub.s32 %s63, %s70
      %p284 = scmp.eq.s32.totalorder %s283, 0
      %s286 = sadd.s32 %s285, 1
      %s287 = scalar_select %p284, %s285, %s286
      %p290 = pneg %p284
      %p291 = scmp.eq.s32.totalorder %s55, 3
      %p292 = por %p290, %p291
      %p293 = scmp.ne.s32.totalorder %s285, %s288
      %p294 = scmp.eq.s32.totalorder %s55, 0
      %p295 = por %p293, %p294
      %p296 = scmp.ne.s32.totalorder %s285, %s288
      %p297 = scmp.eq.s32.totalorder %s60, 3
      %p298 = por %p296, %p297
      %p299 = scmp.ne.s32.totalorder %s288, %s289
      %p300 = scmp.eq.s32.totalorder %s60, 0
      %p301 = por %p299, %p300
      %p302 = scmp.ne.s32.totalorder %s288, %s289
      %p303 = scmp.eq.s32.totalorder %s61, 3
      %p304 = por %p302, %p303
      %p306 = scmp.ne.s32.totalorder %s289, %s305
      %p307 = scmp.eq.s32.totalorder %s61, 0
      %p308 = por %p306, %p307
      %s309 = ssub.s32 %s63, %s70
      %p310 = scmp.eq.s32.totalorder %s309, 0
      %s312 = sadd.s32 %s311, 1
      %s313 = scalar_select %p310, %s311, %s312
      %p316 = pneg %p310
      %p317 = scmp.eq.s32.totalorder %s55, 3
      %p318 = por %p316, %p317
      %p319 = scmp.ne.s32.totalorder %s311, %s314
      %p320 = scmp.eq.s32.totalorder %s55, 0
      %p321 = por %p319, %p320
      %p322 = scmp.ne.s32.totalorder %s311, %s314
      %p323 = scmp.eq.s32.totalorder %s60, 3
      %p324 = por %p322, %p323
      %p325 = scmp.ne.s32.totalorder %s314, %s315
      %p326 = scmp.eq.s32.totalorder %s60, 0
      %p327 = por %p325, %p326
      %p328 = scmp.ne.s32.totalorder %s314, %s315
      %p329 = scmp.eq.s32.totalorder %s61, 3
      %p330 = por %p328, %p329
      %p332 = scmp.ne.s32.totalorder %s315, %s331
      %p333 = scmp.eq.s32.totalorder %s61, 0
      %p334 = por %p332, %p333
      %s335 = ssub.s32 %s63, %s70
      %p336 = scmp.eq.s32.totalorder %s335, 0
      %s338 = sadd.s32 %s337, 1
      %s339 = scalar_select %p336, %s337, %s338
      %p342 = pneg %p336
      %p343 = scmp.eq.s32.totalorder %s55, 3
      %p344 = por %p342, %p343
      %p345 = scmp.ne.s32.totalorder %s337, %s340
      %p346 = scmp.eq.s32.totalorder %s55, 0
      %p347 = por %p345, %p346
      %p348 = scmp.ne.s32.totalorder %s337, %s340
      %p349 = scmp.eq.s32.totalorder %s60, 3
      %p350 = por %p348, %p349
      %p351 = scmp.ne.s32.totalorder %s340, %s341
      %p352 = scmp.eq.s32.totalorder %s60, 0
      %p353 = por %p351, %p352
      %p354 = scmp.ne.s32.totalorder %s340, %s341
      %p355 = scmp.eq.s32.totalorder %s61, 3
      %p356 = por %p354, %p355
      %p358 = scmp.ne.s32.totalorder %s341, %s357
      %p359 = scmp.eq.s32.totalorder %s61, 0
      %p360 = por %p358, %p359
      %s361 = ssub.s32 %s63, %s70
      %p362 = scmp.eq.s32.totalorder %s361, 0
      %s364 = sadd.s32 %s363, 1
      %s365 = scalar_select %p362, %s363, %s364
      %p368 = pneg %p362
      %p369 = scmp.eq.s32.totalorder %s55, 3
      %p370 = por %p368, %p369
      %p371 = scmp.ne.s32.totalorder %s363, %s366
      %p372 = scmp.eq.s32.totalorder %s55, 0
      %p373 = por %p371, %p372
      %p374 = scmp.ne.s32.totalorder %s363, %s366
      %p375 = scmp.eq.s32.totalorder %s60, 3
      %p376 = por %p374, %p375
      %p377 = scmp.ne.s32.totalorder %s366, %s367
      %p378 = scmp.eq.s32.totalorder %s60, 0
      %p379 = por %p377, %p378
      %p380 = scmp.ne.s32.totalorder %s366, %s367
      %p381 = scmp.eq.s32.totalorder %s61, 3
      %p382 = por %p380, %p381
      %p384 = scmp.ne.s32.totalorder %s367, %s383
      %p385 = scmp.eq.s32.totalorder %s61, 0
      %p386 = por %p384, %p385
      %s387 = ssub.s32 %s63, %s70
      %p388 = scmp.eq.s32.totalorder %s387, 0
      %s390 = sadd.s32 %s389, 1
      %s391 = scalar_select %p388, %s389, %s390
      %p394 = pneg %p388
      %p395 = scmp.eq.s32.totalorder %s55, 3
      %p396 = por %p394, %p395
      %p397 = scmp.ne.s32.totalorder %s389, %s392
      %p398 = scmp.eq.s32.totalorder %s55, 0
      %p399 = por %p397, %p398
      %p400 = scmp.ne.s32.totalorder %s389, %s392
      %p401 = scmp.eq.s32.totalorder %s60, 3
      %p402 = por %p400, %p401
      %p403 = scmp.ne.s32.totalorder %s392, %s393
      %p404 = scmp.eq.s32.totalorder %s60, 0
      %p405 = por %p403, %p404
      %p406 = scmp.ne.s32.totalorder %s392, %s393
      %p407 = scmp.eq.s32.totalorder %s61, 3
      %p408 = por %p406, %p407
      %p410 = scmp.ne.s32.totalorder %s393, %s409
      %p411 = scmp.eq.s32.totalorder %s61, 0
      %p412 = por %p410, %p411
      %s413 = ssub.s32 %s63, %s70
      %p414 = scmp.eq.s32.totalorder %s413, 0
      %s416 = sadd.s32 %s415, 1
      %s417 = scalar_select %p414, %s415, %s416
      %p420 = pneg %p414
      %p421 = scmp.eq.s32.totalorder %s55, 3
      %p422 = por %p420, %p421
      %p423 = scmp.ne.s32.totalorder %s415, %s418
      %p424 = scmp.eq.s32.totalorder %s55, 0
      %p425 = por %p423, %p424
      %p426 = scmp.ne.s32.totalorder %s415, %s418
      %p427 = scmp.eq.s32.totalorder %s60, 3
      %p428 = por %p426, %p427
      %p429 = scmp.ne.s32.totalorder %s418, %s419
      %p430 = scmp.eq.s32.totalorder %s60, 0
      %p431 = por %p429, %p430
      %p432 = scmp.ne.s32.totalorder %s418, %s419
      %p433 = scmp.eq.s32.totalorder %s61, 3
      %p434 = por %p432, %p433
      %p436 = scmp.ne.s32.totalorder %s419, %s435
      %p437 = scmp.eq.s32.totalorder %s61, 0
      %p438 = por %p436, %p437
      %s439 = ssub.s32 %s63, %s70
      %p440 = scmp.eq.s32.totalorder %s439, 0
      %s442 = sadd.s32 %s441, 1
      %s443 = scalar_select %p440, %s441, %s442
      %p446 = pneg %p440
      %p447 = scmp.eq.s32.totalorder %s55, 3
      %p448 = por %p446, %p447
      %p449 = scmp.ne.s32.totalorder %s441, %s444
      %p450 = scmp.eq.s32.totalorder %s55, 0
      %p451 = por %p449, %p450
      %p452 = scmp.ne.s32.totalorder %s441, %s444
      %p453 = scmp.eq.s32.totalorder %s60, 3
      %p454 = por %p452, %p453
      %p455 = scmp.ne.s32.totalorder %s444, %s445
      %p456 = scmp.eq.s32.totalorder %s60, 0
      %p457 = por %p455, %p456
      %p458 = scmp.ne.s32.totalorder %s444, %s445
      %p459 = scmp.eq.s32.totalorder %s61, 3
      %p460 = por %p458, %p459
      %p462 = scmp.ne.s32.totalorder %s445, %s461
      %p463 = scmp.eq.s32.totalorder %s61, 0
      %p464 = por %p462, %p463
      %s465 = ssub.s32 %s63, %s70
      %p466 = scmp.eq.s32.totalorder %s465, 0
      %s468 = sadd.s32 %s467, 1
      %s469 = scalar_select %p466, %s467, %s468
      %p472 = pneg %p466
      %p473 = scmp.eq.s32.totalorder %s55, 3
      %p474 = por %p472, %p473
      %p475 = scmp.ne.s32.totalorder %s467, %s470
      %p476 = scmp.eq.s32.totalorder %s55, 0
      %p477 = por %p475, %p476
      %p478 = scmp.ne.s32.totalorder %s467, %s470
      %p479 = scmp.eq.s32.totalorder %s60, 3
      %p480 = por %p478, %p479
      %p481 = scmp.ne.s32.totalorder %s470, %s471
      %p482 = scmp.eq.s32.totalorder %s60, 0
      %p483 = por %p481, %p482
      %p484 = scmp.ne.s32.totalorder %s470, %s471
      %p485 = scmp.eq.s32.totalorder %s61, 3
      %p486 = por %p484, %p485
      %p488 = scmp.ne.s32.totalorder %s471, %s487
      %p489 = scmp.eq.s32.totalorder %s61, 0
      %p490 = por %p488, %p489
      %s491 = ssub.s32 %s63, %s70
      %p492 = scmp.eq.s32.totalorder %s491, 0
      %s494 = sadd.s32 %s493, 1
      %s495 = scalar_select %p492, %s493, %s494
      %p498 = pneg %p492
      %p499 = scmp.eq.s32.totalorder %s55, 3
      %p500 = por %p498, %p499
      %p501 = scmp.ne.s32.totalorder %s493, %s496
      %p502 = scmp.eq.s32.totalorder %s55, 0
      %p503 = por %p501, %p502
      %p504 = scmp.ne.s32.totalorder %s493, %s496
      %p505 = scmp.eq.s32.totalorder %s60, 3
      %p506 = por %p504, %p505
      %p507 = scmp.ne.s32.totalorder %s496, %s497
      %p508 = scmp.eq.s32.totalorder %s60, 0
      %p509 = por %p507, %p508
      %p510 = scmp.ne.s32.totalorder %s496, %s497
      %p511 = scmp.eq.s32.totalorder %s61, 3
      %p512 = por %p510, %p511
      %p514 = scmp.ne.s32.totalorder %s497, %s513
      %p515 = scmp.eq.s32.totalorder %s61, 0
      %p516 = por %p514, %p515
      %s517 = ssub.s32 %s63, %s70
      %p518 = scmp.eq.s32.totalorder %s517, 0
      %s520 = sadd.s32 %s519, 1
      %s521 = scalar_select %p518, %s519, %s520
      %p524 = pneg %p518
      %p525 = scmp.eq.s32.totalorder %s55, 3
      %p526 = por %p524, %p525
      %p527 = scmp.ne.s32.totalorder %s519, %s522
      %p528 = scmp.eq.s32.totalorder %s55, 0
      %p529 = por %p527, %p528
      %p530 = scmp.ne.s32.totalorder %s519, %s522
      %p531 = scmp.eq.s32.totalorder %s60, 3
      %p532 = por %p530, %p531
      %p533 = scmp.ne.s32.totalorder %s522, %s523
      %p534 = scmp.eq.s32.totalorder %s60, 0
      %p535 = por %p533, %p534
      %p536 = scmp.ne.s32.totalorder %s522, %s523
      %p537 = scmp.eq.s32.totalorder %s61, 3
      %p538 = por %p536, %p537
      %p540 = scmp.ne.s32.totalorder %s523, %s539
      %p541 = scmp.eq.s32.totalorder %s61, 0
      %p542 = por %p540, %p541
      %s543 = ssub.s32 %s63, %s70
      %p544 = scmp.eq.s32.totalorder %s543, 0
      %s546 = sadd.s32 %s545, 1
      %s547 = scalar_select %p544, %s545, %s546
      %p550 = pneg %p544
      %p551 = scmp.eq.s32.totalorder %s55, 3
      %p552 = por %p550, %p551
      %p553 = scmp.ne.s32.totalorder %s545, %s548
      %p554 = scmp.eq.s32.totalorder %s55, 0
      %p555 = por %p553, %p554
      %p556 = scmp.ne.s32.totalorder %s545, %s548
      %p557 = scmp.eq.s32.totalorder %s60, 3
      %p558 = por %p556, %p557
      %p559 = scmp.ne.s32.totalorder %s548, %s549
      %p560 = scmp.eq.s32.totalorder %s60, 0
      %p561 = por %p559, %p560
      %p562 = scmp.ne.s32.totalorder %s548, %s549
      %p563 = scmp.eq.s32.totalorder %s61, 3
      %p564 = por %p562, %p563
      %p566 = scmp.ne.s32.totalorder %s549, %s565
      %p567 = scmp.eq.s32.totalorder %s61, 0
      %p568 = por %p566, %p567
      %s569 = ssub.s32 %s62, %s74
      %p570 = scmp.eq.s32.totalorder %s569, 0
      %s572 = sadd.s32 %s571, 1
      %s573 = scalar_select %p570, %s571, %s572
      %p576 = pneg %p570
      %p577 = scmp.eq.s32.totalorder %s55, 3
      %p578 = por %p576, %p577
      %p579 = scmp.ne.s32.totalorder %s571, %s574
      %p580 = scmp.eq.s32.totalorder %s55, 0
      %p581 = por %p579, %p580
      %p582 = scmp.ne.s32.totalorder %s571, %s574
      %p583 = scmp.eq.s32.totalorder %s60, 3
      %p584 = por %p582, %p583
      %p585 = scmp.ne.s32.totalorder %s574, %s575
      %p586 = scmp.eq.s32.totalorder %s60, 0
      %p587 = por %p585, %p586
      %p588 = scmp.ne.s32.totalorder %s574, %s575
      %p589 = scmp.eq.s32.totalorder %s61, 3
      %p590 = por %p588, %p589
      %p592 = scmp.ne.s32.totalorder %s575, %s591
      %p593 = scmp.eq.s32.totalorder %s61, 0
      %p594 = por %p592, %p593
      %s595 = ssub.s32 %s63, %s70
      %s596 = ssub.s32 %s62, %s74
      %s597 = sor.u32 %s595, %s596
      %p598 = scmp.eq.s32.totalorder %s597, 0
      %s600 = sadd.s32 %s599, 1
      %s601 = scalar_select %p598, %s599, %s600
      %p604 = pneg %p598
      %p605 = scmp.eq.s32.totalorder %s55, 3
      %p606 = por %p604, %p605
      %p607 = scmp.ne.s32.totalorder %s599, %s602
      %p608 = scmp.eq.s32.totalorder %s55, 0
      %p609 = por %p607, %p608
      %p610 = scmp.ne.s32.totalorder %s599, %s602
      %p611 = scmp.eq.s32.totalorder %s60, 3
      %p612 = por %p610, %p611
      %p613 = scmp.ne.s32.totalorder %s602, %s603
      %p614 = scmp.eq.s32.totalorder %s60, 0
      %p615 = por %p613, %p614
      %p616 = scmp.ne.s32.totalorder %s602, %s603
      %p617 = scmp.eq.s32.totalorder %s61, 3
      %p618 = por %p616, %p617
      %p620 = scmp.ne.s32.totalorder %s603, %s619
      %p621 = scmp.eq.s32.totalorder %s61, 0
      %p622 = por %p620, %p621
      %s623 = ssub.s32 %s63, %s70
      %s624 = ssub.s32 %s62, %s74
      %s625 = sor.u32 %s623, %s624
      %p626 = scmp.eq.s32.totalorder %s625, 0
      %s628 = sadd.s32 %s627, 1
      %s629 = scalar_select %p626, %s627, %s628
      %p632 = pneg %p626
      %p633 = scmp.eq.s32.totalorder %s55, 3
      %p634 = por %p632, %p633
      %p635 = scmp.ne.s32.totalorder %s627, %s630
      %p636 = scmp.eq.s32.totalorder %s55, 0
      %p637 = por %p635, %p636
      %p638 = scmp.ne.s32.totalorder %s627, %s630
      %p639 = scmp.eq.s32.totalorder %s60, 3
      %p640 = por %p638, %p639
      %p641 = scmp.ne.s32.totalorder %s630, %s631
      %p642 = scmp.eq.s32.totalorder %s60, 0
      %p643 = por %p641, %p642
      %p644 = scmp.ne.s32.totalorder %s630, %s631
      %p645 = scmp.eq.s32.totalorder %s61, 3
      %p646 = por %p644, %p645
      %p648 = scmp.ne.s32.totalorder %s631, %s647
      %p649 = scmp.eq.s32.totalorder %s61, 0
      %p650 = por %p648, %p649
      %p651 = scmp.le.s32.totalorder 1, %s55
      %p652 = scmp.lt.s32.totalorder %s55, 5
      %p653 = pnand %p651, %p652
      %p654 = pneg %p653
      // Predicated region
      $region9: #{tpu_custom_call.1} parent=5 // pred_check
        _
      $region10: #{tpu_custom_call.1} parent=5 // pred_check_branch
        %656 = sbr.rel (%p653) target = $region12
      $region11: #{tpu_custom_call.1} parent=5 // pred_region
        %s657 = ssub.s32 %s55, 1
      $region12: #{tpu_custom_call.1} parent=5 // pred_fallthru
        _
      %p658 = scmp.lt.s32.totalorder %s55, 4
      // Predicated region
      $region13: #{tpu_custom_call.1} parent=5 // pred_check
        %p659 = pneg %p658
      $region14: #{tpu_custom_call.1} parent=5 // pred_check_branch
        %661 = sbr.rel (%p659) target = $region16
      $region15: #{tpu_custom_call.1} parent=5 // pred_region
        // Predicated region
        $region17: #{tpu_custom_call.1} parent=15 // pred_check
          %p662 = pneg %p87
        $region18: #{tpu_custom_call.1} parent=15 // pred_check_branch
          %664 = sbr.rel (%p662) target = $region20
        $region19: #{tpu_custom_call.1} parent=15 // pred_region
          %s665 = sand.u32 %s77, 1
          %s666 = scalar_lea.sflag [#allocation4], %s665
          %s667 = sand.u32 %s77, 1
          %s668 = smul.addr %s667, 16
          %s669 = scalar_lea.vmem [#allocation3], %s668
          %s670 = smul.u32 2, %s62
          %s672 = ssub.s32 256, 256
          %673 = vsyncadd %s666, %s672
          %s674 = smul.addr %s670, 2
          %s675 = smul.addr %s674, 64
          %s676 = scalar_lea.hbm %s0, %s675
          %s677 = sshll.u32 %s669, 4
          %s678 = int_to_ptr.vmem [resolvable:$true] %s677
          %683 = dma.hbm_to_vmem [thread:$0]  %s676, 256, %s678, %s666, 64, 64, 4
        $region20: #{tpu_custom_call.1} parent=15 // pred_fallthru
          _
        // Predicated region
        $region21: #{tpu_custom_call.1} parent=15 // pred_check
          %p684 = pneg %p113
        $region22: #{tpu_custom_call.1} parent=15 // pred_check_branch
          %686 = sbr.rel (%p684) target = $region24
        $region23: #{tpu_custom_call.1} parent=15 // pred_region
          %s687 = sand.u32 %s55, 1
          %s688 = scalar_lea.sflag [#allocation7], %s687
          %s689 = sand.u32 %s103, 1
          %s690 = smul.addr %s689, 16
          %s691 = scalar_lea.vmem [#allocation6], %s690
          %s692 = smul.u32 2, %s62
          %s694 = ssub.s32 256, 256
          %695 = vsyncadd %s688, %s694
          %s696 = smul.addr %s692, 2
          %s697 = smul.addr %s696, 64
          %s698 = scalar_lea.hbm %s1, %s697
          %s699 = sshll.u32 %s691, 4
          %s700 = int_to_ptr.vmem [resolvable:$true] %s699
          %705 = dma.hbm_to_vmem [thread:$0]  %s698, 256, %s700, %s688, 64, 64, 4
        $region24: #{tpu_custom_call.1} parent=15 // pred_fallthru
          _
        // Predicated region
        $region25: #{tpu_custom_call.1} parent=15 // pred_check
          %p706 = pneg %p139
        $region26: #{tpu_custom_call.1} parent=15 // pred_check_branch
          %708 = sbr.rel (%p706) target = $region28
        $region27: #{tpu_custom_call.1} parent=15 // pred_region
          %s709 = sand.u32 %s55, 1
          %s710 = scalar_lea.sflag [#allocation7], %s709
          %s711 = sand.u32 %s129, 1
          %s712 = smul.addr %s711, 2
          %s713 = scalar_lea.vmem [#allocation8], %s712
          %s714 = smul.u32 2, %s62
          %s716 = ssub.s32 32, 32
          %717 = vsyncadd %s710, %s716
          %s718 = smul.addr %s714, 16
          %s719 = scalar_lea.hbm %s2, %s718
          %s720 = sshll.u32 %s713, 4
          %s721 = int_to_ptr.vmem [resolvable:$true] %s720
          %726 = dma.hbm_to_vmem [thread:$0]  %s719, 32, %s721, %s710, 16, 16, 1
        $region28: #{tpu_custom_call.1} parent=15 // pred_fallthru
          _
        // Predicated region
        $region29: #{tpu_custom_call.1} parent=15 // pred_check
          %p727 = pneg %p165
        $region30: #{tpu_custom_call.1} parent=15 // pred_check_branch
          %729 = sbr.rel (%p727) target = $region32
        $region31: #{tpu_custom_call.1} parent=15 // pred_region
          %s730 = smul.u32 2, %s62
          %p731 = scmp.lt.s32.totalorder %s730, 3
          %s732 = scalar_select %p731, %s730, 3
          %s733 = scalar_lea.vmem %s3, %s732
          %s734 = smul.u32 2, %s62
        $region32: #{tpu_custom_call.1} parent=15 // pred_fallthru
          _
        // Predicated region
        $region33: #{tpu_custom_call.1} parent=15 // pred_check
          %p735 = pneg %p191
        $region34: #{tpu_custom_call.1} parent=15 // pred_check_branch
          %737 = sbr.rel (%p735) target = $region36
        $region35: #{tpu_custom_call.1} parent=15 // pred_region
          %s738 = sand.u32 %s55, 1
          %s739 = scalar_lea.sflag [#allocation10], %s738
          %s740 = sand.u32 %s181, 1
          %s741 = smul.addr %s740, 8
          %s742 = scalar_lea.vmem [#allocation9], %s741
          %s744 = ssub.s32 128, 128
          %745 = vsyncadd %s739, %s744
          %s746 = smul.addr %s63, 4
          %s747 = smul.addr %s746, 32
          %s748 = scalar_lea.hbm %s4, %s747
          %s749 = sshll.u32 %s742, 4
          %s750 = int_to_ptr.vmem [resolvable:$true] %s749
          %755 = dma.hbm_to_vmem [thread:$0]  %s748, 128, %s750, %s739, 32, 32, 2
        $region36: #{tpu_custom_call.1} parent=15 // pred_fallthru
          _
        // Predicated region
        $region37: #{tpu_custom_call.1} parent=15 // pred_check
          %p756 = pneg %p217
        $region38: #{tpu_custom_call.1} parent=15 // pred_check_branch
          %758 = sbr.rel (%p756) target = $region40
        $region39: #{tpu_custom_call.1} parent=15 // pred_region
          %s759 = sand.u32 %s55, 1
          %s760 = scalar_lea.sflag [#allocation10], %s759
          %s761 = sand.u32 %s207, 1
          %s762 = smul.addr %s761, 192
          %s763 = scalar_lea.vmem [#allocation11], %s762
          %s765 = ssub.s32 3072, 3072
          %766 = vsyncadd %s760, %s765
          %s767 = smul.addr %s63, 48
          %s768 = smul.addr %s767, 64
          %s769 = scalar_lea.hbm %s5, %s768
          %s770 = sshll.u32 %s763, 4
          %s771 = int_to_ptr.vmem [resolvable:$true] %s770
          %776 = dma.hbm_to_vmem [thread:$0]  %s769, 3072, %s771, %s760, 192, 192, 12
        $region40: #{tpu_custom_call.1} parent=15 // pred_fallthru
          _
        // Predicated region
        $region41: #{tpu_custom_call.1} parent=15 // pred_check
          %p777 = pneg %p243
        $region42: #{tpu_custom_call.1} parent=15 // pred_check_branch
          %779 = sbr.rel (%p777) target = $region44
        $region43: #{tpu_custom_call.1} parent=15 // pred_region
          %p780 = scmp.lt.s32.totalorder %s63, 1
          %s781 = scalar_select %p780, %s63, 1
          %s782 = smul.addr %s781, 3
          %s783 = scalar_lea.vmem %s6, %s782
        $region44: #{tpu_custom_call.1} parent=15 // pred_fallthru
          _
        // Predicated region
        $region45: #{tpu_custom_call.1} parent=15 // pred_check
          %p784 = pneg %p269
        $region46: #{tpu_custom_call.1} parent=15 // pred_check_branch
          %786 = sbr.rel (%p784) target = $region48
        $region47: #{tpu_custom_call.1} parent=15 // pred_region
          %s787 = sand.u32 %s55, 1
          %s788 = scalar_lea.sflag [#allocation13], %s787
          %s789 = sand.u32 %s259, 1
          %s790 = smul.addr %s789, 64
          %s791 = scalar_lea.vmem [#allocation12], %s790
          %s793 = ssub.s32 1024, 1024
          %794 = vsyncadd %s788, %s793
          %s795 = smul.addr %s63, 16
          %s796 = smul.addr %s795, 64
          %s797 = scalar_lea.hbm %s7, %s796
          %s798 = sshll.u32 %s791, 4
          %s799 = int_to_ptr.vmem [resolvable:$true] %s798
          %804 = dma.hbm_to_vmem [thread:$0]  %s797, 1024, %s799, %s788, 64, 64, 4
        $region48: #{tpu_custom_call.1} parent=15 // pred_fallthru
          _
        // Predicated region
        $region49: #{tpu_custom_call.1} parent=15 // pred_check
          %p805 = pneg %p295
        $region50: #{tpu_custom_call.1} parent=15 // pred_check_branch
          %807 = sbr.rel (%p805) target = $region52
        $region51: #{tpu_custom_call.1} parent=15 // pred_region
          %s808 = sand.u32 %s55, 1
          %s809 = scalar_lea.sflag [#allocation13], %s808
          %s810 = sand.u32 %s285, 1
          %s811 = scalar_lea.vmem [#allocation14], %s810
          %s813 = ssub.s32 16, 16
          %814 = vsyncadd %s809, %s813
          %s815 = smul.addr %s63, 16
          %s816 = scalar_lea.hbm %s8, %s815
          %s818 = sshll.u32 %s811, 4
          %s819 = int_to_ptr.vmem [resolvable:$true] %s818
          %821 = dma.hbm_to_vmem [thread:$0]  %s816, 16, %s819, %s809
        $region52: #{tpu_custom_call.1} parent=15 // pred_fallthru
          _
        // Predicated region
        $region53: #{tpu_custom_call.1} parent=15 // pred_check
          %p822 = pneg %p321
        $region54: #{tpu_custom_call.1} parent=15 // pred_check_branch
          %824 = sbr.rel (%p822) target = $region56
        $region55: #{tpu_custom_call.1} parent=15 // pred_region
          %s825 = sand.u32 %s55, 1
          %s826 = scalar_lea.sflag [#allocation16], %s825
          %s827 = sand.u32 %s311, 1
          %s828 = smul.addr %s827, 64
          %s829 = scalar_lea.vmem [#allocation15], %s828
          %s831 = ssub.s32 1024, 1024
          %832 = vsyncadd %s826, %s831
          %s833 = smul.addr %s63, 16
          %s834 = smul.addr %s833, 64
          %s835 = scalar_lea.hbm %s9, %s834
          %s836 = sshll.u32 %s829, 4
          %s837 = int_to_ptr.vmem [resolvable:$true] %s836
          %842 = dma.hbm_to_vmem [thread:$0]  %s835, 1024, %s837, %s826, 64, 64, 4
        $region56: #{tpu_custom_call.1} parent=15 // pred_fallthru
          _
        // Predicated region
        $region57: #{tpu_custom_call.1} parent=15 // pred_check
          %p843 = pneg %p347
        $region58: #{tpu_custom_call.1} parent=15 // pred_check_branch
          %845 = sbr.rel (%p843) target = $region60
        $region59: #{tpu_custom_call.1} parent=15 // pred_region
          %s846 = sand.u32 %s55, 1
          %s847 = scalar_lea.sflag [#allocation16], %s846
          %s848 = sand.u32 %s337, 1
          %s849 = scalar_lea.vmem [#allocation17], %s848
          %s851 = ssub.s32 16, 16
          %852 = vsyncadd %s847, %s851
          %s853 = smul.addr %s63, 16
          %s854 = scalar_lea.hbm %s10, %s853
          %s856 = sshll.u32 %s849, 4
          %s857 = int_to_ptr.vmem [resolvable:$true] %s856
          %859 = dma.hbm_to_vmem [thread:$0]  %s854, 16, %s857, %s847
        $region60: #{tpu_custom_call.1} parent=15 // pred_fallthru
          _
        // Predicated region
        $region61: #{tpu_custom_call.1} parent=15 // pred_check
          %p860 = pneg %p373
        $region62: #{tpu_custom_call.1} parent=15 // pred_check_branch
          %862 = sbr.rel (%p860) target = $region64
        $region63: #{tpu_custom_call.1} parent=15 // pred_region
          %s863 = sand.u32 %s55, 1
          %s864 = scalar_lea.sflag [#allocation19], %s863
          %s865 = sand.u32 %s363, 1
          %s866 = smul.addr %s865, 128
          %s867 = scalar_lea.vmem [#allocation18], %s866
          %s869 = ssub.s32 2048, 2048
          %870 = vsyncadd %s864, %s869
          %s871 = smul.addr %s63, 32
          %s872 = smul.addr %s871, 64
          %s873 = scalar_lea.hbm %s11, %s872
          %s874 = sshll.u32 %s867, 4
          %s875 = int_to_ptr.vmem [resolvable:$true] %s874
          %880 = dma.hbm_to_vmem [thread:$0]  %s873, 2048, %s875, %s864, 128, 128, 8
        $region64: #{tpu_custom_call.1} parent=15 // pred_fallthru
          _
        // Predicated region
        $region65: #{tpu_custom_call.1} parent=15 // pred_check
          %p881 = pneg %p399
        $region66: #{tpu_custom_call.1} parent=15 // pred_check_branch
          %883 = sbr.rel (%p881) target = $region68
        $region67: #{tpu_custom_call.1} parent=15 // pred_region
          %p884 = scmp.lt.s32.totalorder %s63, 1
          %s885 = scalar_select %p884, %s63, 1
          %s886 = smul.addr %s885, 2
          %s887 = scalar_lea.vmem %s12, %s886
        $region68: #{tpu_custom_call.1} parent=15 // pred_fallthru
          _
        // Predicated region
        $region69: #{tpu_custom_call.1} parent=15 // pred_check
          %p888 = pneg %p425
        $region70: #{tpu_custom_call.1} parent=15 // pred_check_branch
          %890 = sbr.rel (%p888) target = $region72
        $region71: #{tpu_custom_call.1} parent=15 // pred_region
          %s891 = sand.u32 %s55, 1
          %s892 = scalar_lea.sflag [#allocation19], %s891
          %s893 = sand.u32 %s415, 1
          %s894 = smul.addr %s893, 64
          %s895 = scalar_lea.vmem [#allocation20], %s894
          %s897 = ssub.s32 1024, 1024
          %898 = vsyncadd %s892, %s897
          %s899 = smul.addr %s63, 16
          %s900 = smul.addr %s899, 64
          %s901 = scalar_lea.hbm %s13, %s900
          %s902 = sshll.u32 %s895, 4
          %s903 = int_to_ptr.vmem [resolvable:$true] %s902
          %908 = dma.hbm_to_vmem [thread:$0]  %s901, 1024, %s903, %s892, 64, 64, 4
        $region72: #{tpu_custom_call.1} parent=15 // pred_fallthru
          _
        // Predicated region
        $region73: #{tpu_custom_call.1} parent=15 // pred_check
          %p909 = pneg %p451
        $region74: #{tpu_custom_call.1} parent=15 // pred_check_branch
          %911 = sbr.rel (%p909) target = $region76
        $region75: #{tpu_custom_call.1} parent=15 // pred_region
          %p912 = scmp.lt.s32.totalorder %s63, 1
          %s913 = scalar_select %p912, %s63, 1
          %s914 = scalar_lea.vmem %s14, %s913
        $region76: #{tpu_custom_call.1} parent=15 // pred_fallthru
          _
        // Predicated region
        $region77: #{tpu_custom_call.1} parent=15 // pred_check
          %p915 = pneg %p477
        $region78: #{tpu_custom_call.1} parent=15 // pred_check_branch
          %917 = sbr.rel (%p915) target = $region80
        $region79: #{tpu_custom_call.1} parent=15 // pred_region
          %s918 = sand.u32 %s55, 1
          %s919 = scalar_lea.sflag [#allocation22], %s918
          %s920 = sand.u32 %s467, 1
          %s921 = smul.addr %s920, 128
          %s922 = scalar_lea.vmem [#allocation21], %s921
          %s924 = ssub.s32 2048, 2048
          %925 = vsyncadd %s919, %s924
          %s926 = smul.addr %s63, 32
          %s927 = smul.addr %s926, 64
          %s928 = scalar_lea.hbm %s15, %s927
          %s929 = sshll.u32 %s922, 4
          %s930 = int_to_ptr.vmem [resolvable:$true] %s929
          %935 = dma.hbm_to_vmem [thread:$0]  %s928, 2048, %s930, %s919, 128, 128, 8
        $region80: #{tpu_custom_call.1} parent=15 // pred_fallthru
          _
        // Predicated region
        $region81: #{tpu_custom_call.1} parent=15 // pred_check
          %p936 = pneg %p503
        $region82: #{tpu_custom_call.1} parent=15 // pred_check_branch
          %938 = sbr.rel (%p936) target = $region84
        $region83: #{tpu_custom_call.1} parent=15 // pred_region
          %p939 = scmp.lt.s32.totalorder %s63, 1
          %s940 = scalar_select %p939, %s63, 1
          %s941 = smul.addr %s940, 2
          %s942 = scalar_lea.vmem %s16, %s941
        $region84: #{tpu_custom_call.1} parent=15 // pred_fallthru
          _
        // Predicated region
        $region85: #{tpu_custom_call.1} parent=15 // pred_check
          %p943 = pneg %p529
        $region86: #{tpu_custom_call.1} parent=15 // pred_check_branch
          %945 = sbr.rel (%p943) target = $region88
        $region87: #{tpu_custom_call.1} parent=15 // pred_region
          %s946 = sand.u32 %s55, 1
          %s947 = scalar_lea.sflag [#allocation22], %s946
          %s948 = sand.u32 %s519, 1
          %s949 = smul.addr %s948, 128
          %s950 = scalar_lea.vmem [#allocation23], %s949
          %s952 = ssub.s32 2048, 2048
          %953 = vsyncadd %s947, %s952
          %s954 = smul.addr %s63, 32
          %s955 = smul.addr %s954, 64
          %s956 = scalar_lea.hbm %s17, %s955
          %s957 = sshll.u32 %s950, 4
          %s958 = int_to_ptr.vmem [resolvable:$true] %s957
          %963 = dma.hbm_to_vmem [thread:$0]  %s956, 2048, %s958, %s947, 64, 64, 4
        $region88: #{tpu_custom_call.1} parent=15 // pred_fallthru
          _
        // Predicated region
        $region89: #{tpu_custom_call.1} parent=15 // pred_check
          %p964 = pneg %p555
        $region90: #{tpu_custom_call.1} parent=15 // pred_check_branch
          %966 = sbr.rel (%p964) target = $region92
        $region91: #{tpu_custom_call.1} parent=15 // pred_region
          %p967 = scmp.lt.s32.totalorder %s63, 1
          %s968 = scalar_select %p967, %s63, 1
          %s969 = scalar_lea.vmem %s18, %s968
        $region92: #{tpu_custom_call.1} parent=15 // pred_fallthru
          _
      $region16: #{tpu_custom_call.1} parent=5 // pred_fallthru
        _
      %p970 = scmp.le.s32.totalorder 1, %s55
      %p971 = scmp.lt.s32.totalorder %s55, 5
      %p972 = pnand %p970, %p971
      %p973 = pneg %p972
      // Predicated region
      $region93: #{tpu_custom_call.1} parent=5 // pred_check
        _
      $region94: #{tpu_custom_call.1} parent=5 // pred_check_branch
        %975 = sbr.rel (%p972) target = $region96
      $region95: #{tpu_custom_call.1} parent=5 // pred_region
        %s976 = ssub.s32 %s55, 1
        %s977 = sand.u32 %s80, 1
        %s978 = scalar_lea.sflag [#allocation4], %s977
        %s979 = sand.u32 %s80, 1
        %s980 = smul.addr %s979, 16
        %s981 = scalar_lea.vmem [#allocation3], %s980
        // Predicated region
        $region97: #{tpu_custom_call.1} parent=95 // pred_check
          %p982 = pneg %p93
        $region98: #{tpu_custom_call.1} parent=95 // pred_check_branch
          %984 = sbr.rel (%p982) target = $region100
        $region99: #{tpu_custom_call.1} parent=95 // pred_region
          %985 = dma.done %s978, 256
        $region100: #{tpu_custom_call.1} parent=95 // pred_fallthru
          _
        %s986 = sand.u32 %s60, 1
        %s987 = scalar_lea.sflag [#allocation7], %s986
        %s988 = sand.u32 %s106, 1
        %s989 = smul.addr %s988, 16
        %s990 = scalar_lea.vmem [#allocation6], %s989
        // Predicated region
        $region101: #{tpu_custom_call.1} parent=95 // pred_check
          %p991 = pneg %p119
        $region102: #{tpu_custom_call.1} parent=95 // pred_check_branch
          %993 = sbr.rel (%p991) target = $region104
        $region103: #{tpu_custom_call.1} parent=95 // pred_region
          %994 = dma.done %s987, 256
        $region104: #{tpu_custom_call.1} parent=95 // pred_fallthru
          _
        %s995 = sand.u32 %s60, 1
        %s996 = scalar_lea.sflag [#allocation7], %s995
        %s997 = sand.u32 %s132, 1
        %s998 = smul.addr %s997, 2
        %s999 = scalar_lea.vmem [#allocation8], %s998
        // Predicated region
        $region105: #{tpu_custom_call.1} parent=95 // pred_check
          %p1000 = pneg %p145
        $region106: #{tpu_custom_call.1} parent=95 // pred_check_branch
          %1002 = sbr.rel (%p1000) target = $region108
        $region107: #{tpu_custom_call.1} parent=95 // pred_region
          %1003 = dma.done %s996, 32
        $region108: #{tpu_custom_call.1} parent=95 // pred_fallthru
          _
        %s1004 = sand.u32 %s60, 1
        %s1005 = scalar_lea.sflag [#allocation10], %s1004
        %s1006 = sand.u32 %s184, 1
        %s1007 = smul.addr %s1006, 8
        %s1008 = scalar_lea.vmem [#allocation9], %s1007
        // Predicated region
        $region109: #{tpu_custom_call.1} parent=95 // pred_check
          %p1009 = pneg %p197
        $region110: #{tpu_custom_call.1} parent=95 // pred_check_branch
          %1011 = sbr.rel (%p1009) target = $region112
        $region111: #{tpu_custom_call.1} parent=95 // pred_region
          %1012 = dma.done %s1005, 128
        $region112: #{tpu_custom_call.1} parent=95 // pred_fallthru
          _
        %s1013 = sand.u32 %s60, 1
        %s1014 = scalar_lea.sflag [#allocation10], %s1013
        %s1015 = sand.u32 %s210, 1
        %s1016 = smul.addr %s1015, 192
        %s1017 = scalar_lea.vmem [#allocation11], %s1016
        // Predicated region
        $region113: #{tpu_custom_call.1} parent=95 // pred_check
          %p1018 = pneg %p223
        $region114: #{tpu_custom_call.1} parent=95 // pred_check_branch
          %1020 = sbr.rel (%p1018) target = $region116
        $region115: #{tpu_custom_call.1} parent=95 // pred_region
          %1021 = dma.done %s1014, 3072
        $region116: #{tpu_custom_call.1} parent=95 // pred_fallthru
          _
        %s1022 = sand.u32 %s60, 1
        %s1023 = scalar_lea.sflag [#allocation13], %s1022
        %s1024 = sand.u32 %s262, 1
        %s1025 = smul.addr %s1024, 64
        %s1026 = scalar_lea.vmem [#allocation12], %s1025
        // Predicated region
        $region117: #{tpu_custom_call.1} parent=95 // pred_check
          %p1027 = pneg %p275
        $region118: #{tpu_custom_call.1} parent=95 // pred_check_branch
          %1029 = sbr.rel (%p1027) target = $region120
        $region119: #{tpu_custom_call.1} parent=95 // pred_region
          %1030 = dma.done %s1023, 1024
        $region120: #{tpu_custom_call.1} parent=95 // pred_fallthru
          _
        %s1031 = sand.u32 %s60, 1
        %s1032 = scalar_lea.sflag [#allocation13], %s1031
        %s1033 = sand.u32 %s288, 1
        %s1034 = scalar_lea.vmem [#allocation14], %s1033
        // Predicated region
        $region121: #{tpu_custom_call.1} parent=95 // pred_check
          %p1035 = pneg %p301
        $region122: #{tpu_custom_call.1} parent=95 // pred_check_branch
          %1037 = sbr.rel (%p1035) target = $region124
        $region123: #{tpu_custom_call.1} parent=95 // pred_region
          %1038 = dma.done %s1032, 16
        $region124: #{tpu_custom_call.1} parent=95 // pred_fallthru
          _
        %s1039 = sand.u32 %s60, 1
        %s1040 = scalar_lea.sflag [#allocation16], %s1039
        %s1041 = sand.u32 %s314, 1
        %s1042 = smul.addr %s1041, 64
        %s1043 = scalar_lea.vmem [#allocation15], %s1042
        // Predicated region
        $region125: #{tpu_custom_call.1} parent=95 // pred_check
          %p1044 = pneg %p327
        $region126: #{tpu_custom_call.1} parent=95 // pred_check_branch
          %1046 = sbr.rel (%p1044) target = $region128
        $region127: #{tpu_custom_call.1} parent=95 // pred_region
          %1047 = dma.done %s1040, 1024
        $region128: #{tpu_custom_call.1} parent=95 // pred_fallthru
          _
        %s1048 = sand.u32 %s60, 1
        %s1049 = scalar_lea.sflag [#allocation16], %s1048
        %s1050 = sand.u32 %s340, 1
        %s1051 = scalar_lea.vmem [#allocation17], %s1050
        // Predicated region
        $region129: #{tpu_custom_call.1} parent=95 // pred_check
          %p1052 = pneg %p353
        $region130: #{tpu_custom_call.1} parent=95 // pred_check_branch
          %1054 = sbr.rel (%p1052) target = $region132
        $region131: #{tpu_custom_call.1} parent=95 // pred_region
          %1055 = dma.done %s1049, 16
        $region132: #{tpu_custom_call.1} parent=95 // pred_fallthru
          _
        %s1056 = sand.u32 %s60, 1
        %s1057 = scalar_lea.sflag [#allocation19], %s1056
        %s1058 = sand.u32 %s366, 1
        %s1059 = smul.addr %s1058, 128
        %s1060 = scalar_lea.vmem [#allocation18], %s1059
        // Predicated region
        $region133: #{tpu_custom_call.1} parent=95 // pred_check
          %p1061 = pneg %p379
        $region134: #{tpu_custom_call.1} parent=95 // pred_check_branch
          %1063 = sbr.rel (%p1061) target = $region136
        $region135: #{tpu_custom_call.1} parent=95 // pred_region
          %1064 = dma.done %s1057, 2048
        $region136: #{tpu_custom_call.1} parent=95 // pred_fallthru
          _
        %s1065 = sand.u32 %s60, 1
        %s1066 = scalar_lea.sflag [#allocation19], %s1065
        %s1067 = sand.u32 %s418, 1
        %s1068 = smul.addr %s1067, 64
        %s1069 = scalar_lea.vmem [#allocation20], %s1068
        // Predicated region
        $region137: #{tpu_custom_call.1} parent=95 // pred_check
          %p1070 = pneg %p431
        $region138: #{tpu_custom_call.1} parent=95 // pred_check_branch
          %1072 = sbr.rel (%p1070) target = $region140
        $region139: #{tpu_custom_call.1} parent=95 // pred_region
          %1073 = dma.done %s1066, 1024
        $region140: #{tpu_custom_call.1} parent=95 // pred_fallthru
          _
        %s1074 = sand.u32 %s60, 1
        %s1075 = scalar_lea.sflag [#allocation22], %s1074
        %s1076 = sand.u32 %s470, 1
        %s1077 = smul.addr %s1076, 128
        %s1078 = scalar_lea.vmem [#allocation21], %s1077
        // Predicated region
        $region141: #{tpu_custom_call.1} parent=95 // pred_check
          %p1079 = pneg %p483
        $region142: #{tpu_custom_call.1} parent=95 // pred_check_branch
          %1081 = sbr.rel (%p1079) target = $region144
        $region143: #{tpu_custom_call.1} parent=95 // pred_region
          %1082 = dma.done %s1075, 2048
        $region144: #{tpu_custom_call.1} parent=95 // pred_fallthru
          _
        %s1083 = sand.u32 %s60, 1
        %s1084 = scalar_lea.sflag [#allocation22], %s1083
        %s1085 = sand.u32 %s522, 1
        %s1086 = smul.addr %s1085, 128
        %s1087 = scalar_lea.vmem [#allocation23], %s1086
        // Predicated region
        $region145: #{tpu_custom_call.1} parent=95 // pred_check
          %p1088 = pneg %p535
        $region146: #{tpu_custom_call.1} parent=95 // pred_check_branch
          %1090 = sbr.rel (%p1088) target = $region148
        $region147: #{tpu_custom_call.1} parent=95 // pred_region
          %1091 = dma.done %s1084, 2048
        $region148: #{tpu_custom_call.1} parent=95 // pred_fallthru
          _
        %s1092 = sand.u32 %s80, 1
        %s1093 = scalar_lea.sflag [#allocation4], %s1092
        %s1094 = sand.u32 %s80, 1
        %s1095 = smul.addr %s1094, 16
        %s1096 = scalar_lea.vmem [#allocation3], %s1095
        %p1097 = pneg %p93
        %p1098 = pneg %p90
        %s1099 = sand.u32 %s60, 1
        %s1100 = scalar_lea.sflag [#allocation7], %s1099
        %s1101 = sand.u32 %s106, 1
        %s1102 = smul.addr %s1101, 16
        %s1103 = scalar_lea.vmem [#allocation6], %s1102
        %p1104 = pneg %p119
        %p1105 = pneg %p116
        %s1106 = sand.u32 %s60, 1
        %s1107 = scalar_lea.sflag [#allocation7], %s1106
        %s1108 = sand.u32 %s132, 1
        %s1109 = smul.addr %s1108, 2
        %s1110 = scalar_lea.vmem [#allocation8], %s1109
        %p1111 = pneg %p145
        %p1112 = pneg %p142
        %s1113 = smul.u32 2, %s64
        %p1114 = scmp.lt.s32.totalorder %s1113, 3
        %s1115 = scalar_select %p1114, %s1113, 3
        %s1116 = scalar_lea.vmem %s3, %s1115
        %p1117 = pneg %p171
        %p1118 = pneg %p168
        %s1119 = sand.u32 %s60, 1
        %s1120 = scalar_lea.sflag [#allocation10], %s1119
        %s1121 = sand.u32 %s184, 1
        %s1122 = smul.addr %s1121, 8
        %s1123 = scalar_lea.vmem [#allocation9], %s1122
        %p1124 = pneg %p197
        %p1125 = pneg %p194
        %s1126 = sand.u32 %s60, 1
        %s1127 = scalar_lea.sflag [#allocation10], %s1126
        %s1128 = sand.u32 %s210, 1
        %s1129 = smul.addr %s1128, 192
        %s1130 = scalar_lea.vmem [#allocation11], %s1129
        %p1131 = pneg %p223
        %p1132 = pneg %p220
        %p1133 = scmp.lt.s32.totalorder %s65, 1
        %s1134 = scalar_select %p1133, %s65, 1
        %s1135 = smul.addr %s1134, 3
        %s1136 = scalar_lea.vmem %s6, %s1135
        %p1137 = pneg %p249
        %p1138 = pneg %p246
        %s1139 = sand.u32 %s60, 1
        %s1140 = scalar_lea.sflag [#allocation13], %s1139
        %s1141 = sand.u32 %s262, 1
        %s1142 = smul.addr %s1141, 64
        %s1143 = scalar_lea.vmem [#allocation12], %s1142
        %p1144 = pneg %p275
        %p1145 = pneg %p272
        %s1146 = sand.u32 %s60, 1
        %s1147 = scalar_lea.sflag [#allocation13], %s1146
        %s1148 = sand.u32 %s288, 1
        %s1149 = scalar_lea.vmem [#allocation14], %s1148
        %p1150 = pneg %p301
        %p1151 = pneg %p298
        %s1152 = sand.u32 %s60, 1
        %s1153 = scalar_lea.sflag [#allocation16], %s1152
        %s1154 = sand.u32 %s314, 1
        %s1155 = smul.addr %s1154, 64
        %s1156 = scalar_lea.vmem [#allocation15], %s1155
        %p1157 = pneg %p327
        %p1158 = pneg %p324
        %s1159 = sand.u32 %s60, 1
        %s1160 = scalar_lea.sflag [#allocation16], %s1159
        %s1161 = sand.u32 %s340, 1
        %s1162 = scalar_lea.vmem [#allocation17], %s1161
        %p1163 = pneg %p353
        %p1164 = pneg %p350
        %s1165 = sand.u32 %s60, 1
        %s1166 = scalar_lea.sflag [#allocation19], %s1165
        %s1167 = sand.u32 %s366, 1
        %s1168 = smul.addr %s1167, 128
        %s1169 = scalar_lea.vmem [#allocation18], %s1168
        %p1170 = pneg %p379
        %p1171 = pneg %p376
        %p1172 = scmp.lt.s32.totalorder %s65, 1
        %s1173 = scalar_select %p1172, %s65, 1
        %s1174 = smul.addr %s1173, 2
        %s1175 = scalar_lea.vmem %s12, %s1174
        %p1176 = pneg %p405
        %p1177 = pneg %p402
        %s1178 = sand.u32 %s60, 1
        %s1179 = scalar_lea.sflag [#allocation19], %s1178
        %s1180 = sand.u32 %s418, 1
        %s1181 = smul.addr %s1180, 64
        %s1182 = scalar_lea.vmem [#allocation20], %s1181
        %p1183 = pneg %p431
        %p1184 = pneg %p428
        %p1185 = scmp.lt.s32.totalorder %s65, 1
        %s1186 = scalar_select %p1185, %s65, 1
        %s1187 = scalar_lea.vmem %s14, %s1186
        %p1188 = pneg %p457
        %p1189 = pneg %p454
        %s1190 = sand.u32 %s60, 1
        %s1191 = scalar_lea.sflag [#allocation22], %s1190
        %s1192 = sand.u32 %s470, 1
        %s1193 = smul.addr %s1192, 128
        %s1194 = scalar_lea.vmem [#allocation21], %s1193
        %p1195 = pneg %p483
        %p1196 = pneg %p480
        %p1197 = scmp.lt.s32.totalorder %s65, 1
        %s1198 = scalar_select %p1197, %s65, 1
        %s1199 = smul.addr %s1198, 2
        %s1200 = scalar_lea.vmem %s16, %s1199
        %p1201 = pneg %p509
        %p1202 = pneg %p506
        %s1203 = sand.u32 %s60, 1
        %s1204 = scalar_lea.sflag [#allocation22], %s1203
        %s1205 = sand.u32 %s522, 1
        %s1206 = smul.addr %s1205, 128
        %s1207 = scalar_lea.vmem [#allocation23], %s1206
        %p1208 = pneg %p535
        %p1209 = pneg %p532
        %p1210 = scmp.lt.s32.totalorder %s65, 1
        %s1211 = scalar_select %p1210, %s65, 1
        %s1212 = scalar_lea.vmem %s18, %s1211
        %p1213 = pneg %p561
        %p1214 = pneg %p558
        %p1215 = pneg %p587
        %p1216 = pneg %p584
        %s1217 = sand.u32 %s574, 1
        %s1218 = scalar_lea.sflag [#allocation5], %s1217
        %s1219 = sand.u32 %s574, 1
        %s1220 = smul.addr %s1219, 32
        %s1221 = scalar_lea.vmem [#allocation24], %s1220
        %p1222 = pneg %p615
        %p1223 = pneg %p612
        %s1224 = sand.u32 %s60, 1
        %s1225 = scalar_lea.sflag [#allocation26], %s1224
        %s1226 = sand.u32 %s602, 1
        %s1227 = smul.addr %s1226, 16
        %s1228 = scalar_lea.vmem [#allocation25], %s1227
        %p1229 = pneg %p643
        %p1230 = pneg %p640
        %s1231 = sand.u32 %s60, 1
        %s1232 = scalar_lea.sflag [#allocation26], %s1231
        %s1233 = sand.u32 %s630, 1
        %s1234 = smul.addr %s1233, 16
        %s1235 = scalar_lea.vmem [#allocation27], %s1234
        %s1236 = smul.u32 2, %s64
        %s1237 = smul.u32 2, %s64
        %s1238 = smul.u32 2, %s64
        %s1239 = smul.u32 2, %s64
        %p1240 = scmp.lt.s32.totalorder %s1239, 3
        %s1241 = scalar_select %p1240, %s1239, 3
        %s1242 = scalar_lea.vmem %s3, %s1241
        %s1243 = smul.u32 2, %s64
        %p1244 = scmp.lt.s32.totalorder %s65, 1
        %s1245 = scalar_select %p1244, %s65, 1
        %s1246 = smul.addr %s1245, 3
        %s1247 = scalar_lea.vmem %s6, %s1246
        %p1248 = scmp.lt.s32.totalorder %s65, 1
        %s1249 = scalar_select %p1248, %s65, 1
        %s1250 = smul.addr %s1249, 2
        %s1251 = scalar_lea.vmem %s12, %s1250
        %p1252 = scmp.lt.s32.totalorder %s65, 1
        %s1253 = scalar_select %p1252, %s65, 1
        %s1254 = scalar_lea.vmem %s14, %s1253
        %p1255 = scmp.lt.s32.totalorder %s65, 1
        %s1256 = scalar_select %p1255, %s65, 1
        %s1257 = smul.addr %s1256, 2
        %s1258 = scalar_lea.vmem %s16, %s1257
        %p1259 = scmp.lt.s32.totalorder %s65, 1
        %s1260 = scalar_select %p1259, %s65, 1
        %s1261 = scalar_lea.vmem %s18, %s1260
        %s1262 = smul.u32 2, %s64
        %s1263 = smul.u32 2, %s64
        %s1264 = smul.u32 2, %s64
        %p1266 = scmp.eq.s32.totalorder %s65, 0
        // Predicated region
        $region149: #{tpu_custom_call.1} parent=95 // pred_check
          %p1267 = pneg %p1266
        $region150: #{tpu_custom_call.1} parent=95 // pred_check_branch
          %1269 = sbr.rel (%p1267) target = $region152
        $region151: #{tpu_custom_call.1} parent=95 // pred_region
          %v1270 = vld [vmem:[%s981] sm:$0xf]
          %v1271 = vld [vmem:[%s981 + $0x4] sm:$0xf]
          %v1272 = vld [vmem:[%s981 + $0x8] sm:$0xf]
          %v1273 = vld [vmem:[%s981 + $0xc] sm:$0xf]
          %v1274 = vunpack.c.l.bf16 %v1270
          %v1275 = vunpack.c.l.bf16 %v1271
          %v1276 = vunpack.c.l.bf16 %v1272
          %v1277 = vunpack.c.l.bf16 %v1273
          %1278 = vst [vmem:[#allocation2] sm:$0xff] %v1274
          %1279 = vst [vmem:[#allocation2 + $0x8] sm:$0xff] %v1275
          %1280 = vst [vmem:[#allocation2 + $0x10] sm:$0xff] %v1276
          %1281 = vst [vmem:[#allocation2 + $0x18] sm:$0xff] %v1277
        $region152: #{tpu_custom_call.1} parent=95 // pred_fallthru
          _
        %v1282 = vld [vmem:[#allocation2] sm:$0xff]
        %v1283 = vld [vmem:[#allocation2 + $0x8] sm:$0xff]
        %v1284 = vld [vmem:[#allocation2 + $0x10] sm:$0xff]
        %v1285 = vld [vmem:[#allocation2 + $0x18] sm:$0xff]
        %v1286 = vld [vmem:[%s1008] sm:$0x3]
        %v1287 = vld [vmem:[%s1008 + $0x2] sm:$0x3]
        %v1288 = vld [vmem:[%s1008 + $0x4] sm:$0x3]
        %v1289 = vld [vmem:[%s1008 + $0x6] sm:$0x3]
        %v1290 = vld [vmem:[%s999] sm:$0x1]
        %v1291 = vld [vmem:[%s999 + $0x1] sm:$0x1]
        %v1292 = vld [vmem:[%s1242] sm:$0x1]
        %v1293 = vld [vmem:[%s1242 + $0x1] sm:$0x1]
        %v1294 = vlaneseq
        %v1295 = vshrl.u32 %v1294, 7
        %v1296 = vadd.s32 %v1295, 8
        %v1297 = vlaneseq
        %v1298 = vand.u32 %v1297, 127
        %vm1299 = vcmp.gt.s32.totalorder %v1298, %v1295
        %vm1300 = vcmp.gt.s32.totalorder %v1298, %v1296
        %v1301 = vsel %vm1299, -1e+18, 0.0
        %v1302 = vsel %vm1300, -1e+18, 0.0
        %v1303 = vmul.f32 %v1290, -1e+18
        %v1304 = vmul.f32 %v1291, -1e+18
        %v1307 = vlaneseq
        %v1308 = vshrl.u32 %v1307, 7
        %v1309 = vsub.s32 0, %v1308
        %v1310 = vrot.slane %v1303, %v1309
        %v1311 = vlaneseq
        %v1312 = vshrl.u32 %v1311, 7
        %v1313 = vsub.s32 0, %v1312
        %v1314 = vrot.slane %v1304, %v1313
        %v1317 = vadd.f32 %v1301, %v1310
        %v1318 = vadd.f32 %v1302, %v1310
        %v1319 = vadd.f32 %v1301, %v1314
        %v1320 = vadd.f32 %v1302, %v1314
        %v1321 = vmul.f32 %v1292, -1e+18
        %v1322 = vmul.f32 %v1293, -1e+18
        %1323 = vadd.xlane.f32.xlu0 %v1282
        %v1324 = vpop.xlane.xlu0 %1323
        %1325 = vadd.xlane.f32.xlu0 %v1283
        %v1326 = vpop.xlane.xlu0 %1325
        %1327 = vadd.xlane.f32.xlu0 %v1284
        %v1328 = vpop.xlane.xlu0 %1327
        %1329 = vadd.xlane.f32.xlu0 %v1285
        %v1330 = vpop.xlane.xlu0 %1329
        %v1331 = vrcp.pop 128.0
        %v1332 = vmul.f32 %v1324, %v1331
        %v1333 = vmul.f32 %v1326, %v1331
        %v1334 = vmul.f32 %v1328, %v1331
        %v1335 = vmul.f32 %v1330, %v1331
        %v1336 = vsub.f32 %v1282, %v1332
        %v1337 = vsub.f32 %v1283, %v1333
        %v1338 = vsub.f32 %v1284, %v1334
        %v1339 = vsub.f32 %v1285, %v1335
        %v1340 = vmul.f32 %v1336, %v1336
        %v1341 = vmul.f32 %v1337, %v1337
        %v1342 = vmul.f32 %v1338, %v1338
        %v1343 = vmul.f32 %v1339, %v1339
        %1344 = vadd.xlane.f32.xlu0 %v1340
        %v1345 = vpop.xlane.xlu0 %1344
        %1346 = vadd.xlane.f32.xlu0 %v1341
        %v1347 = vpop.xlane.xlu0 %1346
        %1348 = vadd.xlane.f32.xlu0 %v1342
        %v1349 = vpop.xlane.xlu0 %1348
        %1350 = vadd.xlane.f32.xlu0 %v1343
        %v1351 = vpop.xlane.xlu0 %1350
        %v1352 = vmul.f32 %v1345, %v1331
        %v1353 = vmul.f32 %v1347, %v1331
        %v1354 = vmul.f32 %v1349, %v1331
        %v1355 = vmul.f32 %v1351, %v1331
        %v1356 = vadd.f32 %v1352, 1e-06
        %v1357 = vadd.f32 %v1353, 1e-06
        %v1358 = vadd.f32 %v1354, 1e-06
        %v1359 = vadd.f32 %v1355, 1e-06
        %v1360 = vrsqrt.pop %v1356
        %v1361 = vrsqrt.pop %v1357
        %v1362 = vrsqrt.pop %v1358
        %v1363 = vrsqrt.pop %v1359
        %v1364 = vmul.f32 %v1336, %v1360
        %v1365 = vmul.f32 %v1337, %v1361
        %v1366 = vmul.f32 %v1338, %v1362
        %v1367 = vmul.f32 %v1339, %v1363
        %v1368 = vlaneseq
        %v1369 = vshrl.u32 %v1368, 7
        %v1370 = vsub.s32 0, %v1369
        %v1371 = vrot.slane %v1286, %v1370
        %v1372 = vmul.f32 %v1364, %v1371
        %v1373 = vmul.f32 %v1365, %v1371
        %v1374 = vmul.f32 %v1366, %v1371
        %v1375 = vmul.f32 %v1367, %v1371
        %v1376 = vlaneseq
        %v1377 = vshrl.u32 %v1376, 7
        %v1378 = vsub.s32 1, %v1377
        %v1379 = vrot.slane %v1286, %v1378
        %v1380 = vadd.f32 %v1372, %v1379
        %v1381 = vadd.f32 %v1373, %v1379
        %v1382 = vadd.f32 %v1374, %v1379
        %v1383 = vadd.f32 %v1375, %v1379
        %v1384 = vpack.c.bf16 %v1381, %v1380
        %v1385 = vpack.c.bf16 %v1383, %v1382
        %v1388 = vunpack.c.l.b16 %v1384
        %v1389 = vunpack.c.h.b16 %v1384
        %v1390 = vunpack.c.l.b16 %v1385
        %v1391 = vunpack.c.h.b16 %v1385
        %v1392 = vpack.c.b16 %v1388, %v1388
        %v1393 = vpack.c.b16 %v1389, %v1389
        %v1394 = vpack.c.b16 %v1390, %v1390
        %v1395 = vpack.c.b16 %v1391, %v1391
        %1400 = vst [vmem:[%s1235] sm:$0xf] %v1392
        %1401 = vst [vmem:[%s1235 + $0x4] sm:$0xf] %v1393
        %1402 = vst [vmem:[%s1235 + $0x8] sm:$0xf] %v1394
        %1403 = vst [vmem:[%s1235 + $0xc] sm:$0xf] %v1395
        %v1404 = vld [vmem:[%s1017] sm:$0xff]
        %v1405 = vld [vmem:[%s1017 + $0x8] sm:$0xf]
        %v1406 = vld [vmem:[%s1017 + $0xc] sm:$0xff]
        %v1407 = vld [vmem:[%s1017 + $0x14] sm:$0xf]
        %v1408 = vld [vmem:[%s1017 + $0x18] sm:$0xff]
        %v1409 = vld [vmem:[%s1017 + $0x20] sm:$0xf]
        %v1410 = vld [vmem:[%s1017 + $0x24] sm:$0xff]
        %v1411 = vld [vmem:[%s1017 + $0x2c] sm:$0xf]
        %v1412 = vld [vmem:[%s1017 + $0x30] sm:$0xff]
        %v1413 = vld [vmem:[%s1017 + $0x38] sm:$0xf]
        %v1414 = vld [vmem:[%s1017 + $0x3c] sm:$0xff]
        %v1415 = vld [vmem:[%s1017 + $0x44] sm:$0xf]
        %v1416 = vld [vmem:[%s1017 + $0x48] sm:$0xff]
        %v1417 = vld [vmem:[%s1017 + $0x50] sm:$0xf]
        %v1418 = vld [vmem:[%s1017 + $0x54] sm:$0xff]
        %v1419 = vld [vmem:[%s1017 + $0x5c] sm:$0xf]
        %v1420 = vld [vmem:[%s1017 + $0x60] sm:$0xff]
        %v1421 = vld [vmem:[%s1017 + $0x68] sm:$0xf]
        %v1422 = vld [vmem:[%s1017 + $0x6c] sm:$0xff]
        %v1423 = vld [vmem:[%s1017 + $0x74] sm:$0xf]
        %v1424 = vld [vmem:[%s1017 + $0x78] sm:$0xff]
        %v1425 = vld [vmem:[%s1017 + $0x80] sm:$0xf]
        %v1426 = vld [vmem:[%s1017 + $0x84] sm:$0xff]
        %v1427 = vld [vmem:[%s1017 + $0x8c] sm:$0xf]
        %v1428 = vld [vmem:[%s1017 + $0x90] sm:$0xff]
        %v1429 = vld [vmem:[%s1017 + $0x98] sm:$0xf]
        %v1430 = vld [vmem:[%s1017 + $0x9c] sm:$0xff]
        %v1431 = vld [vmem:[%s1017 + $0xa4] sm:$0xf]
        %v1432 = vld [vmem:[%s1017 + $0xa8] sm:$0xff]
        %v1433 = vld [vmem:[%s1017 + $0xb0] sm:$0xf]
        %v1434 = vld [vmem:[%s1017 + $0xb4] sm:$0xff]
        %v1435 = vld [vmem:[%s1017 + $0xbc] sm:$0xf]
        %v1436 = vld [vmem:[%s1247] sm:$0x7]
        %v1438 = vlaneseq
        %v1439 = vshrl.u32 %v1438, 7
        %v1440 = vsub.s32 0, %v1439
        %v1441 = vrot.slane %v1436, %v1440
        %v1442 = vlaneseq
        %v1443 = vshrl.u32 %v1442, 7
        %v1444 = vsub.s32 1, %v1443
        %v1445 = vrot.slane %v1436, %v1444
        %v1446 = vlaneseq
        %v1447 = vshrl.u32 %v1446, 7
        %v1448 = vsub.s32 2, %v1447
        %v1449 = vrot.slane %v1436, %v1448
        %v1485 = vunpack.c.l.b16 %v1404
        %v1486 = vunpack.c.h.b16 %v1404
        %v1487 = vunpack.c.l.b16 %v1405
        %v1488 = vunpack.c.l.b16 %v1406
        %v1489 = vunpack.c.h.b16 %v1406
        %v1490 = vunpack.c.l.b16 %v1407
        %v1491 = vunpack.c.l.b16 %v1408
        %v1492 = vunpack.c.h.b16 %v1408
        %v1493 = vunpack.c.l.b16 %v1409
        %v1494 = vunpack.c.l.b16 %v1410
        %v1495 = vunpack.c.h.b16 %v1410
        %v1496 = vunpack.c.l.b16 %v1411
        %v1497 = vunpack.c.l.b16 %v1412
        %v1498 = vunpack.c.h.b16 %v1412
        %v1499 = vunpack.c.l.b16 %v1413
        %v1500 = vunpack.c.l.b16 %v1414
        %v1501 = vunpack.c.h.b16 %v1414
        %v1502 = vunpack.c.l.b16 %v1415
        %v1503 = vunpack.c.l.b16 %v1416
        %v1504 = vunpack.c.h.b16 %v1416
        %v1505 = vunpack.c.l.b16 %v1417
        %v1506 = vunpack.c.l.b16 %v1418
        %v1507 = vunpack.c.h.b16 %v1418
        %v1508 = vunpack.c.l.b16 %v1419
        %v1509 = vunpack.c.l.b16 %v1420
        %v1510 = vunpack.c.h.b16 %v1420
        %v1511 = vunpack.c.l.b16 %v1421
        %v1512 = vunpack.c.l.b16 %v1422
        %v1513 = vunpack.c.h.b16 %v1422
        %v1514 = vunpack.c.l.b16 %v1423
        %v1515 = vunpack.c.l.b16 %v1424
        %v1516 = vunpack.c.h.b16 %v1424
        %v1517 = vunpack.c.l.b16 %v1425
        %v1518 = vunpack.c.l.b16 %v1426
        %v1519 = vunpack.c.h.b16 %v1426
        %v1520 = vunpack.c.l.b16 %v1427
        %v1521 = vunpack.c.l.b16 %v1428
        %v1522 = vunpack.c.h.b16 %v1428
        %v1523 = vunpack.c.l.b16 %v1429
        %v1524 = vunpack.c.l.b16 %v1430
        %v1525 = vunpack.c.h.b16 %v1430
        %v1526 = vunpack.c.l.b16 %v1431
        %v1527 = vunpack.c.l.b16 %v1432
        %v1528 = vunpack.c.h.b16 %v1432
        %v1529 = vunpack.c.l.b16 %v1433
        %v1530 = vunpack.c.l.b16 %v1434
        %v1531 = vunpack.c.h.b16 %v1434
        %v1532 = vunpack.c.l.b16 %v1435
        %v1533 = vpack.c.b16 %v1488, %v1485
        %v1534 = vpack.c.b16 %v1489, %v1486
        %v1535 = vpack.c.b16 %v1490, %v1487
        %v1536 = vpack.c.b16 %v1494, %v1491
        %v1537 = vpack.c.b16 %v1495, %v1492
        %v1538 = vpack.c.b16 %v1496, %v1493
        %v1539 = vpack.c.b16 %v1500, %v1497
        %v1540 = vpack.c.b16 %v1501, %v1498
        %v1541 = vpack.c.b16 %v1502, %v1499
        %v1542 = vpack.c.b16 %v1506, %v1503
        %v1543 = vpack.c.b16 %v1507, %v1504
        %v1544 = vpack.c.b16 %v1508, %v1505
        %v1545 = vpack.c.b16 %v1512, %v1509
        %v1546 = vpack.c.b16 %v1513, %v1510
        %v1547 = vpack.c.b16 %v1514, %v1511
        %v1548 = vpack.c.b16 %v1518, %v1515
        %v1549 = vpack.c.b16 %v1519, %v1516
        %v1550 = vpack.c.b16 %v1520, %v1517
        %v1551 = vpack.c.b16 %v1524, %v1521
        %v1552 = vpack.c.b16 %v1525, %v1522
        %v1553 = vpack.c.b16 %v1526, %v1523
        %v1554 = vpack.c.b16 %v1530, %v1527
        %v1555 = vpack.c.b16 %v1531, %v1528
        %v1556 = vpack.c.b16 %v1532, %v1529
        %1581 = vmatprep.subr.bf16.mxu0 %v1555
        %1582 = vmatpush1.bf16.msra.mxu0 %v1554
        %1583 = vmatprep.subr.bf16.mxu0 %v1552
        %1584 = vmatpush1.bf16.msra.mxu0 %v1551
        %1585 = vmatprep.subr.bf16.mxu0 %v1549
        %1586 = vmatpush1.bf16.msra.mxu0 %v1548
        %1587 = vmatprep.subr.bf16.mxu0 %v1546
        %1588 = vmatpush1.bf16.msra.mxu0 %v1545
        %1589 = vmatprep.subr.bf16.mxu0 %v1543
        %1590 = vmatpush1.bf16.msra.mxu0 %v1542
        %1591 = vmatprep.subr.bf16.mxu0 %v1540
        %1592 = vmatpush1.bf16.msra.mxu0 %v1539
        %1593 = vmatprep.subr.bf16.mxu0 %v1537
        %1594 = vmatpush1.bf16.msra.mxu0 %v1536
        %1595 = vmatprep.subr.bf16.mxu0 %v1534
        %1596 = vmatpush1.bf16.msra.mxu0 %v1533
        %1597 = vmatprep.subr.bf16.mxu0 0
        %1598 = vmatpush2.bf16.msra.mxu0 0
        %1599 = vmatprep.subr.bf16.mxu0 0
        %1600 = vmatpush2.bf16.msra.mxu0 0
        %1601 = vmatprep.subr.bf16.mxu0 0
        %1602 = vmatpush2.bf16.msra.mxu0 0
        %1603 = vmatprep.subr.bf16.mxu0 0
        %1604 = vmatpush2.bf16.msra.mxu0 0
        %1605 = vmatprep.subr.bf16.mxu0 0
        %1606 = vmatpush2.bf16.msra.mxu0 0
        %1607 = vmatprep.subr.bf16.mxu0 0
        %1608 = vmatpush2.bf16.msra.mxu0 0
        %1609 = vmatprep.subr.bf16.mxu0 0
        %1610 = vmatpush2.bf16.msra.mxu0 0
        %1611 = vmatprep.subr.bf16.mxu0 0
        %1612 = vmatpush2.bf16.msra.mxu0 0
        %1613 = vmatprep.mubr.bf16.mxu0 0
        %1614 = vmatmul.mubr.bf16.gmra.mxu0 %v1384
        %v1615 = vpop.f32.mrf.mxu0
        %v1616 = vadd.f32 %v1441, %v1615
        %v1617 = vpop.f32.mrf.mxu0
        %v1618 = vadd.f32 %v1445, %v1617
        %v1619 = vpop.f32.mrf.mxu0
        %v1620 = vadd.f32 %v1441, %v1619
        %v1621 = vpop.f32.mrf.mxu0
        %v1622 = vadd.f32 %v1445, %v1621
        %1623 = vmatprep.mubr.bf16.mxu0 0
        %1624 = vmatmul.mubr.bf16.gmra.mxu0 %v1385
        %v1625 = vpop.f32.mrf.mxu0
        %v1626 = vadd.f32 %v1441, %v1625
        %v1627 = vpop.f32.mrf.mxu0
        %v1628 = vadd.f32 %v1445, %v1627
        %v1629 = vpop.f32.mrf.mxu0
        %v1630 = vadd.f32 %v1441, %v1629
        %v1631 = vpop.f32.mrf.mxu0
        %v1632 = vadd.f32 %v1445, %v1631
        %1633 = vdwg.mxu0
        %1634 = vmatprep.subr.bf16.mxu0 0
        %1635 = vmatpush1.bf16.msra.mxu0 %v1556
        %1636 = vmatprep.subr.bf16.mxu0 0
        %1637 = vmatpush1.bf16.msra.mxu0 %v1553
        %1638 = vmatprep.subr.bf16.mxu0 0
        %1639 = vmatpush1.bf16.msra.mxu0 %v1550
        %1640 = vmatprep.subr.bf16.mxu0 0
        %1641 = vmatpush1.bf16.msra.mxu0 %v1547
        %1642 = vmatprep.subr.bf16.mxu0 0
        %1643 = vmatpush1.bf16.msra.mxu0 %v1544
        %1644 = vmatprep.subr.bf16.mxu0 0
        %1645 = vmatpush1.bf16.msra.mxu0 %v1541
        %1646 = vmatprep.subr.bf16.mxu0 0
        %1647 = vmatpush1.bf16.msra.mxu0 %v1538
        %1648 = vmatprep.subr.bf16.mxu0 0
        %1649 = vmatpush1.bf16.msra.mxu0 %v1535
        %1650 = vmatprep.subr.bf16.mxu0 0
        %1651 = vmatpush2.bf16.msra.mxu0 0
        %1652 = vmatprep.subr.bf16.mxu0 0
        %1653 = vmatpush2.bf16.msra.mxu0 0
        %1654 = vmatprep.subr.bf16.mxu0 0
        %1655 = vmatpush2.bf16.msra.mxu0 0
        %1656 = vmatprep.subr.bf16.mxu0 0
        %1657 = vmatpush2.bf16.msra.mxu0 0
        %1658 = vmatprep.subr.bf16.mxu0 0
        %1659 = vmatpush2.bf16.msra.mxu0 0
        %1660 = vmatprep.subr.bf16.mxu0 0
        %1661 = vmatpush2.bf16.msra.mxu0 0
        %1662 = vmatprep.subr.bf16.mxu0 0
        %1663 = vmatpush2.bf16.msra.mxu0 0
        %1664 = vmatprep.subr.bf16.mxu0 0
        %1665 = vmatpush2.bf16.msra.mxu0 0
        %1666 = vmatprep.mubr.bf16.mxu0 0
        %1667 = vmatmul.mubr.bf16.gmra.mxu0 %v1384
        %v1668 = vpop.f32.mrf.mxu0
        %v1669 = vadd.f32 %v1449, %v1668
        %v1670 = vpop.f32.mrf.mxu0
        %v1671 = vpop.f32.mrf.mxu0
        %v1672 = vadd.f32 %v1449, %v1671
        %v1673 = vpop.f32.mrf.mxu0
        %1674 = vmatprep.mubr.bf16.mxu0 0
        %1675 = vmatmul.mubr.bf16.gmra.mxu0 %v1385
        %v1676 = vpop.f32.mrf.mxu0
        %v1677 = vadd.f32 %v1449, %v1676
        %v1678 = vpop.f32.mrf.mxu0
        %v1679 = vpop.f32.mrf.mxu0
        %v1680 = vadd.f32 %v1449, %v1679
        %v1681 = vpop.f32.mrf.mxu0
        %1682 = vdwg.mxu0
        %v1683 = vpack.c.bf16 %v1620, %v1616
        %1685 = vrot.lane.b32.xlu0 %v1683, 96
        %v1686 = vpop.permute.xlu0 %1685
        %1687 = vrot.lane.b32.xlu0 %v1683, 64
        %v1688 = vpop.permute.xlu0 %1687
        %1689 = vrot.lane.b32.xlu0 %v1683, 32
        %v1690 = vpop.permute.xlu0 %1689
        %v1691 = vpack.c.bf16 %v1622, %v1618
        %1693 = vrot.lane.b32.xlu0 %v1691, 96
        %v1694 = vpop.permute.xlu0 %1693
        %1695 = vrot.lane.b32.xlu0 %v1691, 64
        %v1696 = vpop.permute.xlu0 %1695
        %1697 = vrot.lane.b32.xlu0 %v1691, 32
        %v1698 = vpop.permute.xlu0 %1697
        %v1699 = vpack.c.bf16 %v1672, %v1669
        %1701 = vrot.lane.b32.xlu0 %v1699, 96
        %v1702 = vpop.permute.xlu0 %1701
        %1704 = vrot.lane.b32.xlu0 %v1699, 64
        %v1705 = vpop.permute.xlu0 %1704
        %1707 = vrot.lane.b32.xlu0 %v1699, 32
        %v1708 = vpop.permute.xlu0 %1707
        %vm1710 = vcmask 261120
        %v1712 = vsel %vm1710, %v1683, 0
        %v1715 = vsel %vm1710, %v1691, 0
        %1717 = vmatprep.subr.bf16.mxu0 0
        %1718 = vmatpush1.bf16.xpose.msra.mxu0 0
        %1719 = vmatprep.subr.bf16.mxu0 0
        %1720 = vmatpush1.bf16.xpose.msra.mxu0 0
        %1721 = vmatprep.subr.bf16.mxu0 0
        %1722 = vmatpush1.bf16.xpose.msra.mxu0 0
        %1723 = vmatprep.subr.bf16.mxu0 0
        %1724 = vmatpush1.bf16.xpose.msra.mxu0 0
        %1725 = vmatprep.subr.bf16.mxu0 0
        %1726 = vmatpush1.bf16.xpose.msra.mxu0 0
        %1727 = vmatprep.subr.bf16.mxu0 0
        %1728 = vmatpush1.bf16.xpose.msra.mxu0 0
        %1729 = vmatprep.subr.bf16.mxu0 0
        %1730 = vmatpush1.bf16.xpose.msra.mxu0 0
        %1731 = vmatprep.subr.bf16.mxu0 0
        %1732 = vmatpush1.bf16.xpose.msra.mxu0 %v1715
        %1733 = vmatprep.subr.bf16.mxu0 0
        %1734 = vmatpush2.bf16.xpose.msra.mxu0 0
        %1735 = vmatprep.subr.bf16.mxu0 0
        %1736 = vmatpush2.bf16.xpose.msra.mxu0 0
        %1737 = vmatprep.subr.bf16.mxu0 0
        %1738 = vmatpush2.bf16.xpose.msra.mxu0 0
        %1739 = vmatprep.subr.bf16.mxu0 0
        %1740 = vmatpush2.bf16.xpose.msra.mxu0 0
        %1741 = vmatprep.subr.bf16.mxu0 0
        %1742 = vmatpush2.bf16.xpose.msra.mxu0 0
        %1743 = vmatprep.subr.bf16.mxu0 0
        %1744 = vmatpush2.bf16.xpose.msra.mxu0 0
        %1745 = vmatprep.subr.bf16.mxu0 0
        %1746 = vmatpush2.bf16.xpose.msra.mxu0 0
        %1747 = vmatprep.subr.bf16.mxu0 0
        %1748 = vmatpush2.bf16.xpose.msra.mxu0 0
        %1749 = vmatprep.mubr.bf16.mxu0 0
        %1750 = vmatmul.mubr.bf16.gmra.mxu0 %v1712
        %v1751 = vpop.f32.mrf.mxu0
        %v1752 = vadd.f32 0.0, %v1751
        %v1753 = vpop.f32.mrf.mxu0
        %v1754 = vpop.f32.mrf.mxu0
        %v1755 = vadd.f32 0.0, %v1754
        %v1756 = vpop.f32.mrf.mxu0
        %1757 = vdwg.mxu0
        %v1759 = vsel %vm1710, %v1686, 0
        %v1762 = vsel %vm1710, %v1694, 0
        %1764 = vmatprep.subr.bf16.mxu0 0
        %1765 = vmatpush1.bf16.xpose.msra.mxu0 0
        %1766 = vmatprep.subr.bf16.mxu0 0
        %1767 = vmatpush1.bf16.xpose.msra.mxu0 0
        %1768 = vmatprep.subr.bf16.mxu0 0
        %1769 = vmatpush1.bf16.xpose.msra.mxu0 0
        %1770 = vmatprep.subr.bf16.mxu0 0
        %1771 = vmatpush1.bf16.xpose.msra.mxu0 0
        %1772 = vmatprep.subr.bf16.mxu0 0
        %1773 = vmatpush1.bf16.xpose.msra.mxu0 0
        %1774 = vmatprep.subr.bf16.mxu0 0
        %1775 = vmatpush1.bf16.xpose.msra.mxu0 0
        %1776 = vmatprep.subr.bf16.mxu0 0
        %1777 = vmatpush1.bf16.xpose.msra.mxu0 0
        %1778 = vmatprep.subr.bf16.mxu0 0
        %1779 = vmatpush1.bf16.xpose.msra.mxu0 %v1762
        %1780 = vmatprep.subr.bf16.mxu0 0
        %1781 = vmatpush2.bf16.xpose.msra.mxu0 0
        %1782 = vmatprep.subr.bf16.mxu0 0
        %1783 = vmatpush2.bf16.xpose.msra.mxu0 0
        %1784 = vmatprep.subr.bf16.mxu0 0
        %1785 = vmatpush2.bf16.xpose.msra.mxu0 0
        %1786 = vmatprep.subr.bf16.mxu0 0
        %1787 = vmatpush2.bf16.xpose.msra.mxu0 0
        %1788 = vmatprep.subr.bf16.mxu0 0
        %1789 = vmatpush2.bf16.xpose.msra.mxu0 0
        %1790 = vmatprep.subr.bf16.mxu0 0
        %1791 = vmatpush2.bf16.xpose.msra.mxu0 0
        %1792 = vmatprep.subr.bf16.mxu0 0
        %1793 = vmatpush2.bf16.xpose.msra.mxu0 0
        %1794 = vmatprep.subr.bf16.mxu0 0
        %1795 = vmatpush2.bf16.xpose.msra.mxu0 0
        %1796 = vmatprep.mubr.bf16.mxu0 0
        %1797 = vmatmul.mubr.bf16.gmra.mxu0 %v1759
        %v1798 = vpop.f32.mrf.mxu0
        %v1799 = vadd.f32 0.0, %v1798
        %v1800 = vpop.f32.mrf.mxu0
        %v1801 = vpop.f32.mrf.mxu0
        %v1802 = vadd.f32 0.0, %v1801
        %v1803 = vpop.f32.mrf.mxu0
        %1804 = vdwg.mxu0
        %v1806 = vsel %vm1710, %v1688, 0
        %v1809 = vsel %vm1710, %v1696, 0
        %1811 = vmatprep.subr.bf16.mxu0 0
        %1812 = vmatpush1.bf16.xpose.msra.mxu0 0
        %1813 = vmatprep.subr.bf16.mxu0 0
        %1814 = vmatpush1.bf16.xpose.msra.mxu0 0
        %1815 = vmatprep.subr.bf16.mxu0 0
        %1816 = vmatpush1.bf16.xpose.msra.mxu0 0
        %1817 = vmatprep.subr.bf16.mxu0 0
        %1818 = vmatpush1.bf16.xpose.msra.mxu0 0
        %1819 = vmatprep.subr.bf16.mxu0 0
        %1820 = vmatpush1.bf16.xpose.msra.mxu0 0
        %1821 = vmatprep.subr.bf16.mxu0 0
        %1822 = vmatpush1.bf16.xpose.msra.mxu0 0
        %1823 = vmatprep.subr.bf16.mxu0 0
        %1824 = vmatpush1.bf16.xpose.msra.mxu0 0
        %1825 = vmatprep.subr.bf16.mxu0 0
        %1826 = vmatpush1.bf16.xpose.msra.mxu0 %v1809
        %1827 = vmatprep.subr.bf16.mxu0 0
        %1828 = vmatpush2.bf16.xpose.msra.mxu0 0
        %1829 = vmatprep.subr.bf16.mxu0 0
        %1830 = vmatpush2.bf16.xpose.msra.mxu0 0
        %1831 = vmatprep.subr.bf16.mxu0 0
        %1832 = vmatpush2.bf16.xpose.msra.mxu0 0
        %1833 = vmatprep.subr.bf16.mxu0 0
        %1834 = vmatpush2.bf16.xpose.msra.mxu0 0
        %1835 = vmatprep.subr.bf16.mxu0 0
        %1836 = vmatpush2.bf16.xpose.msra.mxu0 0
        %1837 = vmatprep.subr.bf16.mxu0 0
        %1838 = vmatpush2.bf16.xpose.msra.mxu0 0
        %1839 = vmatprep.subr.bf16.mxu0 0
        %1840 = vmatpush2.bf16.xpose.msra.mxu0 0
        %1841 = vmatprep.subr.bf16.mxu0 0
        %1842 = vmatpush2.bf16.xpose.msra.mxu0 0
        %1843 = vmatprep.mubr.bf16.mxu0 0
        %1844 = vmatmul.mubr.bf16.gmra.mxu0 %v1806
        %v1845 = vpop.f32.mrf.mxu0
        %v1846 = vadd.f32 0.0, %v1845
        %v1847 = vpop.f32.mrf.mxu0
        %v1848 = vpop.f32.mrf.mxu0
        %v1849 = vadd.f32 0.0, %v1848
        %v1850 = vpop.f32.mrf.mxu0
        %1851 = vdwg.mxu0
        %v1853 = vsel %vm1710, %v1690, 0
        %v1856 = vsel %vm1710, %v1698, 0
        %1858 = vmatprep.subr.bf16.mxu0 0
        %1859 = vmatpush1.bf16.xpose.msra.mxu0 0
        %1860 = vmatprep.subr.bf16.mxu0 0
        %1861 = vmatpush1.bf16.xpose.msra.mxu0 0
        %1862 = vmatprep.subr.bf16.mxu0 0
        %1863 = vmatpush1.bf16.xpose.msra.mxu0 0
        %1864 = vmatprep.subr.bf16.mxu0 0
        %1865 = vmatpush1.bf16.xpose.msra.mxu0 0
        %1866 = vmatprep.subr.bf16.mxu0 0
        %1867 = vmatpush1.bf16.xpose.msra.mxu0 0
        %1868 = vmatprep.subr.bf16.mxu0 0
        %1869 = vmatpush1.bf16.xpose.msra.mxu0 0
        %1870 = vmatprep.subr.bf16.mxu0 0
        %1871 = vmatpush1.bf16.xpose.msra.mxu0 0
        %1872 = vmatprep.subr.bf16.mxu0 0
        %1873 = vmatpush1.bf16.xpose.msra.mxu0 %v1856
        %1874 = vmatprep.subr.bf16.mxu0 0
        %1875 = vmatpush2.bf16.xpose.msra.mxu0 0
        %1876 = vmatprep.subr.bf16.mxu0 0
        %1877 = vmatpush2.bf16.xpose.msra.mxu0 0
        %1878 = vmatprep.subr.bf16.mxu0 0
        %1879 = vmatpush2.bf16.xpose.msra.mxu0 0
        %1880 = vmatprep.subr.bf16.mxu0 0
        %1881 = vmatpush2.bf16.xpose.msra.mxu0 0
        %1882 = vmatprep.subr.bf16.mxu0 0
        %1883 = vmatpush2.bf16.xpose.msra.mxu0 0
        %1884 = vmatprep.subr.bf16.mxu0 0
        %1885 = vmatpush2.bf16.xpose.msra.mxu0 0
        %1886 = vmatprep.subr.bf16.mxu0 0
        %1887 = vmatpush2.bf16.xpose.msra.mxu0 0
        %1888 = vmatprep.subr.bf16.mxu0 0
        %1889 = vmatpush2.bf16.xpose.msra.mxu0 0
        %1890 = vmatprep.mubr.bf16.mxu0 0
        %1891 = vmatmul.mubr.bf16.gmra.mxu0 %v1853
        %v1892 = vpop.f32.mrf.mxu0
        %v1893 = vadd.f32 0.0, %v1892
        %v1894 = vpop.f32.mrf.mxu0
        %v1895 = vpop.f32.mrf.mxu0
        %v1896 = vadd.f32 0.0, %v1895
        %v1897 = vpop.f32.mrf.mxu0
        %1898 = vdwg.mxu0
        %v1899 = vmul.f32 %v1752, 0.17677669
        %v1900 = vmul.f32 %v1755, 0.17677669
        %v1901 = vmul.f32 %v1799, 0.17677669
        %v1902 = vmul.f32 %v1802, 0.17677669
        %v1903 = vmul.f32 %v1846, 0.17677669
        %v1904 = vmul.f32 %v1849, 0.17677669
        %v1905 = vmul.f32 %v1893, 0.17677669
        %v1906 = vmul.f32 %v1896, 0.17677669
        %v1907 = vadd.f32 %v1899, %v1317
        %v1908 = vadd.f32 %v1900, %v1318
        %v1909 = vadd.f32 %v1901, %v1317
        %v1910 = vadd.f32 %v1902, %v1318
        %v1911 = vadd.f32 %v1903, %v1317
        %v1912 = vadd.f32 %v1904, %v1318
        %v1913 = vadd.f32 %v1905, %v1317
        %v1914 = vadd.f32 %v1906, %v1318
        %vm1915 = vcmask 130048
        %v1916 = vsel %vm1915, %v1907, -inf
        %1917 = vmax.xlane.f32.xlu0 %v1916
        %v1918 = vpop.xlane.xlu0 %1917
        %v1919 = vsel %vm1915, %v1908, -inf
        %1920 = vmax.xlane.f32.xlu0 %v1919
        %v1921 = vpop.xlane.xlu0 %1920
        %v1922 = vsel %vm1915, %v1909, -inf
        %1923 = vmax.xlane.f32.xlu0 %v1922
        %v1924 = vpop.xlane.xlu0 %1923
        %v1925 = vsel %vm1915, %v1910, -inf
        %1926 = vmax.xlane.f32.xlu0 %v1925
        %v1927 = vpop.xlane.xlu0 %1926
        %v1928 = vsel %vm1915, %v1911, -inf
        %1929 = vmax.xlane.f32.xlu0 %v1928
        %v1930 = vpop.xlane.xlu0 %1929
        %v1931 = vsel %vm1915, %v1912, -inf
        %1932 = vmax.xlane.f32.xlu0 %v1931
        %v1933 = vpop.xlane.xlu0 %1932
        %v1934 = vsel %vm1915, %v1913, -inf
        %1935 = vmax.xlane.f32.xlu0 %v1934
        %v1936 = vpop.xlane.xlu0 %1935
        %v1937 = vsel %vm1915, %v1914, -inf
        %1938 = vmax.xlane.f32.xlu0 %v1937
        %v1939 = vpop.xlane.xlu0 %1938
        %v1940 = vsub.f32 %v1907, %v1918
        %v1941 = vsub.f32 %v1908, %v1921
        %v1942 = vsub.f32 %v1909, %v1924
        %v1943 = vsub.f32 %v1910, %v1927
        %v1944 = vsub.f32 %v1911, %v1930
        %v1945 = vsub.f32 %v1912, %v1933
        %v1946 = vsub.f32 %v1913, %v1936
        %v1947 = vsub.f32 %v1914, %v1939
        %v1948 = vmul.f32 %v1940, 1.442695
        %v1949 = vpow.pop %v1948
        %v1950 = vmul.f32 %v1941, 1.442695
        %v1951 = vpow.pop %v1950
        %v1952 = vmul.f32 %v1942, 1.442695
        %v1953 = vpow.pop %v1952
        %v1954 = vmul.f32 %v1943, 1.442695
        %v1955 = vpow.pop %v1954
        %v1956 = vmul.f32 %v1944, 1.442695
        %v1957 = vpow.pop %v1956
        %v1958 = vmul.f32 %v1945, 1.442695
        %v1959 = vpow.pop %v1958
        %v1960 = vmul.f32 %v1946, 1.442695
        %v1961 = vpow.pop %v1960
        %v1962 = vmul.f32 %v1947, 1.442695
        %v1963 = vpow.pop %v1962
        %v1964 = vsel %vm1915, %v1949, 0.0
        %1965 = vadd.xlane.f32.xlu0 %v1964
        %v1966 = vpop.xlane.xlu0 %1965
        %v1967 = vsel %vm1915, %v1951, 0.0
        %1968 = vadd.xlane.f32.xlu0 %v1967
        %v1969 = vpop.xlane.xlu0 %1968
        %v1970 = vsel %vm1915, %v1953, 0.0
        %1971 = vadd.xlane.f32.xlu0 %v1970
        %v1972 = vpop.xlane.xlu0 %1971
        %v1973 = vsel %vm1915, %v1955, 0.0
        %1974 = vadd.xlane.f32.xlu0 %v1973
        %v1975 = vpop.xlane.xlu0 %1974
        %v1976 = vsel %vm1915, %v1957, 0.0
        %1977 = vadd.xlane.f32.xlu0 %v1976
        %v1978 = vpop.xlane.xlu0 %1977
        %v1979 = vsel %vm1915, %v1959, 0.0
        %1980 = vadd.xlane.f32.xlu0 %v1979
        %v1981 = vpop.xlane.xlu0 %1980
        %v1982 = vsel %vm1915, %v1961, 0.0
        %1983 = vadd.xlane.f32.xlu0 %v1982
        %v1984 = vpop.xlane.xlu0 %1983
        %v1985 = vsel %vm1915, %v1963, 0.0
        %1986 = vadd.xlane.f32.xlu0 %v1985
        %v1987 = vpop.xlane.xlu0 %1986
        %v1988 = vrcp.pop %v1966
        %v1989 = vrcp.pop %v1969
        %v1990 = vrcp.pop %v1972
        %v1991 = vrcp.pop %v1975
        %v1992 = vrcp.pop %v1978
        %v1993 = vrcp.pop %v1981
        %v1994 = vrcp.pop %v1984
        %v1995 = vrcp.pop %v1987
        %v1996 = vmul.f32 %v1949, %v1988
        %v1997 = vmul.f32 %v1951, %v1989
        %v1998 = vmul.f32 %v1953, %v1990
        %v1999 = vmul.f32 %v1955, %v1991
        %v2000 = vmul.f32 %v1957, %v1992
        %v2001 = vmul.f32 %v1959, %v1993
        %v2002 = vmul.f32 %v1961, %v1994
        %v2003 = vmul.f32 %v1963, %v1995
        %v2004 = vpack.c.bf16 %v1997, %v1996
        %v2005 = vpack.c.bf16 %v1999, %v1998
        %v2006 = vpack.c.bf16 %v2001, %v2000
        %v2007 = vpack.c.bf16 %v2003, %v2002
        %v2009 = vsel %vm1915, %v2004, 0
        %2011 = vmatprep.subr.bf16.mxu0 0
        %2012 = vmatpush1.bf16.msra.mxu0 0
        %2013 = vmatprep.subr.bf16.mxu0 0
        %2014 = vmatpush1.bf16.msra.mxu0 0
        %2015 = vmatprep.subr.bf16.mxu0 0
        %2016 = vmatpush1.bf16.msra.mxu0 0
        %2017 = vmatprep.subr.bf16.mxu0 0
        %2018 = vmatpush1.bf16.msra.mxu0 0
        %2019 = vmatprep.subr.bf16.mxu0 0
        %2020 = vmatpush1.bf16.msra.mxu0 0
        %2021 = vmatprep.subr.bf16.mxu0 0
        %2022 = vmatpush1.bf16.msra.mxu0 0
        %2023 = vmatprep.subr.bf16.mxu0 0
        %2024 = vmatpush1.bf16.msra.mxu0 0
        %2025 = vmatprep.subr.bf16.mxu0 0
        %2026 = vmatpush1.bf16.msra.mxu0 %v1699
        %2027 = vmatprep.subr.bf16.mxu0 0
        %2028 = vmatpush2.bf16.msra.mxu0 0
        %2029 = vmatprep.subr.bf16.mxu0 0
        %2030 = vmatpush2.bf16.msra.mxu0 0
        %2031 = vmatprep.subr.bf16.mxu0 0
        %2032 = vmatpush2.bf16.msra.mxu0 0
        %2033 = vmatprep.subr.bf16.mxu0 0
        %2034 = vmatpush2.bf16.msra.mxu0 0
        %2035 = vmatprep.subr.bf16.mxu0 0
        %2036 = vmatpush2.bf16.msra.mxu0 0
        %2037 = vmatprep.subr.bf16.mxu0 0
        %2038 = vmatpush2.bf16.msra.mxu0 0
        %2039 = vmatprep.subr.bf16.mxu0 0
        %2040 = vmatpush2.bf16.msra.mxu0 0
        %2041 = vmatprep.subr.bf16.mxu0 0
        %2042 = vmatpush2.bf16.msra.mxu0 0
        %2043 = vmatprep.mubr.bf16.mxu0 0
        %2044 = vmatmul.mubr.bf16.gmra.mxu0 %v2009
        %v2045 = vpop.f32.mrf.mxu0
        %v2046 = vadd.f32 0.0, %v2045
        %v2047 = vpop.f32.mrf.mxu0
        %v2048 = vpop.f32.mrf.mxu0
        %v2049 = vadd.f32 0.0, %v2048
        %v2050 = vpop.f32.mrf.mxu0
        %2051 = vdwg.mxu0
        %v2053 = vsel %vm1915, %v2005, 0
        %2055 = vmatprep.subr.bf16.mxu0 0
        %2056 = vmatpush1.bf16.msra.mxu0 0
        %2057 = vmatprep.subr.bf16.mxu0 0
        %2058 = vmatpush1.bf16.msra.mxu0 0
        %2059 = vmatprep.subr.bf16.mxu0 0
        %2060 = vmatpush1.bf16.msra.mxu0 0
        %2061 = vmatprep.subr.bf16.mxu0 0
        %2062 = vmatpush1.bf16.msra.mxu0 0
        %2063 = vmatprep.subr.bf16.mxu0 0
        %2064 = vmatpush1.bf16.msra.mxu0 0
        %2065 = vmatprep.subr.bf16.mxu0 0
        %2066 = vmatpush1.bf16.msra.mxu0 0
        %2067 = vmatprep.subr.bf16.mxu0 0
        %2068 = vmatpush1.bf16.msra.mxu0 0
        %2069 = vmatprep.subr.bf16.mxu0 0
        %2070 = vmatpush1.bf16.msra.mxu0 %v1702
        %2071 = vmatprep.subr.bf16.mxu0 0
        %2072 = vmatpush2.bf16.msra.mxu0 0
        %2073 = vmatprep.subr.bf16.mxu0 0
        %2074 = vmatpush2.bf16.msra.mxu0 0
        %2075 = vmatprep.subr.bf16.mxu0 0
        %2076 = vmatpush2.bf16.msra.mxu0 0
        %2077 = vmatprep.subr.bf16.mxu0 0
        %2078 = vmatpush2.bf16.msra.mxu0 0
        %2079 = vmatprep.subr.bf16.mxu0 0
        %2080 = vmatpush2.bf16.msra.mxu0 0
        %2081 = vmatprep.subr.bf16.mxu0 0
        %2082 = vmatpush2.bf16.msra.mxu0 0
        %2083 = vmatprep.subr.bf16.mxu0 0
        %2084 = vmatpush2.bf16.msra.mxu0 0
        %2085 = vmatprep.subr.bf16.mxu0 0
        %2086 = vmatpush2.bf16.msra.mxu0 0
        %2087 = vmatprep.mubr.bf16.mxu0 0
        %2088 = vmatmul.mubr.bf16.gmra.mxu0 %v2053
        %v2089 = vpop.f32.mrf.mxu0
        %v2090 = vadd.f32 0.0, %v2089
        %v2091 = vpop.f32.mrf.mxu0
        %v2092 = vpop.f32.mrf.mxu0
        %v2093 = vadd.f32 0.0, %v2092
        %v2094 = vpop.f32.mrf.mxu0
        %2095 = vdwg.mxu0
        %v2097 = vsel %vm1915, %v2006, 0
        %2099 = vmatprep.subr.bf16.mxu0 0
        %2100 = vmatpush1.bf16.msra.mxu0 0
        %2101 = vmatprep.subr.bf16.mxu0 0
        %2102 = vmatpush1.bf16.msra.mxu0 0
        %2103 = vmatprep.subr.bf16.mxu0 0
        %2104 = vmatpush1.bf16.msra.mxu0 0
        %2105 = vmatprep.subr.bf16.mxu0 0
        %2106 = vmatpush1.bf16.msra.mxu0 0
        %2107 = vmatprep.subr.bf16.mxu0 0
        %2108 = vmatpush1.bf16.msra.mxu0 0
        %2109 = vmatprep.subr.bf16.mxu0 0
        %2110 = vmatpush1.bf16.msra.mxu0 0
        %2111 = vmatprep.subr.bf16.mxu0 0
        %2112 = vmatpush1.bf16.msra.mxu0 0
        %2113 = vmatprep.subr.bf16.mxu0 0
        %2114 = vmatpush1.bf16.msra.mxu0 %v1705
        %2115 = vmatprep.subr.bf16.mxu0 0
        %2116 = vmatpush2.bf16.msra.mxu0 0
        %2117 = vmatprep.subr.bf16.mxu0 0
        %2118 = vmatpush2.bf16.msra.mxu0 0
        %2119 = vmatprep.subr.bf16.mxu0 0
        %2120 = vmatpush2.bf16.msra.mxu0 0
        %2121 = vmatprep.subr.bf16.mxu0 0
        %2122 = vmatpush2.bf16.msra.mxu0 0
        %2123 = vmatprep.subr.bf16.mxu0 0
        %2124 = vmatpush2.bf16.msra.mxu0 0
        %2125 = vmatprep.subr.bf16.mxu0 0
        %2126 = vmatpush2.bf16.msra.mxu0 0
        %2127 = vmatprep.subr.bf16.mxu0 0
        %2128 = vmatpush2.bf16.msra.mxu0 0
        %2129 = vmatprep.subr.bf16.mxu0 0
        %2130 = vmatpush2.bf16.msra.mxu0 0
        %2131 = vmatprep.mubr.bf16.mxu0 0
        %2132 = vmatmul.mubr.bf16.gmra.mxu0 %v2097
        %v2133 = vpop.f32.mrf.mxu0
        %v2134 = vadd.f32 0.0, %v2133
        %v2135 = vpop.f32.mrf.mxu0
        %v2136 = vpop.f32.mrf.mxu0
        %v2137 = vadd.f32 0.0, %v2136
        %v2138 = vpop.f32.mrf.mxu0
        %2139 = vdwg.mxu0
        %v2141 = vsel %vm1915, %v2007, 0
        %2143 = vmatprep.subr.bf16.mxu0 0
        %2144 = vmatpush1.bf16.msra.mxu0 0
        %2145 = vmatprep.subr.bf16.mxu0 0
        %2146 = vmatpush1.bf16.msra.mxu0 0
        %2147 = vmatprep.subr.bf16.mxu0 0
        %2148 = vmatpush1.bf16.msra.mxu0 0
        %2149 = vmatprep.subr.bf16.mxu0 0
        %2150 = vmatpush1.bf16.msra.mxu0 0
        %2151 = vmatprep.subr.bf16.mxu0 0
        %2152 = vmatpush1.bf16.msra.mxu0 0
        %2153 = vmatprep.subr.bf16.mxu0 0
        %2154 = vmatpush1.bf16.msra.mxu0 0
        %2155 = vmatprep.subr.bf16.mxu0 0
        %2156 = vmatpush1.bf16.msra.mxu0 0
        %2157 = vmatprep.subr.bf16.mxu0 0
        %2158 = vmatpush1.bf16.msra.mxu0 %v1708
        %2159 = vmatprep.subr.bf16.mxu0 0
        %2160 = vmatpush2.bf16.msra.mxu0 0
        %2161 = vmatprep.subr.bf16.mxu0 0
        %2162 = vmatpush2.bf16.msra.mxu0 0
        %2163 = vmatprep.subr.bf16.mxu0 0
        %2164 = vmatpush2.bf16.msra.mxu0 0
        %2165 = vmatprep.subr.bf16.mxu0 0
        %2166 = vmatpush2.bf16.msra.mxu0 0
        %2167 = vmatprep.subr.bf16.mxu0 0
        %2168 = vmatpush2.bf16.msra.mxu0 0
        %2169 = vmatprep.subr.bf16.mxu0 0
        %2170 = vmatpush2.bf16.msra.mxu0 0
        %2171 = vmatprep.subr.bf16.mxu0 0
        %2172 = vmatpush2.bf16.msra.mxu0 0
        %2173 = vmatprep.subr.bf16.mxu0 0
        %2174 = vmatpush2.bf16.msra.mxu0 0
        %2175 = vmatprep.mubr.bf16.mxu0 0
        %2176 = vmatmul.mubr.bf16.gmra.mxu0 %v2141
        %v2177 = vpop.f32.mrf.mxu0
        %v2178 = vadd.f32 0.0, %v2177
        %v2179 = vpop.f32.mrf.mxu0
        %v2180 = vpop.f32.mrf.mxu0
        %v2181 = vadd.f32 0.0, %v2180
        %v2182 = vpop.f32.mrf.mxu0
        %2183 = vdwg.mxu0
        %v2184 = vpack.c.bf16 %v2049, %v2046
        %v2185 = vpack.c.bf16 %v2093, %v2090
        %v2186 = vpack.c.bf16 %v2137, %v2134
        %v2187 = vpack.c.bf16 %v2181, %v2178
        %2189 = vrot.lane.b32.xlu0 %v2185, 32
        %v2190 = vpop.permute.xlu0 %2189
        %2192 = vrot.lane.b32.xlu0 %v2186, 64
        %v2193 = vpop.permute.xlu0 %2192
        %2195 = vrot.lane.b32.xlu0 %v2187, 96
        %v2196 = vpop.permute.xlu0 %2195
        %v2199 = vsel %vm1710, %v2184, %v2190
        %vm2200 = vcmask 523264
        %v2202 = vsel %vm2200, %v2199, %v2193
        %vm2203 = vcmask 785408
        %v2205 = vsel %vm2203, %v2202, %v2196
        %v2207 = vpack.c.bf16 %v1630, %v1626
        %2209 = vrot.lane.b32.xlu0 %v2207, 96
        %v2210 = vpop.permute.xlu0 %2209
        %2211 = vrot.lane.b32.xlu0 %v2207, 64
        %v2212 = vpop.permute.xlu0 %2211
        %2213 = vrot.lane.b32.xlu0 %v2207, 32
        %v2214 = vpop.permute.xlu0 %2213
        %v2215 = vpack.c.bf16 %v1632, %v1628
        %2217 = vrot.lane.b32.xlu0 %v2215, 96
        %v2218 = vpop.permute.xlu0 %2217
        %2219 = vrot.lane.b32.xlu0 %v2215, 64
        %v2220 = vpop.permute.xlu0 %2219
        %2221 = vrot.lane.b32.xlu0 %v2215, 32
        %v2222 = vpop.permute.xlu0 %2221
        %v2223 = vpack.c.bf16 %v1680, %v1677
        %2225 = vrot.lane.b32.xlu0 %v2223, 96
        %v2226 = vpop.permute.xlu0 %2225
        %2228 = vrot.lane.b32.xlu0 %v2223, 64
        %v2229 = vpop.permute.xlu0 %2228
        %2231 = vrot.lane.b32.xlu0 %v2223, 32
        %v2232 = vpop.permute.xlu0 %2231
        %v2235 = vsel %vm1710, %v2207, 0
        %v2238 = vsel %vm1710, %v2215, 0
        %2240 = vmatprep.subr.bf16.mxu0 0
        %2241 = vmatpush1.bf16.xpose.msra.mxu0 0
        %2242 = vmatprep.subr.bf16.mxu0 0
        %2243 = vmatpush1.bf16.xpose.msra.mxu0 0
        %2244 = vmatprep.subr.bf16.mxu0 0
        %2245 = vmatpush1.bf16.xpose.msra.mxu0 0
        %2246 = vmatprep.subr.bf16.mxu0 0
        %2247 = vmatpush1.bf16.xpose.msra.mxu0 0
        %2248 = vmatprep.subr.bf16.mxu0 0
        %2249 = vmatpush1.bf16.xpose.msra.mxu0 0
        %2250 = vmatprep.subr.bf16.mxu0 0
        %2251 = vmatpush1.bf16.xpose.msra.mxu0 0
        %2252 = vmatprep.subr.bf16.mxu0 0
        %2253 = vmatpush1.bf16.xpose.msra.mxu0 0
        %2254 = vmatprep.subr.bf16.mxu0 0
        %2255 = vmatpush1.bf16.xpose.msra.mxu0 %v2238
        %2256 = vmatprep.subr.bf16.mxu0 0
        %2257 = vmatpush2.bf16.xpose.msra.mxu0 0
        %2258 = vmatprep.subr.bf16.mxu0 0
        %2259 = vmatpush2.bf16.xpose.msra.mxu0 0
        %2260 = vmatprep.subr.bf16.mxu0 0
        %2261 = vmatpush2.bf16.xpose.msra.mxu0 0
        %2262 = vmatprep.subr.bf16.mxu0 0
        %2263 = vmatpush2.bf16.xpose.msra.mxu0 0
        %2264 = vmatprep.subr.bf16.mxu0 0
        %2265 = vmatpush2.bf16.xpose.msra.mxu0 0
        %2266 = vmatprep.subr.bf16.mxu0 0
        %2267 = vmatpush2.bf16.xpose.msra.mxu0 0
        %2268 = vmatprep.subr.bf16.mxu0 0
        %2269 = vmatpush2.bf16.xpose.msra.mxu0 0
        %2270 = vmatprep.subr.bf16.mxu0 0
        %2271 = vmatpush2.bf16.xpose.msra.mxu0 0
        %2272 = vmatprep.mubr.bf16.mxu0 0
        %2273 = vmatmul.mubr.bf16.gmra.mxu0 %v2235
        %v2274 = vpop.f32.mrf.mxu0
        %v2275 = vadd.f32 0.0, %v2274
        %v2276 = vpop.f32.mrf.mxu0
        %v2277 = vpop.f32.mrf.mxu0
        %v2278 = vadd.f32 0.0, %v2277
        %v2279 = vpop.f32.mrf.mxu0
        %2280 = vdwg.mxu0
        %v2282 = vsel %vm1710, %v2210, 0
        %v2285 = vsel %vm1710, %v2218, 0
        %2287 = vmatprep.subr.bf16.mxu0 0
        %2288 = vmatpush1.bf16.xpose.msra.mxu0 0
        %2289 = vmatprep.subr.bf16.mxu0 0
        %2290 = vmatpush1.bf16.xpose.msra.mxu0 0
        %2291 = vmatprep.subr.bf16.mxu0 0
        %2292 = vmatpush1.bf16.xpose.msra.mxu0 0
        %2293 = vmatprep.subr.bf16.mxu0 0
        %2294 = vmatpush1.bf16.xpose.msra.mxu0 0
        %2295 = vmatprep.subr.bf16.mxu0 0
        %2296 = vmatpush1.bf16.xpose.msra.mxu0 0
        %2297 = vmatprep.subr.bf16.mxu0 0
        %2298 = vmatpush1.bf16.xpose.msra.mxu0 0
        %2299 = vmatprep.subr.bf16.mxu0 0
        %2300 = vmatpush1.bf16.xpose.msra.mxu0 0
        %2301 = vmatprep.subr.bf16.mxu0 0
        %2302 = vmatpush1.bf16.xpose.msra.mxu0 %v2285
        %2303 = vmatprep.subr.bf16.mxu0 0
        %2304 = vmatpush2.bf16.xpose.msra.mxu0 0
        %2305 = vmatprep.subr.bf16.mxu0 0
        %2306 = vmatpush2.bf16.xpose.msra.mxu0 0
        %2307 = vmatprep.subr.bf16.mxu0 0
        %2308 = vmatpush2.bf16.xpose.msra.mxu0 0
        %2309 = vmatprep.subr.bf16.mxu0 0
        %2310 = vmatpush2.bf16.xpose.msra.mxu0 0
        %2311 = vmatprep.subr.bf16.mxu0 0
        %2312 = vmatpush2.bf16.xpose.msra.mxu0 0
        %2313 = vmatprep.subr.bf16.mxu0 0
        %2314 = vmatpush2.bf16.xpose.msra.mxu0 0
        %2315 = vmatprep.subr.bf16.mxu0 0
        %2316 = vmatpush2.bf16.xpose.msra.mxu0 0
        %2317 = vmatprep.subr.bf16.mxu0 0
        %2318 = vmatpush2.bf16.xpose.msra.mxu0 0
        %2319 = vmatprep.mubr.bf16.mxu0 0
        %2320 = vmatmul.mubr.bf16.gmra.mxu0 %v2282
        %v2321 = vpop.f32.mrf.mxu0
        %v2322 = vadd.f32 0.0, %v2321
        %v2323 = vpop.f32.mrf.mxu0
        %v2324 = vpop.f32.mrf.mxu0
        %v2325 = vadd.f32 0.0, %v2324
        %v2326 = vpop.f32.mrf.mxu0
        %2327 = vdwg.mxu0
        %v2329 = vsel %vm1710, %v2212, 0
        %v2332 = vsel %vm1710, %v2220, 0
        %2334 = vmatprep.subr.bf16.mxu0 0
        %2335 = vmatpush1.bf16.xpose.msra.mxu0 0
        %2336 = vmatprep.subr.bf16.mxu0 0
        %2337 = vmatpush1.bf16.xpose.msra.mxu0 0
        %2338 = vmatprep.subr.bf16.mxu0 0
        %2339 = vmatpush1.bf16.xpose.msra.mxu0 0
        %2340 = vmatprep.subr.bf16.mxu0 0
        %2341 = vmatpush1.bf16.xpose.msra.mxu0 0
        %2342 = vmatprep.subr.bf16.mxu0 0
        %2343 = vmatpush1.bf16.xpose.msra.mxu0 0
        %2344 = vmatprep.subr.bf16.mxu0 0
        %2345 = vmatpush1.bf16.xpose.msra.mxu0 0
        %2346 = vmatprep.subr.bf16.mxu0 0
        %2347 = vmatpush1.bf16.xpose.msra.mxu0 0
        %2348 = vmatprep.subr.bf16.mxu0 0
        %2349 = vmatpush1.bf16.xpose.msra.mxu0 %v2332
        %2350 = vmatprep.subr.bf16.mxu0 0
        %2351 = vmatpush2.bf16.xpose.msra.mxu0 0
        %2352 = vmatprep.subr.bf16.mxu0 0
        %2353 = vmatpush2.bf16.xpose.msra.mxu0 0
        %2354 = vmatprep.subr.bf16.mxu0 0
        %2355 = vmatpush2.bf16.xpose.msra.mxu0 0
        %2356 = vmatprep.subr.bf16.mxu0 0
        %2357 = vmatpush2.bf16.xpose.msra.mxu0 0
        %2358 = vmatprep.subr.bf16.mxu0 0
        %2359 = vmatpush2.bf16.xpose.msra.mxu0 0
        %2360 = vmatprep.subr.bf16.mxu0 0
        %2361 = vmatpush2.bf16.xpose.msra.mxu0 0
        %2362 = vmatprep.subr.bf16.mxu0 0
        %2363 = vmatpush2.bf16.xpose.msra.mxu0 0
        %2364 = vmatprep.subr.bf16.mxu0 0
        %2365 = vmatpush2.bf16.xpose.msra.mxu0 0
        %2366 = vmatprep.mubr.bf16.mxu0 0
        %2367 = vmatmul.mubr.bf16.gmra.mxu0 %v2329
        %v2368 = vpop.f32.mrf.mxu0
        %v2369 = vadd.f32 0.0, %v2368
        %v2370 = vpop.f32.mrf.mxu0
        %v2371 = vpop.f32.mrf.mxu0
        %v2372 = vadd.f32 0.0, %v2371
        %v2373 = vpop.f32.mrf.mxu0
        %2374 = vdwg.mxu0
        %v2376 = vsel %vm1710, %v2214, 0
        %v2379 = vsel %vm1710, %v2222, 0
        %2381 = vmatprep.subr.bf16.mxu0 0
        %2382 = vmatpush1.bf16.xpose.msra.mxu0 0
        %2383 = vmatprep.subr.bf16.mxu0 0
        %2384 = vmatpush1.bf16.xpose.msra.mxu0 0
        %2385 = vmatprep.subr.bf16.mxu0 0
        %2386 = vmatpush1.bf16.xpose.msra.mxu0 0
        %2387 = vmatprep.subr.bf16.mxu0 0
        %2388 = vmatpush1.bf16.xpose.msra.mxu0 0
        %2389 = vmatprep.subr.bf16.mxu0 0
        %2390 = vmatpush1.bf16.xpose.msra.mxu0 0
        %2391 = vmatprep.subr.bf16.mxu0 0
        %2392 = vmatpush1.bf16.xpose.msra.mxu0 0
        %2393 = vmatprep.subr.bf16.mxu0 0
        %2394 = vmatpush1.bf16.xpose.msra.mxu0 0
        %2395 = vmatprep.subr.bf16.mxu0 0
        %2396 = vmatpush1.bf16.xpose.msra.mxu0 %v2379
        %2397 = vmatprep.subr.bf16.mxu0 0
        %2398 = vmatpush2.bf16.xpose.msra.mxu0 0
        %2399 = vmatprep.subr.bf16.mxu0 0
        %2400 = vmatpush2.bf16.xpose.msra.mxu0 0
        %2401 = vmatprep.subr.bf16.mxu0 0
        %2402 = vmatpush2.bf16.xpose.msra.mxu0 0
        %2403 = vmatprep.subr.bf16.mxu0 0
        %2404 = vmatpush2.bf16.xpose.msra.mxu0 0
        %2405 = vmatprep.subr.bf16.mxu0 0
        %2406 = vmatpush2.bf16.xpose.msra.mxu0 0
        %2407 = vmatprep.subr.bf16.mxu0 0
        %2408 = vmatpush2.bf16.xpose.msra.mxu0 0
        %2409 = vmatprep.subr.bf16.mxu0 0
        %2410 = vmatpush2.bf16.xpose.msra.mxu0 0
        %2411 = vmatprep.subr.bf16.mxu0 0
        %2412 = vmatpush2.bf16.xpose.msra.mxu0 0
        %2413 = vmatprep.mubr.bf16.mxu0 0
        %2414 = vmatmul.mubr.bf16.gmra.mxu0 %v2376
        %v2415 = vpop.f32.mrf.mxu0
        %v2416 = vadd.f32 0.0, %v2415
        %v2417 = vpop.f32.mrf.mxu0
        %v2418 = vpop.f32.mrf.mxu0
        %v2419 = vadd.f32 0.0, %v2418
        %v2420 = vpop.f32.mrf.mxu0
        %2421 = vdwg.mxu0
        %v2422 = vmul.f32 %v2275, 0.17677669
        %v2423 = vmul.f32 %v2278, 0.17677669
        %v2424 = vmul.f32 %v2322, 0.17677669
        %v2425 = vmul.f32 %v2325, 0.17677669
        %v2426 = vmul.f32 %v2369, 0.17677669
        %v2427 = vmul.f32 %v2372, 0.17677669
        %v2428 = vmul.f32 %v2416, 0.17677669
        %v2429 = vmul.f32 %v2419, 0.17677669
        %v2430 = vadd.f32 %v2422, %v1319
        %v2431 = vadd.f32 %v2423, %v1320
        %v2432 = vadd.f32 %v2424, %v1319
        %v2433 = vadd.f32 %v2425, %v1320
        %v2434 = vadd.f32 %v2426, %v1319
        %v2435 = vadd.f32 %v2427, %v1320
        %v2436 = vadd.f32 %v2428, %v1319
        %v2437 = vadd.f32 %v2429, %v1320
        %v2438 = vsel %vm1915, %v2430, -inf
        %2439 = vmax.xlane.f32.xlu0 %v2438
        %v2440 = vpop.xlane.xlu0 %2439
        %v2441 = vsel %vm1915, %v2431, -inf
        %2442 = vmax.xlane.f32.xlu0 %v2441
        %v2443 = vpop.xlane.xlu0 %2442
        %v2444 = vsel %vm1915, %v2432, -inf
        %2445 = vmax.xlane.f32.xlu0 %v2444
        %v2446 = vpop.xlane.xlu0 %2445
        %v2447 = vsel %vm1915, %v2433, -inf
        %2448 = vmax.xlane.f32.xlu0 %v2447
        %v2449 = vpop.xlane.xlu0 %2448
        %v2450 = vsel %vm1915, %v2434, -inf
        %2451 = vmax.xlane.f32.xlu0 %v2450
        %v2452 = vpop.xlane.xlu0 %2451
        %v2453 = vsel %vm1915, %v2435, -inf
        %2454 = vmax.xlane.f32.xlu0 %v2453
        %v2455 = vpop.xlane.xlu0 %2454
        %v2456 = vsel %vm1915, %v2436, -inf
        %2457 = vmax.xlane.f32.xlu0 %v2456
        %v2458 = vpop.xlane.xlu0 %2457
        %v2459 = vsel %vm1915, %v2437, -inf
        %2460 = vmax.xlane.f32.xlu0 %v2459
        %v2461 = vpop.xlane.xlu0 %2460
        %v2462 = vsub.f32 %v2430, %v2440
        %v2463 = vsub.f32 %v2431, %v2443
        %v2464 = vsub.f32 %v2432, %v2446
        %v2465 = vsub.f32 %v2433, %v2449
        %v2466 = vsub.f32 %v2434, %v2452
        %v2467 = vsub.f32 %v2435, %v2455
        %v2468 = vsub.f32 %v2436, %v2458
        %v2469 = vsub.f32 %v2437, %v2461
        %v2470 = vmul.f32 %v2462, 1.442695
        %v2471 = vpow.pop %v2470
        %v2472 = vmul.f32 %v2463, 1.442695
        %v2473 = vpow.pop %v2472
        %v2474 = vmul.f32 %v2464, 1.442695
        %v2475 = vpow.pop %v2474
        %v2476 = vmul.f32 %v2465, 1.442695
        %v2477 = vpow.pop %v2476
        %v2478 = vmul.f32 %v2466, 1.442695
        %v2479 = vpow.pop %v2478
        %v2480 = vmul.f32 %v2467, 1.442695
        %v2481 = vpow.pop %v2480
        %v2482 = vmul.f32 %v2468, 1.442695
        %v2483 = vpow.pop %v2482
        %v2484 = vmul.f32 %v2469, 1.442695
        %v2485 = vpow.pop %v2484
        %v2486 = vsel %vm1915, %v2471, 0.0
        %2487 = vadd.xlane.f32.xlu0 %v2486
        %v2488 = vpop.xlane.xlu0 %2487
        %v2489 = vsel %vm1915, %v2473, 0.0
        %2490 = vadd.xlane.f32.xlu0 %v2489
        %v2491 = vpop.xlane.xlu0 %2490
        %v2492 = vsel %vm1915, %v2475, 0.0
        %2493 = vadd.xlane.f32.xlu0 %v2492
        %v2494 = vpop.xlane.xlu0 %2493
        %v2495 = vsel %vm1915, %v2477, 0.0
        %2496 = vadd.xlane.f32.xlu0 %v2495
        %v2497 = vpop.xlane.xlu0 %2496
        %v2498 = vsel %vm1915, %v2479, 0.0
        %2499 = vadd.xlane.f32.xlu0 %v2498
        %v2500 = vpop.xlane.xlu0 %2499
        %v2501 = vsel %vm1915, %v2481, 0.0
        %2502 = vadd.xlane.f32.xlu0 %v2501
        %v2503 = vpop.xlane.xlu0 %2502
        %v2504 = vsel %vm1915, %v2483, 0.0
        %2505 = vadd.xlane.f32.xlu0 %v2504
        %v2506 = vpop.xlane.xlu0 %2505
        %v2507 = vsel %vm1915, %v2485, 0.0
        %2508 = vadd.xlane.f32.xlu0 %v2507
        %v2509 = vpop.xlane.xlu0 %2508
        %v2510 = vrcp.pop %v2488
        %v2511 = vrcp.pop %v2491
        %v2512 = vrcp.pop %v2494
        %v2513 = vrcp.pop %v2497
        %v2514 = vrcp.pop %v2500
        %v2515 = vrcp.pop %v2503
        %v2516 = vrcp.pop %v2506
        %v2517 = vrcp.pop %v2509
        %v2518 = vmul.f32 %v2471, %v2510
        %v2519 = vmul.f32 %v2473, %v2511
        %v2520 = vmul.f32 %v2475, %v2512
        %v2521 = vmul.f32 %v2477, %v2513
        %v2522 = vmul.f32 %v2479, %v2514
        %v2523 = vmul.f32 %v2481, %v2515
        %v2524 = vmul.f32 %v2483, %v2516
        %v2525 = vmul.f32 %v2485, %v2517
        %v2526 = vpack.c.bf16 %v2519, %v2518
        %v2527 = vpack.c.bf16 %v2521, %v2520
        %v2528 = vpack.c.bf16 %v2523, %v2522
        %v2529 = vpack.c.bf16 %v2525, %v2524
        %v2531 = vsel %vm1915, %v2526, 0
        %2533 = vmatprep.subr.bf16.mxu0 0
        %2534 = vmatpush1.bf16.msra.mxu0 0
        %2535 = vmatprep.subr.bf16.mxu0 0
        %2536 = vmatpush1.bf16.msra.mxu0 0
        %2537 = vmatprep.subr.bf16.mxu0 0
        %2538 = vmatpush1.bf16.msra.mxu0 0
        %2539 = vmatprep.subr.bf16.mxu0 0
        %2540 = vmatpush1.bf16.msra.mxu0 0
        %2541 = vmatprep.subr.bf16.mxu0 0
        %2542 = vmatpush1.bf16.msra.mxu0 0
        %2543 = vmatprep.subr.bf16.mxu0 0
        %2544 = vmatpush1.bf16.msra.mxu0 0
        %2545 = vmatprep.subr.bf16.mxu0 0
        %2546 = vmatpush1.bf16.msra.mxu0 0
        %2547 = vmatprep.subr.bf16.mxu0 0
        %2548 = vmatpush1.bf16.msra.mxu0 %v2223
        %2549 = vmatprep.subr.bf16.mxu0 0
        %2550 = vmatpush2.bf16.msra.mxu0 0
        %2551 = vmatprep.subr.bf16.mxu0 0
        %2552 = vmatpush2.bf16.msra.mxu0 0
        %2553 = vmatprep.subr.bf16.mxu0 0
        %2554 = vmatpush2.bf16.msra.mxu0 0
        %2555 = vmatprep.subr.bf16.mxu0 0
        %2556 = vmatpush2.bf16.msra.mxu0 0
        %2557 = vmatprep.subr.bf16.mxu0 0
        %2558 = vmatpush2.bf16.msra.mxu0 0
        %2559 = vmatprep.subr.bf16.mxu0 0
        %2560 = vmatpush2.bf16.msra.mxu0 0
        %2561 = vmatprep.subr.bf16.mxu0 0
        %2562 = vmatpush2.bf16.msra.mxu0 0
        %2563 = vmatprep.subr.bf16.mxu0 0
        %2564 = vmatpush2.bf16.msra.mxu0 0
        %2565 = vmatprep.mubr.bf16.mxu0 0
        %2566 = vmatmul.mubr.bf16.gmra.mxu0 %v2531
        %v2567 = vpop.f32.mrf.mxu0
        %v2568 = vadd.f32 0.0, %v2567
        %v2569 = vpop.f32.mrf.mxu0
        %v2570 = vpop.f32.mrf.mxu0
        %v2571 = vadd.f32 0.0, %v2570
        %v2572 = vpop.f32.mrf.mxu0
        %2573 = vdwg.mxu0
        %v2575 = vsel %vm1915, %v2527, 0
        %2577 = vmatprep.subr.bf16.mxu0 0
        %2578 = vmatpush1.bf16.msra.mxu0 0
        %2579 = vmatprep.subr.bf16.mxu0 0
        %2580 = vmatpush1.bf16.msra.mxu0 0
        %2581 = vmatprep.subr.bf16.mxu0 0
        %2582 = vmatpush1.bf16.msra.mxu0 0
        %2583 = vmatprep.subr.bf16.mxu0 0
        %2584 = vmatpush1.bf16.msra.mxu0 0
        %2585 = vmatprep.subr.bf16.mxu0 0
        %2586 = vmatpush1.bf16.msra.mxu0 0
        %2587 = vmatprep.subr.bf16.mxu0 0
        %2588 = vmatpush1.bf16.msra.mxu0 0
        %2589 = vmatprep.subr.bf16.mxu0 0
        %2590 = vmatpush1.bf16.msra.mxu0 0
        %2591 = vmatprep.subr.bf16.mxu0 0
        %2592 = vmatpush1.bf16.msra.mxu0 %v2226
        %2593 = vmatprep.subr.bf16.mxu0 0
        %2594 = vmatpush2.bf16.msra.mxu0 0
        %2595 = vmatprep.subr.bf16.mxu0 0
        %2596 = vmatpush2.bf16.msra.mxu0 0
        %2597 = vmatprep.subr.bf16.mxu0 0
        %2598 = vmatpush2.bf16.msra.mxu0 0
        %2599 = vmatprep.subr.bf16.mxu0 0
        %2600 = vmatpush2.bf16.msra.mxu0 0
        %2601 = vmatprep.subr.bf16.mxu0 0
        %2602 = vmatpush2.bf16.msra.mxu0 0
        %2603 = vmatprep.subr.bf16.mxu0 0
        %2604 = vmatpush2.bf16.msra.mxu0 0
        %2605 = vmatprep.subr.bf16.mxu0 0
        %2606 = vmatpush2.bf16.msra.mxu0 0
        %2607 = vmatprep.subr.bf16.mxu0 0
        %2608 = vmatpush2.bf16.msra.mxu0 0
        %2609 = vmatprep.mubr.bf16.mxu0 0
        %2610 = vmatmul.mubr.bf16.gmra.mxu0 %v2575
        %v2611 = vpop.f32.mrf.mxu0
        %v2612 = vadd.f32 0.0, %v2611
        %v2613 = vpop.f32.mrf.mxu0
        %v2614 = vpop.f32.mrf.mxu0
        %v2615 = vadd.f32 0.0, %v2614
        %v2616 = vpop.f32.mrf.mxu0
        %2617 = vdwg.mxu0
        %v2619 = vsel %vm1915, %v2528, 0
        %2621 = vmatprep.subr.bf16.mxu0 0
        %2622 = vmatpush1.bf16.msra.mxu0 0
        %2623 = vmatprep.subr.bf16.mxu0 0
        %2624 = vmatpush1.bf16.msra.mxu0 0
        %2625 = vmatprep.subr.bf16.mxu0 0
        %2626 = vmatpush1.bf16.msra.mxu0 0
        %2627 = vmatprep.subr.bf16.mxu0 0
        %2628 = vmatpush1.bf16.msra.mxu0 0
        %2629 = vmatprep.subr.bf16.mxu0 0
        %2630 = vmatpush1.bf16.msra.mxu0 0
        %2631 = vmatprep.subr.bf16.mxu0 0
        %2632 = vmatpush1.bf16.msra.mxu0 0
        %2633 = vmatprep.subr.bf16.mxu0 0
        %2634 = vmatpush1.bf16.msra.mxu0 0
        %2635 = vmatprep.subr.bf16.mxu0 0
        %2636 = vmatpush1.bf16.msra.mxu0 %v2229
        %2637 = vmatprep.subr.bf16.mxu0 0
        %2638 = vmatpush2.bf16.msra.mxu0 0
        %2639 = vmatprep.subr.bf16.mxu0 0
        %2640 = vmatpush2.bf16.msra.mxu0 0
        %2641 = vmatprep.subr.bf16.mxu0 0
        %2642 = vmatpush2.bf16.msra.mxu0 0
        %2643 = vmatprep.subr.bf16.mxu0 0
        %2644 = vmatpush2.bf16.msra.mxu0 0
        %2645 = vmatprep.subr.bf16.mxu0 0
        %2646 = vmatpush2.bf16.msra.mxu0 0
        %2647 = vmatprep.subr.bf16.mxu0 0
        %2648 = vmatpush2.bf16.msra.mxu0 0
        %2649 = vmatprep.subr.bf16.mxu0 0
        %2650 = vmatpush2.bf16.msra.mxu0 0
        %2651 = vmatprep.subr.bf16.mxu0 0
        %2652 = vmatpush2.bf16.msra.mxu0 0
        %2653 = vmatprep.mubr.bf16.mxu0 0
        %2654 = vmatmul.mubr.bf16.gmra.mxu0 %v2619
        %v2655 = vpop.f32.mrf.mxu0
        %v2656 = vadd.f32 0.0, %v2655
        %v2657 = vpop.f32.mrf.mxu0
        %v2658 = vpop.f32.mrf.mxu0
        %v2659 = vadd.f32 0.0, %v2658
        %v2660 = vpop.f32.mrf.mxu0
        %2661 = vdwg.mxu0
        %v2663 = vsel %vm1915, %v2529, 0
        %2665 = vmatprep.subr.bf16.mxu0 0
        %2666 = vmatpush1.bf16.msra.mxu0 0
        %2667 = vmatprep.subr.bf16.mxu0 0
        %2668 = vmatpush1.bf16.msra.mxu0 0
        %2669 = vmatprep.subr.bf16.mxu0 0
        %2670 = vmatpush1.bf16.msra.mxu0 0
        %2671 = vmatprep.subr.bf16.mxu0 0
        %2672 = vmatpush1.bf16.msra.mxu0 0
        %2673 = vmatprep.subr.bf16.mxu0 0
        %2674 = vmatpush1.bf16.msra.mxu0 0
        %2675 = vmatprep.subr.bf16.mxu0 0
        %2676 = vmatpush1.bf16.msra.mxu0 0
        %2677 = vmatprep.subr.bf16.mxu0 0
        %2678 = vmatpush1.bf16.msra.mxu0 0
        %2679 = vmatprep.subr.bf16.mxu0 0
        %2680 = vmatpush1.bf16.msra.mxu0 %v2232
        %2681 = vmatprep.subr.bf16.mxu0 0
        %2682 = vmatpush2.bf16.msra.mxu0 0
        %2683 = vmatprep.subr.bf16.mxu0 0
        %2684 = vmatpush2.bf16.msra.mxu0 0
        %2685 = vmatprep.subr.bf16.mxu0 0
        %2686 = vmatpush2.bf16.msra.mxu0 0
        %2687 = vmatprep.subr.bf16.mxu0 0
        %2688 = vmatpush2.bf16.msra.mxu0 0
        %2689 = vmatprep.subr.bf16.mxu0 0
        %2690 = vmatpush2.bf16.msra.mxu0 0
        %2691 = vmatprep.subr.bf16.mxu0 0
        %2692 = vmatpush2.bf16.msra.mxu0 0
        %2693 = vmatprep.subr.bf16.mxu0 0
        %2694 = vmatpush2.bf16.msra.mxu0 0
        %2695 = vmatprep.subr.bf16.mxu0 0
        %2696 = vmatpush2.bf16.msra.mxu0 0
        %2697 = vmatprep.mubr.bf16.mxu0 0
        %2698 = vmatmul.mubr.bf16.gmra.mxu0 %v2663
        %v2699 = vpop.f32.mrf.mxu0
        %v2700 = vadd.f32 0.0, %v2699
        %v2701 = vpop.f32.mrf.mxu0
        %v2702 = vpop.f32.mrf.mxu0
        %v2703 = vadd.f32 0.0, %v2702
        %v2704 = vpop.f32.mrf.mxu0
        %2705 = vdwg.mxu0
        %v2706 = vpack.c.bf16 %v2571, %v2568
        %v2707 = vpack.c.bf16 %v2615, %v2612
        %v2708 = vpack.c.bf16 %v2659, %v2656
        %v2709 = vpack.c.bf16 %v2703, %v2700
        %2711 = vrot.lane.b32.xlu0 %v2707, 32
        %v2712 = vpop.permute.xlu0 %2711
        %2714 = vrot.lane.b32.xlu0 %v2708, 64
        %v2715 = vpop.permute.xlu0 %2714
        %2717 = vrot.lane.b32.xlu0 %v2709, 96
        %v2718 = vpop.permute.xlu0 %2717
        %v2721 = vsel %vm1710, %v2706, %v2712
        %v2723 = vsel %vm2200, %v2721, %v2715
        %v2725 = vsel %vm2203, %v2723, %v2718
        %v2727 = vld [vmem:[%s1026] sm:$0xf]
        %v2728 = vld [vmem:[%s1026 + $0x4] sm:$0xf]
        %v2729 = vld [vmem:[%s1026 + $0x8] sm:$0xf]
        %v2730 = vld [vmem:[%s1026 + $0xc] sm:$0xf]
        %v2731 = vld [vmem:[%s1026 + $0x10] sm:$0xf]
        %v2732 = vld [vmem:[%s1026 + $0x14] sm:$0xf]
        %v2733 = vld [vmem:[%s1026 + $0x18] sm:$0xf]
        %v2734 = vld [vmem:[%s1026 + $0x1c] sm:$0xf]
        %v2735 = vld [vmem:[%s1026 + $0x20] sm:$0xf]
        %v2736 = vld [vmem:[%s1026 + $0x24] sm:$0xf]
        %v2737 = vld [vmem:[%s1026 + $0x28] sm:$0xf]
        %v2738 = vld [vmem:[%s1026 + $0x2c] sm:$0xf]
        %v2739 = vld [vmem:[%s1026 + $0x30] sm:$0xf]
        %v2740 = vld [vmem:[%s1026 + $0x34] sm:$0xf]
        %v2741 = vld [vmem:[%s1026 + $0x38] sm:$0xf]
        %v2742 = vld [vmem:[%s1026 + $0x3c] sm:$0xf]
        %v2743 = vld [vmem:[%s1034] sm:$0x1]
        %v2745 = vlaneseq
        %v2746 = vshrl.u32 %v2745, 7
        %v2747 = vsub.s32 0, %v2746
        %v2748 = vrot.slane %v2743, %v2747
        %v2766 = vunpack.c.l.b16 %v2727
        %v2767 = vunpack.c.l.b16 %v2728
        %v2768 = vunpack.c.l.b16 %v2729
        %v2769 = vunpack.c.l.b16 %v2730
        %v2770 = vunpack.c.l.b16 %v2731
        %v2771 = vunpack.c.l.b16 %v2732
        %v2772 = vunpack.c.l.b16 %v2733
        %v2773 = vunpack.c.l.b16 %v2734
        %v2774 = vunpack.c.l.b16 %v2735
        %v2775 = vunpack.c.l.b16 %v2736
        %v2776 = vunpack.c.l.b16 %v2737
        %v2777 = vunpack.c.l.b16 %v2738
        %v2778 = vunpack.c.l.b16 %v2739
        %v2779 = vunpack.c.l.b16 %v2740
        %v2780 = vunpack.c.l.b16 %v2741
        %v2781 = vunpack.c.l.b16 %v2742
        %v2782 = vpack.c.b16 %v2767, %v2766
        %v2783 = vpack.c.b16 %v2769, %v2768
        %v2784 = vpack.c.b16 %v2771, %v2770
        %v2785 = vpack.c.b16 %v2773, %v2772
        %v2786 = vpack.c.b16 %v2775, %v2774
        %v2787 = vpack.c.b16 %v2777, %v2776
        %v2788 = vpack.c.b16 %v2779, %v2778
        %v2789 = vpack.c.b16 %v2781, %v2780
        %2798 = vmatprep.subr.bf16.mxu0 0
        %2799 = vmatpush1.bf16.msra.mxu0 %v2789
        %2800 = vmatprep.subr.bf16.mxu0 0
        %2801 = vmatpush1.bf16.msra.mxu0 %v2788
        %2802 = vmatprep.subr.bf16.mxu0 0
        %2803 = vmatpush1.bf16.msra.mxu0 %v2787
        %2804 = vmatprep.subr.bf16.mxu0 0
        %2805 = vmatpush1.bf16.msra.mxu0 %v2786
        %2806 = vmatprep.subr.bf16.mxu0 0
        %2807 = vmatpush1.bf16.msra.mxu0 %v2785
        %2808 = vmatprep.subr.bf16.mxu0 0
        %2809 = vmatpush1.bf16.msra.mxu0 %v2784
        %2810 = vmatprep.subr.bf16.mxu0 0
        %2811 = vmatpush1.bf16.msra.mxu0 %v2783
        %2812 = vmatprep.subr.bf16.mxu0 0
        %2813 = vmatpush1.bf16.msra.mxu0 %v2782
        %2814 = vmatprep.subr.bf16.mxu0 0
        %2815 = vmatpush2.bf16.msra.mxu0 0
        %2816 = vmatprep.subr.bf16.mxu0 0
        %2817 = vmatpush2.bf16.msra.mxu0 0
        %2818 = vmatprep.subr.bf16.mxu0 0
        %2819 = vmatpush2.bf16.msra.mxu0 0
        %2820 = vmatprep.subr.bf16.mxu0 0
        %2821 = vmatpush2.bf16.msra.mxu0 0
        %2822 = vmatprep.subr.bf16.mxu0 0
        %2823 = vmatpush2.bf16.msra.mxu0 0
        %2824 = vmatprep.subr.bf16.mxu0 0
        %2825 = vmatpush2.bf16.msra.mxu0 0
        %2826 = vmatprep.subr.bf16.mxu0 0
        %2827 = vmatpush2.bf16.msra.mxu0 0
        %2828 = vmatprep.subr.bf16.mxu0 0
        %2829 = vmatpush2.bf16.msra.mxu0 0
        %2830 = vmatprep.mubr.bf16.mxu0 0
        %2831 = vmatmul.mubr.bf16.gmra.mxu0 %v2205
        %v2832 = vpop.f32.mrf.mxu0
        %v2833 = vadd.f32 %v2748, %v2832
        %v2834 = vpop.f32.mrf.mxu0
        %v2835 = vpop.f32.mrf.mxu0
        %v2836 = vadd.f32 %v2748, %v2835
        %v2837 = vpop.f32.mrf.mxu0
        %2838 = vmatprep.mubr.bf16.mxu0 0
        %2839 = vmatmul.mubr.bf16.gmra.mxu0 %v2725
        %v2840 = vpop.f32.mrf.mxu0
        %v2841 = vadd.f32 %v2748, %v2840
        %v2842 = vpop.f32.mrf.mxu0
        %v2843 = vpop.f32.mrf.mxu0
        %v2844 = vadd.f32 %v2748, %v2843
        %v2845 = vpop.f32.mrf.mxu0
        %2846 = vdwg.mxu0
        %v2847 = vadd.f32 %v2833, %v1282
        %v2848 = vadd.f32 %v2836, %v1283
        %v2849 = vadd.f32 %v2841, %v1284
        %v2850 = vadd.f32 %v2844, %v1285
        %2851 = vadd.xlane.f32.xlu0 %v2847
        %v2852 = vpop.xlane.xlu0 %2851
        %2853 = vadd.xlane.f32.xlu0 %v2848
        %v2854 = vpop.xlane.xlu0 %2853
        %2855 = vadd.xlane.f32.xlu0 %v2849
        %v2856 = vpop.xlane.xlu0 %2855
        %2857 = vadd.xlane.f32.xlu0 %v2850
        %v2858 = vpop.xlane.xlu0 %2857
        %v2859 = vmul.f32 %v2852, %v1331
        %v2860 = vmul.f32 %v2854, %v1331
        %v2861 = vmul.f32 %v2856, %v1331
        %v2862 = vmul.f32 %v2858, %v1331
        %v2863 = vsub.f32 %v2847, %v2859
        %v2864 = vsub.f32 %v2848, %v2860
        %v2865 = vsub.f32 %v2849, %v2861
        %v2866 = vsub.f32 %v2850, %v2862
        %v2867 = vmul.f32 %v2863, %v2863
        %v2868 = vmul.f32 %v2864, %v2864
        %v2869 = vmul.f32 %v2865, %v2865
        %v2870 = vmul.f32 %v2866, %v2866
        %2871 = vadd.xlane.f32.xlu0 %v2867
        %v2872 = vpop.xlane.xlu0 %2871
        %2873 = vadd.xlane.f32.xlu0 %v2868
        %v2874 = vpop.xlane.xlu0 %2873
        %2875 = vadd.xlane.f32.xlu0 %v2869
        %v2876 = vpop.xlane.xlu0 %2875
        %2877 = vadd.xlane.f32.xlu0 %v2870
        %v2878 = vpop.xlane.xlu0 %2877
        %v2879 = vmul.f32 %v2872, %v1331
        %v2880 = vmul.f32 %v2874, %v1331
        %v2881 = vmul.f32 %v2876, %v1331
        %v2882 = vmul.f32 %v2878, %v1331
        %v2883 = vadd.f32 %v2879, 1e-06
        %v2884 = vadd.f32 %v2880, 1e-06
        %v2885 = vadd.f32 %v2881, 1e-06
        %v2886 = vadd.f32 %v2882, 1e-06
        %v2887 = vrsqrt.pop %v2883
        %v2888 = vrsqrt.pop %v2884
        %v2889 = vrsqrt.pop %v2885
        %v2890 = vrsqrt.pop %v2886
        %v2891 = vmul.f32 %v2863, %v2887
        %v2892 = vmul.f32 %v2864, %v2888
        %v2893 = vmul.f32 %v2865, %v2889
        %v2894 = vmul.f32 %v2866, %v2890
        %v2895 = vlaneseq
        %v2896 = vshrl.u32 %v2895, 7
        %v2897 = vsub.s32 0, %v2896
        %v2898 = vrot.slane %v1287, %v2897
        %v2899 = vmul.f32 %v2891, %v2898
        %v2900 = vmul.f32 %v2892, %v2898
        %v2901 = vmul.f32 %v2893, %v2898
        %v2902 = vmul.f32 %v2894, %v2898
        %v2903 = vlaneseq
        %v2904 = vshrl.u32 %v2903, 7
        %v2905 = vsub.s32 1, %v2904
        %v2906 = vrot.slane %v1287, %v2905
        %v2907 = vadd.f32 %v2899, %v2906
        %v2908 = vadd.f32 %v2900, %v2906
        %v2909 = vadd.f32 %v2901, %v2906
        %v2910 = vadd.f32 %v2902, %v2906
        %v2911 = vpack.c.bf16 %v2908, %v2907
        %v2912 = vpack.c.bf16 %v2910, %v2909
        %v2913 = vld [vmem:[%s1043] sm:$0xf]
        %v2914 = vld [vmem:[%s1043 + $0x4] sm:$0xf]
        %v2915 = vld [vmem:[%s1043 + $0x8] sm:$0xf]
        %v2916 = vld [vmem:[%s1043 + $0xc] sm:$0xf]
        %v2917 = vld [vmem:[%s1043 + $0x10] sm:$0xf]
        %v2918 = vld [vmem:[%s1043 + $0x14] sm:$0xf]
        %v2919 = vld [vmem:[%s1043 + $0x18] sm:$0xf]
        %v2920 = vld [vmem:[%s1043 + $0x1c] sm:$0xf]
        %v2921 = vld [vmem:[%s1043 + $0x20] sm:$0xf]
        %v2922 = vld [vmem:[%s1043 + $0x24] sm:$0xf]
        %v2923 = vld [vmem:[%s1043 + $0x28] sm:$0xf]
        %v2924 = vld [vmem:[%s1043 + $0x2c] sm:$0xf]
        %v2925 = vld [vmem:[%s1043 + $0x30] sm:$0xf]
        %v2926 = vld [vmem:[%s1043 + $0x34] sm:$0xf]
        %v2927 = vld [vmem:[%s1043 + $0x38] sm:$0xf]
        %v2928 = vld [vmem:[%s1043 + $0x3c] sm:$0xf]
        %v2929 = vld [vmem:[%s1051] sm:$0x1]
        %v2931 = vlaneseq
        %v2932 = vshrl.u32 %v2931, 7
        %v2933 = vsub.s32 0, %v2932
        %v2934 = vrot.slane %v2929, %v2933
        %v2952 = vunpack.c.l.b16 %v2913
        %v2953 = vunpack.c.l.b16 %v2914
        %v2954 = vunpack.c.l.b16 %v2915
        %v2955 = vunpack.c.l.b16 %v2916
        %v2956 = vunpack.c.l.b16 %v2917
        %v2957 = vunpack.c.l.b16 %v2918
        %v2958 = vunpack.c.l.b16 %v2919
        %v2959 = vunpack.c.l.b16 %v2920
        %v2960 = vunpack.c.l.b16 %v2921
        %v2961 = vunpack.c.l.b16 %v2922
        %v2962 = vunpack.c.l.b16 %v2923
        %v2963 = vunpack.c.l.b16 %v2924
        %v2964 = vunpack.c.l.b16 %v2925
        %v2965 = vunpack.c.l.b16 %v2926
        %v2966 = vunpack.c.l.b16 %v2927
        %v2967 = vunpack.c.l.b16 %v2928
        %v2968 = vpack.c.b16 %v2953, %v2952
        %v2969 = vpack.c.b16 %v2955, %v2954
        %v2970 = vpack.c.b16 %v2957, %v2956
        %v2971 = vpack.c.b16 %v2959, %v2958
        %v2972 = vpack.c.b16 %v2961, %v2960
        %v2973 = vpack.c.b16 %v2963, %v2962
        %v2974 = vpack.c.b16 %v2965, %v2964
        %v2975 = vpack.c.b16 %v2967, %v2966
        %2984 = vmatprep.subr.bf16.mxu0 0
        %2985 = vmatpush1.bf16.msra.mxu0 %v2975
        %2986 = vmatprep.subr.bf16.mxu0 0
        %2987 = vmatpush1.bf16.msra.mxu0 %v2974
        %2988 = vmatprep.subr.bf16.mxu0 0
        %2989 = vmatpush1.bf16.msra.mxu0 %v2973
        %2990 = vmatprep.subr.bf16.mxu0 0
        %2991 = vmatpush1.bf16.msra.mxu0 %v2972
        %2992 = vmatprep.subr.bf16.mxu0 0
        %2993 = vmatpush1.bf16.msra.mxu0 %v2971
        %2994 = vmatprep.subr.bf16.mxu0 0
        %2995 = vmatpush1.bf16.msra.mxu0 %v2970
        %2996 = vmatprep.subr.bf16.mxu0 0
        %2997 = vmatpush1.bf16.msra.mxu0 %v2969
        %2998 = vmatprep.subr.bf16.mxu0 0
        %2999 = vmatpush1.bf16.msra.mxu0 %v2968
        %3000 = vmatprep.subr.bf16.mxu0 0
        %3001 = vmatpush2.bf16.msra.mxu0 0
        %3002 = vmatprep.subr.bf16.mxu0 0
        %3003 = vmatpush2.bf16.msra.mxu0 0
        %3004 = vmatprep.subr.bf16.mxu0 0
        %3005 = vmatpush2.bf16.msra.mxu0 0
        %3006 = vmatprep.subr.bf16.mxu0 0
        %3007 = vmatpush2.bf16.msra.mxu0 0
        %3008 = vmatprep.subr.bf16.mxu0 0
        %3009 = vmatpush2.bf16.msra.mxu0 0
        %3010 = vmatprep.subr.bf16.mxu0 0
        %3011 = vmatpush2.bf16.msra.mxu0 0
        %3012 = vmatprep.subr.bf16.mxu0 0
        %3013 = vmatpush2.bf16.msra.mxu0 0
        %3014 = vmatprep.subr.bf16.mxu0 0
        %3015 = vmatpush2.bf16.msra.mxu0 0
        %3016 = vmatprep.mubr.bf16.mxu0 0
        %3017 = vmatmul.mubr.bf16.gmra.mxu0 %v2911
        %v3018 = vpop.f32.mrf.mxu0
        %v3019 = vadd.f32 %v2934, %v3018
        %v3020 = vpop.f32.mrf.mxu0
        %v3021 = vpop.f32.mrf.mxu0
        %v3022 = vadd.f32 %v2934, %v3021
        %v3023 = vpop.f32.mrf.mxu0
        %3024 = vmatprep.mubr.bf16.mxu0 0
        %3025 = vmatmul.mubr.bf16.gmra.mxu0 %v2912
        %v3026 = vpop.f32.mrf.mxu0
        %v3027 = vadd.f32 %v2934, %v3026
        %v3028 = vpop.f32.mrf.mxu0
        %v3029 = vpop.f32.mrf.mxu0
        %v3030 = vadd.f32 %v2934, %v3029
        %v3031 = vpop.f32.mrf.mxu0
        %3032 = vdwg.mxu0
        %v3033 = vld [vmem:[%s990] sm:$0xf]
        %v3034 = vld [vmem:[%s990 + $0x4] sm:$0xf]
        %v3035 = vld [vmem:[%s990 + $0x8] sm:$0xf]
        %v3036 = vld [vmem:[%s990 + $0xc] sm:$0xf]
        %v3037 = vld [vmem:[%s1060] sm:$0xff]
        %v3038 = vld [vmem:[%s1060 + $0x8] sm:$0xff]
        %v3039 = vld [vmem:[%s1060 + $0x10] sm:$0xff]
        %v3040 = vld [vmem:[%s1060 + $0x18] sm:$0xff]
        %v3041 = vld [vmem:[%s1060 + $0x20] sm:$0xff]
        %v3042 = vld [vmem:[%s1060 + $0x28] sm:$0xff]
        %v3043 = vld [vmem:[%s1060 + $0x30] sm:$0xff]
        %v3044 = vld [vmem:[%s1060 + $0x38] sm:$0xff]
        %v3045 = vld [vmem:[%s1060 + $0x40] sm:$0xff]
        %v3046 = vld [vmem:[%s1060 + $0x48] sm:$0xff]
        %v3047 = vld [vmem:[%s1060 + $0x50] sm:$0xff]
        %v3048 = vld [vmem:[%s1060 + $0x58] sm:$0xff]
        %v3049 = vld [vmem:[%s1060 + $0x60] sm:$0xff]
        %v3050 = vld [vmem:[%s1060 + $0x68] sm:$0xff]
        %v3051 = vld [vmem:[%s1060 + $0x70] sm:$0xff]
        %v3052 = vld [vmem:[%s1060 + $0x78] sm:$0xff]
        %v3053 = vld [vmem:[%s1251] sm:$0x3]
        %v3055 = vlaneseq
        %v3056 = vshrl.u32 %v3055, 7
        %v3057 = vsub.s32 0, %v3056
        %v3058 = vrot.slane %v3053, %v3057
        %v3059 = vlaneseq
        %v3060 = vshrl.u32 %v3059, 7
        %v3061 = vsub.s32 1, %v3060
        %v3062 = vrot.slane %v3053, %v3061
        %v3069 = vunpack.c.l.b16 %v3033
        %v3070 = vunpack.c.l.b16 %v3034
        %v3071 = vunpack.c.l.b16 %v3035
        %v3072 = vunpack.c.l.b16 %v3036
        %v3073 = vpack.c.b16 %v3070, %v3069
        %v3074 = vpack.c.b16 %v3072, %v3071
        %v3093 = vunpack.c.l.b16 %v3037
        %v3094 = vunpack.c.h.b16 %v3037
        %v3095 = vunpack.c.l.b16 %v3038
        %v3096 = vunpack.c.h.b16 %v3038
        %v3097 = vunpack.c.l.b16 %v3039
        %v3098 = vunpack.c.h.b16 %v3039
        %v3099 = vunpack.c.l.b16 %v3040
        %v3100 = vunpack.c.h.b16 %v3040
        %v3101 = vunpack.c.l.b16 %v3041
        %v3102 = vunpack.c.h.b16 %v3041
        %v3103 = vunpack.c.l.b16 %v3042
        %v3104 = vunpack.c.h.b16 %v3042
        %v3105 = vunpack.c.l.b16 %v3043
        %v3106 = vunpack.c.h.b16 %v3043
        %v3107 = vunpack.c.l.b16 %v3044
        %v3108 = vunpack.c.h.b16 %v3044
        %v3109 = vunpack.c.l.b16 %v3045
        %v3110 = vunpack.c.h.b16 %v3045
        %v3111 = vunpack.c.l.b16 %v3046
        %v3112 = vunpack.c.h.b16 %v3046
        %v3113 = vunpack.c.l.b16 %v3047
        %v3114 = vunpack.c.h.b16 %v3047
        %v3115 = vunpack.c.l.b16 %v3048
        %v3116 = vunpack.c.h.b16 %v3048
        %v3117 = vunpack.c.l.b16 %v3049
        %v3118 = vunpack.c.h.b16 %v3049
        %v3119 = vunpack.c.l.b16 %v3050
        %v3120 = vunpack.c.h.b16 %v3050
        %v3121 = vunpack.c.l.b16 %v3051
        %v3122 = vunpack.c.h.b16 %v3051
        %v3123 = vunpack.c.l.b16 %v3052
        %v3124 = vunpack.c.h.b16 %v3052
        %v3125 = vpack.c.b16 %v3095, %v3093
        %v3126 = vpack.c.b16 %v3096, %v3094
        %v3127 = vpack.c.b16 %v3099, %v3097
        %v3128 = vpack.c.b16 %v3100, %v3098
        %v3129 = vpack.c.b16 %v3103, %v3101
        %v3130 = vpack.c.b16 %v3104, %v3102
        %v3131 = vpack.c.b16 %v3107, %v3105
        %v3132 = vpack.c.b16 %v3108, %v3106
        %v3133 = vpack.c.b16 %v3111, %v3109
        %v3134 = vpack.c.b16 %v3112, %v3110
        %v3135 = vpack.c.b16 %v3115, %v3113
        %v3136 = vpack.c.b16 %v3116, %v3114
        %v3137 = vpack.c.b16 %v3119, %v3117
        %v3138 = vpack.c.b16 %v3120, %v3118
        %v3139 = vpack.c.b16 %v3123, %v3121
        %v3140 = vpack.c.b16 %v3124, %v3122
        %3157 = vmatprep.subr.bf16.mxu0 %v3140
        %3158 = vmatpush1.bf16.msra.mxu0 %v3139
        %3159 = vmatprep.subr.bf16.mxu0 %v3138
        %3160 = vmatpush1.bf16.msra.mxu0 %v3137
        %3161 = vmatprep.subr.bf16.mxu0 %v3136
        %3162 = vmatpush1.bf16.msra.mxu0 %v3135
        %3163 = vmatprep.subr.bf16.mxu0 %v3134
        %3164 = vmatpush1.bf16.msra.mxu0 %v3133
        %3165 = vmatprep.subr.bf16.mxu0 %v3132
        %3166 = vmatpush1.bf16.msra.mxu0 %v3131
        %3167 = vmatprep.subr.bf16.mxu0 %v3130
        %3168 = vmatpush1.bf16.msra.mxu0 %v3129
        %3169 = vmatprep.subr.bf16.mxu0 %v3128
        %3170 = vmatpush1.bf16.msra.mxu0 %v3127
        %3171 = vmatprep.subr.bf16.mxu0 %v3126
        %3172 = vmatpush1.bf16.msra.mxu0 %v3125
        %3173 = vmatprep.subr.bf16.mxu0 0
        %3174 = vmatpush2.bf16.msra.mxu0 0
        %3175 = vmatprep.subr.bf16.mxu0 0
        %3176 = vmatpush2.bf16.msra.mxu0 0
        %3177 = vmatprep.subr.bf16.mxu0 0
        %3178 = vmatpush2.bf16.msra.mxu0 0
        %3179 = vmatprep.subr.bf16.mxu0 0
        %3180 = vmatpush2.bf16.msra.mxu0 0
        %3181 = vmatprep.subr.bf16.mxu0 0
        %3182 = vmatpush2.bf16.msra.mxu0 0
        %3183 = vmatprep.subr.bf16.mxu0 0
        %3184 = vmatpush2.bf16.msra.mxu0 0
        %3185 = vmatprep.subr.bf16.mxu0 0
        %3186 = vmatpush2.bf16.msra.mxu0 0
        %3187 = vmatprep.subr.bf16.mxu0 0
        %3188 = vmatpush2.bf16.msra.mxu0 0
        %3189 = vmatprep.mubr.bf16.mxu0 0
        %3190 = vmatmul.mubr.bf16.gmra.mxu0 %v3073
        %v3191 = vpop.f32.mrf.mxu0
        %v3192 = vadd.f32 %v3058, %v3191
        %v3193 = vpop.f32.mrf.mxu0
        %v3194 = vadd.f32 %v3062, %v3193
        %v3195 = vpop.f32.mrf.mxu0
        %v3196 = vadd.f32 %v3058, %v3195
        %v3197 = vpop.f32.mrf.mxu0
        %v3198 = vadd.f32 %v3062, %v3197
        %3199 = vmatprep.mubr.bf16.mxu0 0
        %3200 = vmatmul.mubr.bf16.gmra.mxu0 %v3074
        %v3201 = vpop.f32.mrf.mxu0
        %v3202 = vadd.f32 %v3058, %v3201
        %v3203 = vpop.f32.mrf.mxu0
        %v3204 = vadd.f32 %v3062, %v3203
        %v3205 = vpop.f32.mrf.mxu0
        %v3206 = vadd.f32 %v3058, %v3205
        %v3207 = vpop.f32.mrf.mxu0
        %v3208 = vadd.f32 %v3062, %v3207
        %3209 = vdwg.mxu0
        %v3210 = vpack.c.bf16 %v3022, %v3019
        %3212 = vrot.lane.b32.xlu0 %v3210, 96
        %v3213 = vpop.permute.xlu0 %3212
        %3214 = vrot.lane.b32.xlu0 %v3210, 64
        %v3215 = vpop.permute.xlu0 %3214
        %3216 = vrot.lane.b32.xlu0 %v3210, 32
        %v3217 = vpop.permute.xlu0 %3216
        %v3218 = vpack.c.bf16 %v3196, %v3192
        %3220 = vrot.lane.b32.xlu0 %v3218, 96
        %v3221 = vpop.permute.xlu0 %3220
        %3222 = vrot.lane.b32.xlu0 %v3218, 64
        %v3223 = vpop.permute.xlu0 %3222
        %3224 = vrot.lane.b32.xlu0 %v3218, 32
        %v3225 = vpop.permute.xlu0 %3224
        %v3226 = vpack.c.bf16 %v3198, %v3194
        %3228 = vrot.lane.b32.xlu0 %v3226, 96
        %v3229 = vpop.permute.xlu0 %3228
        %3231 = vrot.lane.b32.xlu0 %v3226, 64
        %v3232 = vpop.permute.xlu0 %3231
        %3234 = vrot.lane.b32.xlu0 %v3226, 32
        %v3235 = vpop.permute.xlu0 %3234
        %v3238 = vsel %vm1710, %v3210, 0
        %v3241 = vsel %vm1710, %v3218, 0
        %3243 = vmatprep.subr.bf16.mxu0 0
        %3244 = vmatpush1.bf16.xpose.msra.mxu0 0
        %3245 = vmatprep.subr.bf16.mxu0 0
        %3246 = vmatpush1.bf16.xpose.msra.mxu0 0
        %3247 = vmatprep.subr.bf16.mxu0 0
        %3248 = vmatpush1.bf16.xpose.msra.mxu0 0
        %3249 = vmatprep.subr.bf16.mxu0 0
        %3250 = vmatpush1.bf16.xpose.msra.mxu0 0
        %3251 = vmatprep.subr.bf16.mxu0 0
        %3252 = vmatpush1.bf16.xpose.msra.mxu0 0
        %3253 = vmatprep.subr.bf16.mxu0 0
        %3254 = vmatpush1.bf16.xpose.msra.mxu0 0
        %3255 = vmatprep.subr.bf16.mxu0 0
        %3256 = vmatpush1.bf16.xpose.msra.mxu0 0
        %3257 = vmatprep.subr.bf16.mxu0 0
        %3258 = vmatpush1.bf16.xpose.msra.mxu0 %v3241
        %3259 = vmatprep.subr.bf16.mxu0 0
        %3260 = vmatpush2.bf16.xpose.msra.mxu0 0
        %3261 = vmatprep.subr.bf16.mxu0 0
        %3262 = vmatpush2.bf16.xpose.msra.mxu0 0
        %3263 = vmatprep.subr.bf16.mxu0 0
        %3264 = vmatpush2.bf16.xpose.msra.mxu0 0
        %3265 = vmatprep.subr.bf16.mxu0 0
        %3266 = vmatpush2.bf16.xpose.msra.mxu0 0
        %3267 = vmatprep.subr.bf16.mxu0 0
        %3268 = vmatpush2.bf16.xpose.msra.mxu0 0
        %3269 = vmatprep.subr.bf16.mxu0 0
        %3270 = vmatpush2.bf16.xpose.msra.mxu0 0
        %3271 = vmatprep.subr.bf16.mxu0 0
        %3272 = vmatpush2.bf16.xpose.msra.mxu0 0
        %3273 = vmatprep.subr.bf16.mxu0 0
        %3274 = vmatpush2.bf16.xpose.msra.mxu0 0
        %3275 = vmatprep.mubr.bf16.mxu0 0
        %3276 = vmatmul.mubr.bf16.gmra.mxu0 %v3238
        %v3277 = vpop.f32.mrf.mxu0
        %v3278 = vadd.f32 0.0, %v3277
        %v3279 = vpop.f32.mrf.mxu0
        %v3280 = vpop.f32.mrf.mxu0
        %v3281 = vadd.f32 0.0, %v3280
        %v3282 = vpop.f32.mrf.mxu0
        %3283 = vdwg.mxu0
        %v3285 = vsel %vm1710, %v3213, 0
        %v3288 = vsel %vm1710, %v3221, 0
        %3290 = vmatprep.subr.bf16.mxu0 0
        %3291 = vmatpush1.bf16.xpose.msra.mxu0 0
        %3292 = vmatprep.subr.bf16.mxu0 0
        %3293 = vmatpush1.bf16.xpose.msra.mxu0 0
        %3294 = vmatprep.subr.bf16.mxu0 0
        %3295 = vmatpush1.bf16.xpose.msra.mxu0 0
        %3296 = vmatprep.subr.bf16.mxu0 0
        %3297 = vmatpush1.bf16.xpose.msra.mxu0 0
        %3298 = vmatprep.subr.bf16.mxu0 0
        %3299 = vmatpush1.bf16.xpose.msra.mxu0 0
        %3300 = vmatprep.subr.bf16.mxu0 0
        %3301 = vmatpush1.bf16.xpose.msra.mxu0 0
        %3302 = vmatprep.subr.bf16.mxu0 0
        %3303 = vmatpush1.bf16.xpose.msra.mxu0 0
        %3304 = vmatprep.subr.bf16.mxu0 0
        %3305 = vmatpush1.bf16.xpose.msra.mxu0 %v3288
        %3306 = vmatprep.subr.bf16.mxu0 0
        %3307 = vmatpush2.bf16.xpose.msra.mxu0 0
        %3308 = vmatprep.subr.bf16.mxu0 0
        %3309 = vmatpush2.bf16.xpose.msra.mxu0 0
        %3310 = vmatprep.subr.bf16.mxu0 0
        %3311 = vmatpush2.bf16.xpose.msra.mxu0 0
        %3312 = vmatprep.subr.bf16.mxu0 0
        %3313 = vmatpush2.bf16.xpose.msra.mxu0 0
        %3314 = vmatprep.subr.bf16.mxu0 0
        %3315 = vmatpush2.bf16.xpose.msra.mxu0 0
        %3316 = vmatprep.subr.bf16.mxu0 0
        %3317 = vmatpush2.bf16.xpose.msra.mxu0 0
        %3318 = vmatprep.subr.bf16.mxu0 0
        %3319 = vmatpush2.bf16.xpose.msra.mxu0 0
        %3320 = vmatprep.subr.bf16.mxu0 0
        %3321 = vmatpush2.bf16.xpose.msra.mxu0 0
        %3322 = vmatprep.mubr.bf16.mxu0 0
        %3323 = vmatmul.mubr.bf16.gmra.mxu0 %v3285
        %v3324 = vpop.f32.mrf.mxu0
        %v3325 = vadd.f32 0.0, %v3324
        %v3326 = vpop.f32.mrf.mxu0
        %v3327 = vpop.f32.mrf.mxu0
        %v3328 = vadd.f32 0.0, %v3327
        %v3329 = vpop.f32.mrf.mxu0
        %3330 = vdwg.mxu0
        %v3332 = vsel %vm1710, %v3215, 0
        %v3335 = vsel %vm1710, %v3223, 0
        %3337 = vmatprep.subr.bf16.mxu0 0
        %3338 = vmatpush1.bf16.xpose.msra.mxu0 0
        %3339 = vmatprep.subr.bf16.mxu0 0
        %3340 = vmatpush1.bf16.xpose.msra.mxu0 0
        %3341 = vmatprep.subr.bf16.mxu0 0
        %3342 = vmatpush1.bf16.xpose.msra.mxu0 0
        %3343 = vmatprep.subr.bf16.mxu0 0
        %3344 = vmatpush1.bf16.xpose.msra.mxu0 0
        %3345 = vmatprep.subr.bf16.mxu0 0
        %3346 = vmatpush1.bf16.xpose.msra.mxu0 0
        %3347 = vmatprep.subr.bf16.mxu0 0
        %3348 = vmatpush1.bf16.xpose.msra.mxu0 0
        %3349 = vmatprep.subr.bf16.mxu0 0
        %3350 = vmatpush1.bf16.xpose.msra.mxu0 0
        %3351 = vmatprep.subr.bf16.mxu0 0
        %3352 = vmatpush1.bf16.xpose.msra.mxu0 %v3335
        %3353 = vmatprep.subr.bf16.mxu0 0
        %3354 = vmatpush2.bf16.xpose.msra.mxu0 0
        %3355 = vmatprep.subr.bf16.mxu0 0
        %3356 = vmatpush2.bf16.xpose.msra.mxu0 0
        %3357 = vmatprep.subr.bf16.mxu0 0
        %3358 = vmatpush2.bf16.xpose.msra.mxu0 0
        %3359 = vmatprep.subr.bf16.mxu0 0
        %3360 = vmatpush2.bf16.xpose.msra.mxu0 0
        %3361 = vmatprep.subr.bf16.mxu0 0
        %3362 = vmatpush2.bf16.xpose.msra.mxu0 0
        %3363 = vmatprep.subr.bf16.mxu0 0
        %3364 = vmatpush2.bf16.xpose.msra.mxu0 0
        %3365 = vmatprep.subr.bf16.mxu0 0
        %3366 = vmatpush2.bf16.xpose.msra.mxu0 0
        %3367 = vmatprep.subr.bf16.mxu0 0
        %3368 = vmatpush2.bf16.xpose.msra.mxu0 0
        %3369 = vmatprep.mubr.bf16.mxu0 0
        %3370 = vmatmul.mubr.bf16.gmra.mxu0 %v3332
        %v3371 = vpop.f32.mrf.mxu0
        %v3372 = vadd.f32 0.0, %v3371
        %v3373 = vpop.f32.mrf.mxu0
        %v3374 = vpop.f32.mrf.mxu0
        %v3375 = vadd.f32 0.0, %v3374
        %v3376 = vpop.f32.mrf.mxu0
        %3377 = vdwg.mxu0
        %v3379 = vsel %vm1710, %v3217, 0
        %v3382 = vsel %vm1710, %v3225, 0
        %3384 = vmatprep.subr.bf16.mxu0 0
        %3385 = vmatpush1.bf16.xpose.msra.mxu0 0
        %3386 = vmatprep.subr.bf16.mxu0 0
        %3387 = vmatpush1.bf16.xpose.msra.mxu0 0
        %3388 = vmatprep.subr.bf16.mxu0 0
        %3389 = vmatpush1.bf16.xpose.msra.mxu0 0
        %3390 = vmatprep.subr.bf16.mxu0 0
        %3391 = vmatpush1.bf16.xpose.msra.mxu0 0
        %3392 = vmatprep.subr.bf16.mxu0 0
        %3393 = vmatpush1.bf16.xpose.msra.mxu0 0
        %3394 = vmatprep.subr.bf16.mxu0 0
        %3395 = vmatpush1.bf16.xpose.msra.mxu0 0
        %3396 = vmatprep.subr.bf16.mxu0 0
        %3397 = vmatpush1.bf16.xpose.msra.mxu0 0
        %3398 = vmatprep.subr.bf16.mxu0 0
        %3399 = vmatpush1.bf16.xpose.msra.mxu0 %v3382
        %3400 = vmatprep.subr.bf16.mxu0 0
        %3401 = vmatpush2.bf16.xpose.msra.mxu0 0
        %3402 = vmatprep.subr.bf16.mxu0 0
        %3403 = vmatpush2.bf16.xpose.msra.mxu0 0
        %3404 = vmatprep.subr.bf16.mxu0 0
        %3405 = vmatpush2.bf16.xpose.msra.mxu0 0
        %3406 = vmatprep.subr.bf16.mxu0 0
        %3407 = vmatpush2.bf16.xpose.msra.mxu0 0
        %3408 = vmatprep.subr.bf16.mxu0 0
        %3409 = vmatpush2.bf16.xpose.msra.mxu0 0
        %3410 = vmatprep.subr.bf16.mxu0 0
        %3411 = vmatpush2.bf16.xpose.msra.mxu0 0
        %3412 = vmatprep.subr.bf16.mxu0 0
        %3413 = vmatpush2.bf16.xpose.msra.mxu0 0
        %3414 = vmatprep.subr.bf16.mxu0 0
        %3415 = vmatpush2.bf16.xpose.msra.mxu0 0
        %3416 = vmatprep.mubr.bf16.mxu0 0
        %3417 = vmatmul.mubr.bf16.gmra.mxu0 %v3379
        %v3418 = vpop.f32.mrf.mxu0
        %v3419 = vadd.f32 0.0, %v3418
        %v3420 = vpop.f32.mrf.mxu0
        %v3421 = vpop.f32.mrf.mxu0
        %v3422 = vadd.f32 0.0, %v3421
        %v3423 = vpop.f32.mrf.mxu0
        %3424 = vdwg.mxu0
        %v3425 = vmul.f32 %v3278, 0.17677669
        %v3426 = vmul.f32 %v3281, 0.17677669
        %v3427 = vmul.f32 %v3325, 0.17677669
        %v3428 = vmul.f32 %v3328, 0.17677669
        %v3429 = vmul.f32 %v3372, 0.17677669
        %v3430 = vmul.f32 %v3375, 0.17677669
        %v3431 = vmul.f32 %v3419, 0.17677669
        %v3432 = vmul.f32 %v3422, 0.17677669
        %v3434 = vlaneseq
        %v3435 = vshrl.u32 %v3434, 7
        %v3436 = vsub.s32 0, %v3435
        %v3437 = vrot.slane %v1321, %v3436
        %v3439 = vadd.f32 %v3425, %v3437
        %v3440 = vadd.f32 %v3426, %v3437
        %v3441 = vadd.f32 %v3427, %v3437
        %v3442 = vadd.f32 %v3428, %v3437
        %v3443 = vadd.f32 %v3429, %v3437
        %v3444 = vadd.f32 %v3430, %v3437
        %v3445 = vadd.f32 %v3431, %v3437
        %v3446 = vadd.f32 %v3432, %v3437
        %v3447 = vsel %vm1915, %v3439, -inf
        %3448 = vmax.xlane.f32.xlu0 %v3447
        %v3449 = vpop.xlane.xlu0 %3448
        %v3450 = vsel %vm1915, %v3440, -inf
        %3451 = vmax.xlane.f32.xlu0 %v3450
        %v3452 = vpop.xlane.xlu0 %3451
        %v3453 = vsel %vm1915, %v3441, -inf
        %3454 = vmax.xlane.f32.xlu0 %v3453
        %v3455 = vpop.xlane.xlu0 %3454
        %v3456 = vsel %vm1915, %v3442, -inf
        %3457 = vmax.xlane.f32.xlu0 %v3456
        %v3458 = vpop.xlane.xlu0 %3457
        %v3459 = vsel %vm1915, %v3443, -inf
        %3460 = vmax.xlane.f32.xlu0 %v3459
        %v3461 = vpop.xlane.xlu0 %3460
        %v3462 = vsel %vm1915, %v3444, -inf
        %3463 = vmax.xlane.f32.xlu0 %v3462
        %v3464 = vpop.xlane.xlu0 %3463
        %v3465 = vsel %vm1915, %v3445, -inf
        %3466 = vmax.xlane.f32.xlu0 %v3465
        %v3467 = vpop.xlane.xlu0 %3466
        %v3468 = vsel %vm1915, %v3446, -inf
        %3469 = vmax.xlane.f32.xlu0 %v3468
        %v3470 = vpop.xlane.xlu0 %3469
        %v3471 = vsub.f32 %v3439, %v3449
        %v3472 = vsub.f32 %v3440, %v3452
        %v3473 = vsub.f32 %v3441, %v3455
        %v3474 = vsub.f32 %v3442, %v3458
        %v3475 = vsub.f32 %v3443, %v3461
        %v3476 = vsub.f32 %v3444, %v3464
        %v3477 = vsub.f32 %v3445, %v3467
        %v3478 = vsub.f32 %v3446, %v3470
        %v3479 = vmul.f32 %v3471, 1.442695
        %v3480 = vpow.pop %v3479
        %v3481 = vmul.f32 %v3472, 1.442695
        %v3482 = vpow.pop %v3481
        %v3483 = vmul.f32 %v3473, 1.442695
        %v3484 = vpow.pop %v3483
        %v3485 = vmul.f32 %v3474, 1.442695
        %v3486 = vpow.pop %v3485
        %v3487 = vmul.f32 %v3475, 1.442695
        %v3488 = vpow.pop %v3487
        %v3489 = vmul.f32 %v3476, 1.442695
        %v3490 = vpow.pop %v3489
        %v3491 = vmul.f32 %v3477, 1.442695
        %v3492 = vpow.pop %v3491
        %v3493 = vmul.f32 %v3478, 1.442695
        %v3494 = vpow.pop %v3493
        %v3495 = vsel %vm1915, %v3480, 0.0
        %3496 = vadd.xlane.f32.xlu0 %v3495
        %v3497 = vpop.xlane.xlu0 %3496
        %v3498 = vsel %vm1915, %v3482, 0.0
        %3499 = vadd.xlane.f32.xlu0 %v3498
        %v3500 = vpop.xlane.xlu0 %3499
        %v3501 = vsel %vm1915, %v3484, 0.0
        %3502 = vadd.xlane.f32.xlu0 %v3501
        %v3503 = vpop.xlane.xlu0 %3502
        %v3504 = vsel %vm1915, %v3486, 0.0
        %3505 = vadd.xlane.f32.xlu0 %v3504
        %v3506 = vpop.xlane.xlu0 %3505
        %v3507 = vsel %vm1915, %v3488, 0.0
        %3508 = vadd.xlane.f32.xlu0 %v3507
        %v3509 = vpop.xlane.xlu0 %3508
        %v3510 = vsel %vm1915, %v3490, 0.0
        %3511 = vadd.xlane.f32.xlu0 %v3510
        %v3512 = vpop.xlane.xlu0 %3511
        %v3513 = vsel %vm1915, %v3492, 0.0
        %3514 = vadd.xlane.f32.xlu0 %v3513
        %v3515 = vpop.xlane.xlu0 %3514
        %v3516 = vsel %vm1915, %v3494, 0.0
        %3517 = vadd.xlane.f32.xlu0 %v3516
        %v3518 = vpop.xlane.xlu0 %3517
        %v3519 = vrcp.pop %v3497
        %v3520 = vrcp.pop %v3500
        %v3521 = vrcp.pop %v3503
        %v3522 = vrcp.pop %v3506
        %v3523 = vrcp.pop %v3509
        %v3524 = vrcp.pop %v3512
        %v3525 = vrcp.pop %v3515
        %v3526 = vrcp.pop %v3518
        %v3527 = vmul.f32 %v3480, %v3519
        %v3528 = vmul.f32 %v3482, %v3520
        %v3529 = vmul.f32 %v3484, %v3521
        %v3530 = vmul.f32 %v3486, %v3522
        %v3531 = vmul.f32 %v3488, %v3523
        %v3532 = vmul.f32 %v3490, %v3524
        %v3533 = vmul.f32 %v3492, %v3525
        %v3534 = vmul.f32 %v3494, %v3526
        %v3535 = vpack.c.bf16 %v3528, %v3527
        %v3536 = vpack.c.bf16 %v3530, %v3529
        %v3537 = vpack.c.bf16 %v3532, %v3531
        %v3538 = vpack.c.bf16 %v3534, %v3533
        %v3540 = vsel %vm1915, %v3535, 0
        %3542 = vmatprep.subr.bf16.mxu0 0
        %3543 = vmatpush1.bf16.msra.mxu0 0
        %3544 = vmatprep.subr.bf16.mxu0 0
        %3545 = vmatpush1.bf16.msra.mxu0 0
        %3546 = vmatprep.subr.bf16.mxu0 0
        %3547 = vmatpush1.bf16.msra.mxu0 0
        %3548 = vmatprep.subr.bf16.mxu0 0
        %3549 = vmatpush1.bf16.msra.mxu0 0
        %3550 = vmatprep.subr.bf16.mxu0 0
        %3551 = vmatpush1.bf16.msra.mxu0 0
        %3552 = vmatprep.subr.bf16.mxu0 0
        %3553 = vmatpush1.bf16.msra.mxu0 0
        %3554 = vmatprep.subr.bf16.mxu0 0
        %3555 = vmatpush1.bf16.msra.mxu0 0
        %3556 = vmatprep.subr.bf16.mxu0 0
        %3557 = vmatpush1.bf16.msra.mxu0 %v3226
        %3558 = vmatprep.subr.bf16.mxu0 0
        %3559 = vmatpush2.bf16.msra.mxu0 0
        %3560 = vmatprep.subr.bf16.mxu0 0
        %3561 = vmatpush2.bf16.msra.mxu0 0
        %3562 = vmatprep.subr.bf16.mxu0 0
        %3563 = vmatpush2.bf16.msra.mxu0 0
        %3564 = vmatprep.subr.bf16.mxu0 0
        %3565 = vmatpush2.bf16.msra.mxu0 0
        %3566 = vmatprep.subr.bf16.mxu0 0
        %3567 = vmatpush2.bf16.msra.mxu0 0
        %3568 = vmatprep.subr.bf16.mxu0 0
        %3569 = vmatpush2.bf16.msra.mxu0 0
        %3570 = vmatprep.subr.bf16.mxu0 0
        %3571 = vmatpush2.bf16.msra.mxu0 0
        %3572 = vmatprep.subr.bf16.mxu0 0
        %3573 = vmatpush2.bf16.msra.mxu0 0
        %3574 = vmatprep.mubr.bf16.mxu0 0
        %3575 = vmatmul.mubr.bf16.gmra.mxu0 %v3540
        %v3576 = vpop.f32.mrf.mxu0
        %v3577 = vadd.f32 0.0, %v3576
        %v3578 = vpop.f32.mrf.mxu0
        %v3579 = vpop.f32.mrf.mxu0
        %v3580 = vadd.f32 0.0, %v3579
        %v3581 = vpop.f32.mrf.mxu0
        %3582 = vdwg.mxu0
        %v3584 = vsel %vm1915, %v3536, 0
        %3586 = vmatprep.subr.bf16.mxu0 0
        %3587 = vmatpush1.bf16.msra.mxu0 0
        %3588 = vmatprep.subr.bf16.mxu0 0
        %3589 = vmatpush1.bf16.msra.mxu0 0
        %3590 = vmatprep.subr.bf16.mxu0 0
        %3591 = vmatpush1.bf16.msra.mxu0 0
        %3592 = vmatprep.subr.bf16.mxu0 0
        %3593 = vmatpush1.bf16.msra.mxu0 0
        %3594 = vmatprep.subr.bf16.mxu0 0
        %3595 = vmatpush1.bf16.msra.mxu0 0
        %3596 = vmatprep.subr.bf16.mxu0 0
        %3597 = vmatpush1.bf16.msra.mxu0 0
        %3598 = vmatprep.subr.bf16.mxu0 0
        %3599 = vmatpush1.bf16.msra.mxu0 0
        %3600 = vmatprep.subr.bf16.mxu0 0
        %3601 = vmatpush1.bf16.msra.mxu0 %v3229
        %3602 = vmatprep.subr.bf16.mxu0 0
        %3603 = vmatpush2.bf16.msra.mxu0 0
        %3604 = vmatprep.subr.bf16.mxu0 0
        %3605 = vmatpush2.bf16.msra.mxu0 0
        %3606 = vmatprep.subr.bf16.mxu0 0
        %3607 = vmatpush2.bf16.msra.mxu0 0
        %3608 = vmatprep.subr.bf16.mxu0 0
        %3609 = vmatpush2.bf16.msra.mxu0 0
        %3610 = vmatprep.subr.bf16.mxu0 0
        %3611 = vmatpush2.bf16.msra.mxu0 0
        %3612 = vmatprep.subr.bf16.mxu0 0
        %3613 = vmatpush2.bf16.msra.mxu0 0
        %3614 = vmatprep.subr.bf16.mxu0 0
        %3615 = vmatpush2.bf16.msra.mxu0 0
        %3616 = vmatprep.subr.bf16.mxu0 0
        %3617 = vmatpush2.bf16.msra.mxu0 0
        %3618 = vmatprep.mubr.bf16.mxu0 0
        %3619 = vmatmul.mubr.bf16.gmra.mxu0 %v3584
        %v3620 = vpop.f32.mrf.mxu0
        %v3621 = vadd.f32 0.0, %v3620
        %v3622 = vpop.f32.mrf.mxu0
        %v3623 = vpop.f32.mrf.mxu0
        %v3624 = vadd.f32 0.0, %v3623
        %v3625 = vpop.f32.mrf.mxu0
        %3626 = vdwg.mxu0
        %v3628 = vsel %vm1915, %v3537, 0
        %3630 = vmatprep.subr.bf16.mxu0 0
        %3631 = vmatpush1.bf16.msra.mxu0 0
        %3632 = vmatprep.subr.bf16.mxu0 0
        %3633 = vmatpush1.bf16.msra.mxu0 0
        %3634 = vmatprep.subr.bf16.mxu0 0
        %3635 = vmatpush1.bf16.msra.mxu0 0
        %3636 = vmatprep.subr.bf16.mxu0 0
        %3637 = vmatpush1.bf16.msra.mxu0 0
        %3638 = vmatprep.subr.bf16.mxu0 0
        %3639 = vmatpush1.bf16.msra.mxu0 0
        %3640 = vmatprep.subr.bf16.mxu0 0
        %3641 = vmatpush1.bf16.msra.mxu0 0
        %3642 = vmatprep.subr.bf16.mxu0 0
        %3643 = vmatpush1.bf16.msra.mxu0 0
        %3644 = vmatprep.subr.bf16.mxu0 0
        %3645 = vmatpush1.bf16.msra.mxu0 %v3232
        %3646 = vmatprep.subr.bf16.mxu0 0
        %3647 = vmatpush2.bf16.msra.mxu0 0
        %3648 = vmatprep.subr.bf16.mxu0 0
        %3649 = vmatpush2.bf16.msra.mxu0 0
        %3650 = vmatprep.subr.bf16.mxu0 0
        %3651 = vmatpush2.bf16.msra.mxu0 0
        %3652 = vmatprep.subr.bf16.mxu0 0
        %3653 = vmatpush2.bf16.msra.mxu0 0
        %3654 = vmatprep.subr.bf16.mxu0 0
        %3655 = vmatpush2.bf16.msra.mxu0 0
        %3656 = vmatprep.subr.bf16.mxu0 0
        %3657 = vmatpush2.bf16.msra.mxu0 0
        %3658 = vmatprep.subr.bf16.mxu0 0
        %3659 = vmatpush2.bf16.msra.mxu0 0
        %3660 = vmatprep.subr.bf16.mxu0 0
        %3661 = vmatpush2.bf16.msra.mxu0 0
        %3662 = vmatprep.mubr.bf16.mxu0 0
        %3663 = vmatmul.mubr.bf16.gmra.mxu0 %v3628
        %v3664 = vpop.f32.mrf.mxu0
        %v3665 = vadd.f32 0.0, %v3664
        %v3666 = vpop.f32.mrf.mxu0
        %v3667 = vpop.f32.mrf.mxu0
        %v3668 = vadd.f32 0.0, %v3667
        %v3669 = vpop.f32.mrf.mxu0
        %3670 = vdwg.mxu0
        %v3672 = vsel %vm1915, %v3538, 0
        %3674 = vmatprep.subr.bf16.mxu0 0
        %3675 = vmatpush1.bf16.msra.mxu0 0
        %3676 = vmatprep.subr.bf16.mxu0 0
        %3677 = vmatpush1.bf16.msra.mxu0 0
        %3678 = vmatprep.subr.bf16.mxu0 0
        %3679 = vmatpush1.bf16.msra.mxu0 0
        %3680 = vmatprep.subr.bf16.mxu0 0
        %3681 = vmatpush1.bf16.msra.mxu0 0
        %3682 = vmatprep.subr.bf16.mxu0 0
        %3683 = vmatpush1.bf16.msra.mxu0 0
        %3684 = vmatprep.subr.bf16.mxu0 0
        %3685 = vmatpush1.bf16.msra.mxu0 0
        %3686 = vmatprep.subr.bf16.mxu0 0
        %3687 = vmatpush1.bf16.msra.mxu0 0
        %3688 = vmatprep.subr.bf16.mxu0 0
        %3689 = vmatpush1.bf16.msra.mxu0 %v3235
        %3690 = vmatprep.subr.bf16.mxu0 0
        %3691 = vmatpush2.bf16.msra.mxu0 0
        %3692 = vmatprep.subr.bf16.mxu0 0
        %3693 = vmatpush2.bf16.msra.mxu0 0
        %3694 = vmatprep.subr.bf16.mxu0 0
        %3695 = vmatpush2.bf16.msra.mxu0 0
        %3696 = vmatprep.subr.bf16.mxu0 0
        %3697 = vmatpush2.bf16.msra.mxu0 0
        %3698 = vmatprep.subr.bf16.mxu0 0
        %3699 = vmatpush2.bf16.msra.mxu0 0
        %3700 = vmatprep.subr.bf16.mxu0 0
        %3701 = vmatpush2.bf16.msra.mxu0 0
        %3702 = vmatprep.subr.bf16.mxu0 0
        %3703 = vmatpush2.bf16.msra.mxu0 0
        %3704 = vmatprep.subr.bf16.mxu0 0
        %3705 = vmatpush2.bf16.msra.mxu0 0
        %3706 = vmatprep.mubr.bf16.mxu0 0
        %3707 = vmatmul.mubr.bf16.gmra.mxu0 %v3672
        %v3708 = vpop.f32.mrf.mxu0
        %v3709 = vadd.f32 0.0, %v3708
        %v3710 = vpop.f32.mrf.mxu0
        %v3711 = vpop.f32.mrf.mxu0
        %v3712 = vadd.f32 0.0, %v3711
        %v3713 = vpop.f32.mrf.mxu0
        %3714 = vdwg.mxu0
        %v3715 = vpack.c.bf16 %v3580, %v3577
        %v3716 = vpack.c.bf16 %v3624, %v3621
        %v3717 = vpack.c.bf16 %v3668, %v3665
        %v3718 = vpack.c.bf16 %v3712, %v3709
        %3720 = vrot.lane.b32.xlu0 %v3716, 32
        %v3721 = vpop.permute.xlu0 %3720
        %3723 = vrot.lane.b32.xlu0 %v3717, 64
        %v3724 = vpop.permute.xlu0 %3723
        %3726 = vrot.lane.b32.xlu0 %v3718, 96
        %v3727 = vpop.permute.xlu0 %3726
        %v3730 = vsel %vm1710, %v3715, %v3721
        %v3732 = vsel %vm2200, %v3730, %v3724
        %v3734 = vsel %vm2203, %v3732, %v3727
        %v3736 = vpack.c.bf16 %v3030, %v3027
        %3738 = vrot.lane.b32.xlu0 %v3736, 96
        %v3739 = vpop.permute.xlu0 %3738
        %3740 = vrot.lane.b32.xlu0 %v3736, 64
        %v3741 = vpop.permute.xlu0 %3740
        %3742 = vrot.lane.b32.xlu0 %v3736, 32
        %v3743 = vpop.permute.xlu0 %3742
        %v3744 = vpack.c.bf16 %v3206, %v3202
        %3746 = vrot.lane.b32.xlu0 %v3744, 96
        %v3747 = vpop.permute.xlu0 %3746
        %3748 = vrot.lane.b32.xlu0 %v3744, 64
        %v3749 = vpop.permute.xlu0 %3748
        %3750 = vrot.lane.b32.xlu0 %v3744, 32
        %v3751 = vpop.permute.xlu0 %3750
        %v3752 = vpack.c.bf16 %v3208, %v3204
        %3754 = vrot.lane.b32.xlu0 %v3752, 96
        %v3755 = vpop.permute.xlu0 %3754
        %3757 = vrot.lane.b32.xlu0 %v3752, 64
        %v3758 = vpop.permute.xlu0 %3757
        %3760 = vrot.lane.b32.xlu0 %v3752, 32
        %v3761 = vpop.permute.xlu0 %3760
        %v3764 = vsel %vm1710, %v3736, 0
        %v3767 = vsel %vm1710, %v3744, 0
        %3769 = vmatprep.subr.bf16.mxu0 0
        %3770 = vmatpush1.bf16.xpose.msra.mxu0 0
        %3771 = vmatprep.subr.bf16.mxu0 0
        %3772 = vmatpush1.bf16.xpose.msra.mxu0 0
        %3773 = vmatprep.subr.bf16.mxu0 0
        %3774 = vmatpush1.bf16.xpose.msra.mxu0 0
        %3775 = vmatprep.subr.bf16.mxu0 0
        %3776 = vmatpush1.bf16.xpose.msra.mxu0 0
        %3777 = vmatprep.subr.bf16.mxu0 0
        %3778 = vmatpush1.bf16.xpose.msra.mxu0 0
        %3779 = vmatprep.subr.bf16.mxu0 0
        %3780 = vmatpush1.bf16.xpose.msra.mxu0 0
        %3781 = vmatprep.subr.bf16.mxu0 0
        %3782 = vmatpush1.bf16.xpose.msra.mxu0 0
        %3783 = vmatprep.subr.bf16.mxu0 0
        %3784 = vmatpush1.bf16.xpose.msra.mxu0 %v3767
        %3785 = vmatprep.subr.bf16.mxu0 0
        %3786 = vmatpush2.bf16.xpose.msra.mxu0 0
        %3787 = vmatprep.subr.bf16.mxu0 0
        %3788 = vmatpush2.bf16.xpose.msra.mxu0 0
        %3789 = vmatprep.subr.bf16.mxu0 0
        %3790 = vmatpush2.bf16.xpose.msra.mxu0 0
        %3791 = vmatprep.subr.bf16.mxu0 0
        %3792 = vmatpush2.bf16.xpose.msra.mxu0 0
        %3793 = vmatprep.subr.bf16.mxu0 0
        %3794 = vmatpush2.bf16.xpose.msra.mxu0 0
        %3795 = vmatprep.subr.bf16.mxu0 0
        %3796 = vmatpush2.bf16.xpose.msra.mxu0 0
        %3797 = vmatprep.subr.bf16.mxu0 0
        %3798 = vmatpush2.bf16.xpose.msra.mxu0 0
        %3799 = vmatprep.subr.bf16.mxu0 0
        %3800 = vmatpush2.bf16.xpose.msra.mxu0 0
        %3801 = vmatprep.mubr.bf16.mxu0 0
        %3802 = vmatmul.mubr.bf16.gmra.mxu0 %v3764
        %v3803 = vpop.f32.mrf.mxu0
        %v3804 = vadd.f32 0.0, %v3803
        %v3805 = vpop.f32.mrf.mxu0
        %v3806 = vpop.f32.mrf.mxu0
        %v3807 = vadd.f32 0.0, %v3806
        %v3808 = vpop.f32.mrf.mxu0
        %3809 = vdwg.mxu0
        %v3811 = vsel %vm1710, %v3739, 0
        %v3814 = vsel %vm1710, %v3747, 0
        %3816 = vmatprep.subr.bf16.mxu0 0
        %3817 = vmatpush1.bf16.xpose.msra.mxu0 0
        %3818 = vmatprep.subr.bf16.mxu0 0
        %3819 = vmatpush1.bf16.xpose.msra.mxu0 0
        %3820 = vmatprep.subr.bf16.mxu0 0
        %3821 = vmatpush1.bf16.xpose.msra.mxu0 0
        %3822 = vmatprep.subr.bf16.mxu0 0
        %3823 = vmatpush1.bf16.xpose.msra.mxu0 0
        %3824 = vmatprep.subr.bf16.mxu0 0
        %3825 = vmatpush1.bf16.xpose.msra.mxu0 0
        %3826 = vmatprep.subr.bf16.mxu0 0
        %3827 = vmatpush1.bf16.xpose.msra.mxu0 0
        %3828 = vmatprep.subr.bf16.mxu0 0
        %3829 = vmatpush1.bf16.xpose.msra.mxu0 0
        %3830 = vmatprep.subr.bf16.mxu0 0
        %3831 = vmatpush1.bf16.xpose.msra.mxu0 %v3814
        %3832 = vmatprep.subr.bf16.mxu0 0
        %3833 = vmatpush2.bf16.xpose.msra.mxu0 0
        %3834 = vmatprep.subr.bf16.mxu0 0
        %3835 = vmatpush2.bf16.xpose.msra.mxu0 0
        %3836 = vmatprep.subr.bf16.mxu0 0
        %3837 = vmatpush2.bf16.xpose.msra.mxu0 0
        %3838 = vmatprep.subr.bf16.mxu0 0
        %3839 = vmatpush2.bf16.xpose.msra.mxu0 0
        %3840 = vmatprep.subr.bf16.mxu0 0
        %3841 = vmatpush2.bf16.xpose.msra.mxu0 0
        %3842 = vmatprep.subr.bf16.mxu0 0
        %3843 = vmatpush2.bf16.xpose.msra.mxu0 0
        %3844 = vmatprep.subr.bf16.mxu0 0
        %3845 = vmatpush2.bf16.xpose.msra.mxu0 0
        %3846 = vmatprep.subr.bf16.mxu0 0
        %3847 = vmatpush2.bf16.xpose.msra.mxu0 0
        %3848 = vmatprep.mubr.bf16.mxu0 0
        %3849 = vmatmul.mubr.bf16.gmra.mxu0 %v3811
        %v3850 = vpop.f32.mrf.mxu0
        %v3851 = vadd.f32 0.0, %v3850
        %v3852 = vpop.f32.mrf.mxu0
        %v3853 = vpop.f32.mrf.mxu0
        %v3854 = vadd.f32 0.0, %v3853
        %v3855 = vpop.f32.mrf.mxu0
        %3856 = vdwg.mxu0
        %v3858 = vsel %vm1710, %v3741, 0
        %v3861 = vsel %vm1710, %v3749, 0
        %3863 = vmatprep.subr.bf16.mxu0 0
        %3864 = vmatpush1.bf16.xpose.msra.mxu0 0
        %3865 = vmatprep.subr.bf16.mxu0 0
        %3866 = vmatpush1.bf16.xpose.msra.mxu0 0
        %3867 = vmatprep.subr.bf16.mxu0 0
        %3868 = vmatpush1.bf16.xpose.msra.mxu0 0
        %3869 = vmatprep.subr.bf16.mxu0 0
        %3870 = vmatpush1.bf16.xpose.msra.mxu0 0
        %3871 = vmatprep.subr.bf16.mxu0 0
        %3872 = vmatpush1.bf16.xpose.msra.mxu0 0
        %3873 = vmatprep.subr.bf16.mxu0 0
        %3874 = vmatpush1.bf16.xpose.msra.mxu0 0
        %3875 = vmatprep.subr.bf16.mxu0 0
        %3876 = vmatpush1.bf16.xpose.msra.mxu0 0
        %3877 = vmatprep.subr.bf16.mxu0 0
        %3878 = vmatpush1.bf16.xpose.msra.mxu0 %v3861
        %3879 = vmatprep.subr.bf16.mxu0 0
        %3880 = vmatpush2.bf16.xpose.msra.mxu0 0
        %3881 = vmatprep.subr.bf16.mxu0 0
        %3882 = vmatpush2.bf16.xpose.msra.mxu0 0
        %3883 = vmatprep.subr.bf16.mxu0 0
        %3884 = vmatpush2.bf16.xpose.msra.mxu0 0
        %3885 = vmatprep.subr.bf16.mxu0 0
        %3886 = vmatpush2.bf16.xpose.msra.mxu0 0
        %3887 = vmatprep.subr.bf16.mxu0 0
        %3888 = vmatpush2.bf16.xpose.msra.mxu0 0
        %3889 = vmatprep.subr.bf16.mxu0 0
        %3890 = vmatpush2.bf16.xpose.msra.mxu0 0
        %3891 = vmatprep.subr.bf16.mxu0 0
        %3892 = vmatpush2.bf16.xpose.msra.mxu0 0
        %3893 = vmatprep.subr.bf16.mxu0 0
        %3894 = vmatpush2.bf16.xpose.msra.mxu0 0
        %3895 = vmatprep.mubr.bf16.mxu0 0
        %3896 = vmatmul.mubr.bf16.gmra.mxu0 %v3858
        %v3897 = vpop.f32.mrf.mxu0
        %v3898 = vadd.f32 0.0, %v3897
        %v3899 = vpop.f32.mrf.mxu0
        %v3900 = vpop.f32.mrf.mxu0
        %v3901 = vadd.f32 0.0, %v3900
        %v3902 = vpop.f32.mrf.mxu0
        %3903 = vdwg.mxu0
        %v3905 = vsel %vm1710, %v3743, 0
        %v3908 = vsel %vm1710, %v3751, 0
        %3910 = vmatprep.subr.bf16.mxu0 0
        %3911 = vmatpush1.bf16.xpose.msra.mxu0 0
        %3912 = vmatprep.subr.bf16.mxu0 0
        %3913 = vmatpush1.bf16.xpose.msra.mxu0 0
        %3914 = vmatprep.subr.bf16.mxu0 0
        %3915 = vmatpush1.bf16.xpose.msra.mxu0 0
        %3916 = vmatprep.subr.bf16.mxu0 0
        %3917 = vmatpush1.bf16.xpose.msra.mxu0 0
        %3918 = vmatprep.subr.bf16.mxu0 0
        %3919 = vmatpush1.bf16.xpose.msra.mxu0 0
        %3920 = vmatprep.subr.bf16.mxu0 0
        %3921 = vmatpush1.bf16.xpose.msra.mxu0 0
        %3922 = vmatprep.subr.bf16.mxu0 0
        %3923 = vmatpush1.bf16.xpose.msra.mxu0 0
        %3924 = vmatprep.subr.bf16.mxu0 0
        %3925 = vmatpush1.bf16.xpose.msra.mxu0 %v3908
        %3926 = vmatprep.subr.bf16.mxu0 0
        %3927 = vmatpush2.bf16.xpose.msra.mxu0 0
        %3928 = vmatprep.subr.bf16.mxu0 0
        %3929 = vmatpush2.bf16.xpose.msra.mxu0 0
        %3930 = vmatprep.subr.bf16.mxu0 0
        %3931 = vmatpush2.bf16.xpose.msra.mxu0 0
        %3932 = vmatprep.subr.bf16.mxu0 0
        %3933 = vmatpush2.bf16.xpose.msra.mxu0 0
        %3934 = vmatprep.subr.bf16.mxu0 0
        %3935 = vmatpush2.bf16.xpose.msra.mxu0 0
        %3936 = vmatprep.subr.bf16.mxu0 0
        %3937 = vmatpush2.bf16.xpose.msra.mxu0 0
        %3938 = vmatprep.subr.bf16.mxu0 0
        %3939 = vmatpush2.bf16.xpose.msra.mxu0 0
        %3940 = vmatprep.subr.bf16.mxu0 0
        %3941 = vmatpush2.bf16.xpose.msra.mxu0 0
        %3942 = vmatprep.mubr.bf16.mxu0 0
        %3943 = vmatmul.mubr.bf16.gmra.mxu0 %v3905
        %v3944 = vpop.f32.mrf.mxu0
        %v3945 = vadd.f32 0.0, %v3944
        %v3946 = vpop.f32.mrf.mxu0
        %v3947 = vpop.f32.mrf.mxu0
        %v3948 = vadd.f32 0.0, %v3947
        %v3949 = vpop.f32.mrf.mxu0
        %3950 = vdwg.mxu0
        %v3951 = vmul.f32 %v3804, 0.17677669
        %v3952 = vmul.f32 %v3807, 0.17677669
        %v3953 = vmul.f32 %v3851, 0.17677669
        %v3954 = vmul.f32 %v3854, 0.17677669
        %v3955 = vmul.f32 %v3898, 0.17677669
        %v3956 = vmul.f32 %v3901, 0.17677669
        %v3957 = vmul.f32 %v3945, 0.17677669
        %v3958 = vmul.f32 %v3948, 0.17677669
        %v3960 = vlaneseq
        %v3961 = vshrl.u32 %v3960, 7
        %v3962 = vsub.s32 0, %v3961
        %v3963 = vrot.slane %v1322, %v3962
        %v3965 = vadd.f32 %v3951, %v3963
        %v3966 = vadd.f32 %v3952, %v3963
        %v3967 = vadd.f32 %v3953, %v3963
        %v3968 = vadd.f32 %v3954, %v3963
        %v3969 = vadd.f32 %v3955, %v3963
        %v3970 = vadd.f32 %v3956, %v3963
        %v3971 = vadd.f32 %v3957, %v3963
        %v3972 = vadd.f32 %v3958, %v3963
        %v3973 = vsel %vm1915, %v3965, -inf
        %3974 = vmax.xlane.f32.xlu0 %v3973
        %v3975 = vpop.xlane.xlu0 %3974
        %v3976 = vsel %vm1915, %v3966, -inf
        %3977 = vmax.xlane.f32.xlu0 %v3976
        %v3978 = vpop.xlane.xlu0 %3977
        %v3979 = vsel %vm1915, %v3967, -inf
        %3980 = vmax.xlane.f32.xlu0 %v3979
        %v3981 = vpop.xlane.xlu0 %3980
        %v3982 = vsel %vm1915, %v3968, -inf
        %3983 = vmax.xlane.f32.xlu0 %v3982
        %v3984 = vpop.xlane.xlu0 %3983
        %v3985 = vsel %vm1915, %v3969, -inf
        %3986 = vmax.xlane.f32.xlu0 %v3985
        %v3987 = vpop.xlane.xlu0 %3986
        %v3988 = vsel %vm1915, %v3970, -inf
        %3989 = vmax.xlane.f32.xlu0 %v3988
        %v3990 = vpop.xlane.xlu0 %3989
        %v3991 = vsel %vm1915, %v3971, -inf
        %3992 = vmax.xlane.f32.xlu0 %v3991
        %v3993 = vpop.xlane.xlu0 %3992
        %v3994 = vsel %vm1915, %v3972, -inf
        %3995 = vmax.xlane.f32.xlu0 %v3994
        %v3996 = vpop.xlane.xlu0 %3995
        %v3997 = vsub.f32 %v3965, %v3975
        %v3998 = vsub.f32 %v3966, %v3978
        %v3999 = vsub.f32 %v3967, %v3981
        %v4000 = vsub.f32 %v3968, %v3984
        %v4001 = vsub.f32 %v3969, %v3987
        %v4002 = vsub.f32 %v3970, %v3990
        %v4003 = vsub.f32 %v3971, %v3993
        %v4004 = vsub.f32 %v3972, %v3996
        %v4005 = vmul.f32 %v3997, 1.442695
        %v4006 = vpow.pop %v4005
        %v4007 = vmul.f32 %v3998, 1.442695
        %v4008 = vpow.pop %v4007
        %v4009 = vmul.f32 %v3999, 1.442695
        %v4010 = vpow.pop %v4009
        %v4011 = vmul.f32 %v4000, 1.442695
        %v4012 = vpow.pop %v4011
        %v4013 = vmul.f32 %v4001, 1.442695
        %v4014 = vpow.pop %v4013
        %v4015 = vmul.f32 %v4002, 1.442695
        %v4016 = vpow.pop %v4015
        %v4017 = vmul.f32 %v4003, 1.442695
        %v4018 = vpow.pop %v4017
        %v4019 = vmul.f32 %v4004, 1.442695
        %v4020 = vpow.pop %v4019
        %v4021 = vsel %vm1915, %v4006, 0.0
        %4022 = vadd.xlane.f32.xlu0 %v4021
        %v4023 = vpop.xlane.xlu0 %4022
        %v4024 = vsel %vm1915, %v4008, 0.0
        %4025 = vadd.xlane.f32.xlu0 %v4024
        %v4026 = vpop.xlane.xlu0 %4025
        %v4027 = vsel %vm1915, %v4010, 0.0
        %4028 = vadd.xlane.f32.xlu0 %v4027
        %v4029 = vpop.xlane.xlu0 %4028
        %v4030 = vsel %vm1915, %v4012, 0.0
        %4031 = vadd.xlane.f32.xlu0 %v4030
        %v4032 = vpop.xlane.xlu0 %4031
        %v4033 = vsel %vm1915, %v4014, 0.0
        %4034 = vadd.xlane.f32.xlu0 %v4033
        %v4035 = vpop.xlane.xlu0 %4034
        %v4036 = vsel %vm1915, %v4016, 0.0
        %4037 = vadd.xlane.f32.xlu0 %v4036
        %v4038 = vpop.xlane.xlu0 %4037
        %v4039 = vsel %vm1915, %v4018, 0.0
        %4040 = vadd.xlane.f32.xlu0 %v4039
        %v4041 = vpop.xlane.xlu0 %4040
        %v4042 = vsel %vm1915, %v4020, 0.0
        %4043 = vadd.xlane.f32.xlu0 %v4042
        %v4044 = vpop.xlane.xlu0 %4043
        %v4045 = vrcp.pop %v4023
        %v4046 = vrcp.pop %v4026
        %v4047 = vrcp.pop %v4029
        %v4048 = vrcp.pop %v4032
        %v4049 = vrcp.pop %v4035
        %v4050 = vrcp.pop %v4038
        %v4051 = vrcp.pop %v4041
        %v4052 = vrcp.pop %v4044
        %v4053 = vmul.f32 %v4006, %v4045
        %v4054 = vmul.f32 %v4008, %v4046
        %v4055 = vmul.f32 %v4010, %v4047
        %v4056 = vmul.f32 %v4012, %v4048
        %v4057 = vmul.f32 %v4014, %v4049
        %v4058 = vmul.f32 %v4016, %v4050
        %v4059 = vmul.f32 %v4018, %v4051
        %v4060 = vmul.f32 %v4020, %v4052
        %v4061 = vpack.c.bf16 %v4054, %v4053
        %v4062 = vpack.c.bf16 %v4056, %v4055
        %v4063 = vpack.c.bf16 %v4058, %v4057
        %v4064 = vpack.c.bf16 %v4060, %v4059
        %v4066 = vsel %vm1915, %v4061, 0
        %4068 = vmatprep.subr.bf16.mxu0 0
        %4069 = vmatpush1.bf16.msra.mxu0 0
        %4070 = vmatprep.subr.bf16.mxu0 0
        %4071 = vmatpush1.bf16.msra.mxu0 0
        %4072 = vmatprep.subr.bf16.mxu0 0
        %4073 = vmatpush1.bf16.msra.mxu0 0
        %4074 = vmatprep.subr.bf16.mxu0 0
        %4075 = vmatpush1.bf16.msra.mxu0 0
        %4076 = vmatprep.subr.bf16.mxu0 0
        %4077 = vmatpush1.bf16.msra.mxu0 0
        %4078 = vmatprep.subr.bf16.mxu0 0
        %4079 = vmatpush1.bf16.msra.mxu0 0
        %4080 = vmatprep.subr.bf16.mxu0 0
        %4081 = vmatpush1.bf16.msra.mxu0 0
        %4082 = vmatprep.subr.bf16.mxu0 0
        %4083 = vmatpush1.bf16.msra.mxu0 %v3752
        %4084 = vmatprep.subr.bf16.mxu0 0
        %4085 = vmatpush2.bf16.msra.mxu0 0
        %4086 = vmatprep.subr.bf16.mxu0 0
        %4087 = vmatpush2.bf16.msra.mxu0 0
        %4088 = vmatprep.subr.bf16.mxu0 0
        %4089 = vmatpush2.bf16.msra.mxu0 0
        %4090 = vmatprep.subr.bf16.mxu0 0
        %4091 = vmatpush2.bf16.msra.mxu0 0
        %4092 = vmatprep.subr.bf16.mxu0 0
        %4093 = vmatpush2.bf16.msra.mxu0 0
        %4094 = vmatprep.subr.bf16.mxu0 0
        %4095 = vmatpush2.bf16.msra.mxu0 0
        %4096 = vmatprep.subr.bf16.mxu0 0
        %4097 = vmatpush2.bf16.msra.mxu0 0
        %4098 = vmatprep.subr.bf16.mxu0 0
        %4099 = vmatpush2.bf16.msra.mxu0 0
        %4100 = vmatprep.mubr.bf16.mxu0 0
        %4101 = vmatmul.mubr.bf16.gmra.mxu0 %v4066
        %v4102 = vpop.f32.mrf.mxu0
        %v4103 = vadd.f32 0.0, %v4102
        %v4104 = vpop.f32.mrf.mxu0
        %v4105 = vpop.f32.mrf.mxu0
        %v4106 = vadd.f32 0.0, %v4105
        %v4107 = vpop.f32.mrf.mxu0
        %4108 = vdwg.mxu0
        %v4110 = vsel %vm1915, %v4062, 0
        %4112 = vmatprep.subr.bf16.mxu0 0
        %4113 = vmatpush1.bf16.msra.mxu0 0
        %4114 = vmatprep.subr.bf16.mxu0 0
        %4115 = vmatpush1.bf16.msra.mxu0 0
        %4116 = vmatprep.subr.bf16.mxu0 0
        %4117 = vmatpush1.bf16.msra.mxu0 0
        %4118 = vmatprep.subr.bf16.mxu0 0
        %4119 = vmatpush1.bf16.msra.mxu0 0
        %4120 = vmatprep.subr.bf16.mxu0 0
        %4121 = vmatpush1.bf16.msra.mxu0 0
        %4122 = vmatprep.subr.bf16.mxu0 0
        %4123 = vmatpush1.bf16.msra.mxu0 0
        %4124 = vmatprep.subr.bf16.mxu0 0
        %4125 = vmatpush1.bf16.msra.mxu0 0
        %4126 = vmatprep.subr.bf16.mxu0 0
        %4127 = vmatpush1.bf16.msra.mxu0 %v3755
        %4128 = vmatprep.subr.bf16.mxu0 0
        %4129 = vmatpush2.bf16.msra.mxu0 0
        %4130 = vmatprep.subr.bf16.mxu0 0
        %4131 = vmatpush2.bf16.msra.mxu0 0
        %4132 = vmatprep.subr.bf16.mxu0 0
        %4133 = vmatpush2.bf16.msra.mxu0 0
        %4134 = vmatprep.subr.bf16.mxu0 0
        %4135 = vmatpush2.bf16.msra.mxu0 0
        %4136 = vmatprep.subr.bf16.mxu0 0
        %4137 = vmatpush2.bf16.msra.mxu0 0
        %4138 = vmatprep.subr.bf16.mxu0 0
        %4139 = vmatpush2.bf16.msra.mxu0 0
        %4140 = vmatprep.subr.bf16.mxu0 0
        %4141 = vmatpush2.bf16.msra.mxu0 0
        %4142 = vmatprep.subr.bf16.mxu0 0
        %4143 = vmatpush2.bf16.msra.mxu0 0
        %4144 = vmatprep.mubr.bf16.mxu0 0
        %4145 = vmatmul.mubr.bf16.gmra.mxu0 %v4110
        %v4146 = vpop.f32.mrf.mxu0
        %v4147 = vadd.f32 0.0, %v4146
        %v4148 = vpop.f32.mrf.mxu0
        %v4149 = vpop.f32.mrf.mxu0
        %v4150 = vadd.f32 0.0, %v4149
        %v4151 = vpop.f32.mrf.mxu0
        %4152 = vdwg.mxu0
        %v4154 = vsel %vm1915, %v4063, 0
        %4156 = vmatprep.subr.bf16.mxu0 0
        %4157 = vmatpush1.bf16.msra.mxu0 0
        %4158 = vmatprep.subr.bf16.mxu0 0
        %4159 = vmatpush1.bf16.msra.mxu0 0
        %4160 = vmatprep.subr.bf16.mxu0 0
        %4161 = vmatpush1.bf16.msra.mxu0 0
        %4162 = vmatprep.subr.bf16.mxu0 0
        %4163 = vmatpush1.bf16.msra.mxu0 0
        %4164 = vmatprep.subr.bf16.mxu0 0
        %4165 = vmatpush1.bf16.msra.mxu0 0
        %4166 = vmatprep.subr.bf16.mxu0 0
        %4167 = vmatpush1.bf16.msra.mxu0 0
        %4168 = vmatprep.subr.bf16.mxu0 0
        %4169 = vmatpush1.bf16.msra.mxu0 0
        %4170 = vmatprep.subr.bf16.mxu0 0
        %4171 = vmatpush1.bf16.msra.mxu0 %v3758
        %4172 = vmatprep.subr.bf16.mxu0 0
        %4173 = vmatpush2.bf16.msra.mxu0 0
        %4174 = vmatprep.subr.bf16.mxu0 0
        %4175 = vmatpush2.bf16.msra.mxu0 0
        %4176 = vmatprep.subr.bf16.mxu0 0
        %4177 = vmatpush2.bf16.msra.mxu0 0
        %4178 = vmatprep.subr.bf16.mxu0 0
        %4179 = vmatpush2.bf16.msra.mxu0 0
        %4180 = vmatprep.subr.bf16.mxu0 0
        %4181 = vmatpush2.bf16.msra.mxu0 0
        %4182 = vmatprep.subr.bf16.mxu0 0
        %4183 = vmatpush2.bf16.msra.mxu0 0
        %4184 = vmatprep.subr.bf16.mxu0 0
        %4185 = vmatpush2.bf16.msra.mxu0 0
        %4186 = vmatprep.subr.bf16.mxu0 0
        %4187 = vmatpush2.bf16.msra.mxu0 0
        %4188 = vmatprep.mubr.bf16.mxu0 0
        %4189 = vmatmul.mubr.bf16.gmra.mxu0 %v4154
        %v4190 = vpop.f32.mrf.mxu0
        %v4191 = vadd.f32 0.0, %v4190
        %v4192 = vpop.f32.mrf.mxu0
        %v4193 = vpop.f32.mrf.mxu0
        %v4194 = vadd.f32 0.0, %v4193
        %v4195 = vpop.f32.mrf.mxu0
        %4196 = vdwg.mxu0
        %v4198 = vsel %vm1915, %v4064, 0
        %4200 = vmatprep.subr.bf16.mxu0 0
        %4201 = vmatpush1.bf16.msra.mxu0 0
        %4202 = vmatprep.subr.bf16.mxu0 0
        %4203 = vmatpush1.bf16.msra.mxu0 0
        %4204 = vmatprep.subr.bf16.mxu0 0
        %4205 = vmatpush1.bf16.msra.mxu0 0
        %4206 = vmatprep.subr.bf16.mxu0 0
        %4207 = vmatpush1.bf16.msra.mxu0 0
        %4208 = vmatprep.subr.bf16.mxu0 0
        %4209 = vmatpush1.bf16.msra.mxu0 0
        %4210 = vmatprep.subr.bf16.mxu0 0
        %4211 = vmatpush1.bf16.msra.mxu0 0
        %4212 = vmatprep.subr.bf16.mxu0 0
        %4213 = vmatpush1.bf16.msra.mxu0 0
        %4214 = vmatprep.subr.bf16.mxu0 0
        %4215 = vmatpush1.bf16.msra.mxu0 %v3761
        %4216 = vmatprep.subr.bf16.mxu0 0
        %4217 = vmatpush2.bf16.msra.mxu0 0
        %4218 = vmatprep.subr.bf16.mxu0 0
        %4219 = vmatpush2.bf16.msra.mxu0 0
        %4220 = vmatprep.subr.bf16.mxu0 0
        %4221 = vmatpush2.bf16.msra.mxu0 0
        %4222 = vmatprep.subr.bf16.mxu0 0
        %4223 = vmatpush2.bf16.msra.mxu0 0
        %4224 = vmatprep.subr.bf16.mxu0 0
        %4225 = vmatpush2.bf16.msra.mxu0 0
        %4226 = vmatprep.subr.bf16.mxu0 0
        %4227 = vmatpush2.bf16.msra.mxu0 0
        %4228 = vmatprep.subr.bf16.mxu0 0
        %4229 = vmatpush2.bf16.msra.mxu0 0
        %4230 = vmatprep.subr.bf16.mxu0 0
        %4231 = vmatpush2.bf16.msra.mxu0 0
        %4232 = vmatprep.mubr.bf16.mxu0 0
        %4233 = vmatmul.mubr.bf16.gmra.mxu0 %v4198
        %v4234 = vpop.f32.mrf.mxu0
        %v4235 = vadd.f32 0.0, %v4234
        %v4236 = vpop.f32.mrf.mxu0
        %v4237 = vpop.f32.mrf.mxu0
        %v4238 = vadd.f32 0.0, %v4237
        %v4239 = vpop.f32.mrf.mxu0
        %4240 = vdwg.mxu0
        %v4241 = vpack.c.bf16 %v4106, %v4103
        %v4242 = vpack.c.bf16 %v4150, %v4147
        %v4243 = vpack.c.bf16 %v4194, %v4191
        %v4244 = vpack.c.bf16 %v4238, %v4235
        %4246 = vrot.lane.b32.xlu0 %v4242, 32
        %v4247 = vpop.permute.xlu0 %4246
        %4249 = vrot.lane.b32.xlu0 %v4243, 64
        %v4250 = vpop.permute.xlu0 %4249
        %4252 = vrot.lane.b32.xlu0 %v4244, 96
        %v4253 = vpop.permute.xlu0 %4252
        %v4256 = vsel %vm1710, %v4241, %v4247
        %v4258 = vsel %vm2200, %v4256, %v4250
        %v4260 = vsel %vm2203, %v4258, %v4253
        %v4262 = vld [vmem:[%s1069] sm:$0xf]
        %v4263 = vld [vmem:[%s1069 + $0x4] sm:$0xf]
        %v4264 = vld [vmem:[%s1069 + $0x8] sm:$0xf]
        %v4265 = vld [vmem:[%s1069 + $0xc] sm:$0xf]
        %v4266 = vld [vmem:[%s1069 + $0x10] sm:$0xf]
        %v4267 = vld [vmem:[%s1069 + $0x14] sm:$0xf]
        %v4268 = vld [vmem:[%s1069 + $0x18] sm:$0xf]
        %v4269 = vld [vmem:[%s1069 + $0x1c] sm:$0xf]
        %v4270 = vld [vmem:[%s1069 + $0x20] sm:$0xf]
        %v4271 = vld [vmem:[%s1069 + $0x24] sm:$0xf]
        %v4272 = vld [vmem:[%s1069 + $0x28] sm:$0xf]
        %v4273 = vld [vmem:[%s1069 + $0x2c] sm:$0xf]
        %v4274 = vld [vmem:[%s1069 + $0x30] sm:$0xf]
        %v4275 = vld [vmem:[%s1069 + $0x34] sm:$0xf]
        %v4276 = vld [vmem:[%s1069 + $0x38] sm:$0xf]
        %v4277 = vld [vmem:[%s1069 + $0x3c] sm:$0xf]
        %v4278 = vld [vmem:[%s1254] sm:$0x1]
        %v4280 = vlaneseq
        %v4281 = vshrl.u32 %v4280, 7
        %v4282 = vsub.s32 0, %v4281
        %v4283 = vrot.slane %v4278, %v4282
        %v4301 = vunpack.c.l.b16 %v4262
        %v4302 = vunpack.c.l.b16 %v4263
        %v4303 = vunpack.c.l.b16 %v4264
        %v4304 = vunpack.c.l.b16 %v4265
        %v4305 = vunpack.c.l.b16 %v4266
        %v4306 = vunpack.c.l.b16 %v4267
        %v4307 = vunpack.c.l.b16 %v4268
        %v4308 = vunpack.c.l.b16 %v4269
        %v4309 = vunpack.c.l.b16 %v4270
        %v4310 = vunpack.c.l.b16 %v4271
        %v4311 = vunpack.c.l.b16 %v4272
        %v4312 = vunpack.c.l.b16 %v4273
        %v4313 = vunpack.c.l.b16 %v4274
        %v4314 = vunpack.c.l.b16 %v4275
        %v4315 = vunpack.c.l.b16 %v4276
        %v4316 = vunpack.c.l.b16 %v4277
        %v4317 = vpack.c.b16 %v4302, %v4301
        %v4318 = vpack.c.b16 %v4304, %v4303
        %v4319 = vpack.c.b16 %v4306, %v4305
        %v4320 = vpack.c.b16 %v4308, %v4307
        %v4321 = vpack.c.b16 %v4310, %v4309
        %v4322 = vpack.c.b16 %v4312, %v4311
        %v4323 = vpack.c.b16 %v4314, %v4313
        %v4324 = vpack.c.b16 %v4316, %v4315
        %4333 = vmatprep.subr.bf16.mxu0 0
        %4334 = vmatpush1.bf16.msra.mxu0 %v4324
        %4335 = vmatprep.subr.bf16.mxu0 0
        %4336 = vmatpush1.bf16.msra.mxu0 %v4323
        %4337 = vmatprep.subr.bf16.mxu0 0
        %4338 = vmatpush1.bf16.msra.mxu0 %v4322
        %4339 = vmatprep.subr.bf16.mxu0 0
        %4340 = vmatpush1.bf16.msra.mxu0 %v4321
        %4341 = vmatprep.subr.bf16.mxu0 0
        %4342 = vmatpush1.bf16.msra.mxu0 %v4320
        %4343 = vmatprep.subr.bf16.mxu0 0
        %4344 = vmatpush1.bf16.msra.mxu0 %v4319
        %4345 = vmatprep.subr.bf16.mxu0 0
        %4346 = vmatpush1.bf16.msra.mxu0 %v4318
        %4347 = vmatprep.subr.bf16.mxu0 0
        %4348 = vmatpush1.bf16.msra.mxu0 %v4317
        %4349 = vmatprep.subr.bf16.mxu0 0
        %4350 = vmatpush2.bf16.msra.mxu0 0
        %4351 = vmatprep.subr.bf16.mxu0 0
        %4352 = vmatpush2.bf16.msra.mxu0 0
        %4353 = vmatprep.subr.bf16.mxu0 0
        %4354 = vmatpush2.bf16.msra.mxu0 0
        %4355 = vmatprep.subr.bf16.mxu0 0
        %4356 = vmatpush2.bf16.msra.mxu0 0
        %4357 = vmatprep.subr.bf16.mxu0 0
        %4358 = vmatpush2.bf16.msra.mxu0 0
        %4359 = vmatprep.subr.bf16.mxu0 0
        %4360 = vmatpush2.bf16.msra.mxu0 0
        %4361 = vmatprep.subr.bf16.mxu0 0
        %4362 = vmatpush2.bf16.msra.mxu0 0
        %4363 = vmatprep.subr.bf16.mxu0 0
        %4364 = vmatpush2.bf16.msra.mxu0 0
        %4365 = vmatprep.mubr.bf16.mxu0 0
        %4366 = vmatmul.mubr.bf16.gmra.mxu0 %v3734
        %v4367 = vpop.f32.mrf.mxu0
        %v4368 = vadd.f32 %v4283, %v4367
        %v4369 = vpop.f32.mrf.mxu0
        %v4370 = vpop.f32.mrf.mxu0
        %v4371 = vadd.f32 %v4283, %v4370
        %v4372 = vpop.f32.mrf.mxu0
        %4373 = vmatprep.mubr.bf16.mxu0 0
        %4374 = vmatmul.mubr.bf16.gmra.mxu0 %v4260
        %v4375 = vpop.f32.mrf.mxu0
        %v4376 = vadd.f32 %v4283, %v4375
        %v4377 = vpop.f32.mrf.mxu0
        %v4378 = vpop.f32.mrf.mxu0
        %v4379 = vadd.f32 %v4283, %v4378
        %v4380 = vpop.f32.mrf.mxu0
        %4381 = vdwg.mxu0
        %v4384 = vunpack.c.l.b16 %v3535
        %v4385 = vunpack.c.h.b16 %v3535
        %v4386 = vunpack.c.l.b16 %v4061
        %v4387 = vunpack.c.h.b16 %v4061
        %v4388 = vpack.c.b16 %v4384, %v4384
        %v4389 = vpack.c.b16 %v4385, %v4385
        %v4390 = vpack.c.b16 %v4386, %v4386
        %v4391 = vpack.c.b16 %v4387, %v4387
        %vm4396 = vcmask 125952
        %4397 = vst.msk [vmem:[%s1228] sm:$0xf] %vm4396, %v4388
        %4398 = vst.msk [vmem:[%s1228 + $0x4] sm:$0xf] %vm4396, %v4389
        %4399 = vst.msk [vmem:[%s1228 + $0x8] sm:$0xf] %vm4396, %v4390
        %4400 = vst.msk [vmem:[%s1228 + $0xc] sm:$0xf] %vm4396, %v4391
        %v4401 = vadd.f32 %v4368, %v2847
        %v4402 = vadd.f32 %v4371, %v2848
        %v4403 = vadd.f32 %v4376, %v2849
        %v4404 = vadd.f32 %v4379, %v2850
        %4405 = vadd.xlane.f32.xlu0 %v4401
        %v4406 = vpop.xlane.xlu0 %4405
        %4407 = vadd.xlane.f32.xlu0 %v4402
        %v4408 = vpop.xlane.xlu0 %4407
        %4409 = vadd.xlane.f32.xlu0 %v4403
        %v4410 = vpop.xlane.xlu0 %4409
        %4411 = vadd.xlane.f32.xlu0 %v4404
        %v4412 = vpop.xlane.xlu0 %4411
        %v4413 = vmul.f32 %v4406, %v1331
        %v4414 = vmul.f32 %v4408, %v1331
        %v4415 = vmul.f32 %v4410, %v1331
        %v4416 = vmul.f32 %v4412, %v1331
        %v4417 = vsub.f32 %v4401, %v4413
        %v4418 = vsub.f32 %v4402, %v4414
        %v4419 = vsub.f32 %v4403, %v4415
        %v4420 = vsub.f32 %v4404, %v4416
        %v4421 = vmul.f32 %v4417, %v4417
        %v4422 = vmul.f32 %v4418, %v4418
        %v4423 = vmul.f32 %v4419, %v4419
        %v4424 = vmul.f32 %v4420, %v4420
        %4425 = vadd.xlane.f32.xlu0 %v4421
        %v4426 = vpop.xlane.xlu0 %4425
        %4427 = vadd.xlane.f32.xlu0 %v4422
        %v4428 = vpop.xlane.xlu0 %4427
        %4429 = vadd.xlane.f32.xlu0 %v4423
        %v4430 = vpop.xlane.xlu0 %4429
        %4431 = vadd.xlane.f32.xlu0 %v4424
        %v4432 = vpop.xlane.xlu0 %4431
        %v4433 = vmul.f32 %v4426, %v1331
        %v4434 = vmul.f32 %v4428, %v1331
        %v4435 = vmul.f32 %v4430, %v1331
        %v4436 = vmul.f32 %v4432, %v1331
        %v4437 = vadd.f32 %v4433, 1e-06
        %v4438 = vadd.f32 %v4434, 1e-06
        %v4439 = vadd.f32 %v4435, 1e-06
        %v4440 = vadd.f32 %v4436, 1e-06
        %v4441 = vrsqrt.pop %v4437
        %v4442 = vrsqrt.pop %v4438
        %v4443 = vrsqrt.pop %v4439
        %v4444 = vrsqrt.pop %v4440
        %v4445 = vmul.f32 %v4417, %v4441
        %v4446 = vmul.f32 %v4418, %v4442
        %v4447 = vmul.f32 %v4419, %v4443
        %v4448 = vmul.f32 %v4420, %v4444
        %v4449 = vlaneseq
        %v4450 = vshrl.u32 %v4449, 7
        %v4451 = vsub.s32 0, %v4450
        %v4452 = vrot.slane %v1288, %v4451
        %v4453 = vmul.f32 %v4445, %v4452
        %v4454 = vmul.f32 %v4446, %v4452
        %v4455 = vmul.f32 %v4447, %v4452
        %v4456 = vmul.f32 %v4448, %v4452
        %v4457 = vlaneseq
        %v4458 = vshrl.u32 %v4457, 7
        %v4459 = vsub.s32 1, %v4458
        %v4460 = vrot.slane %v1288, %v4459
        %v4461 = vadd.f32 %v4453, %v4460
        %v4462 = vadd.f32 %v4454, %v4460
        %v4463 = vadd.f32 %v4455, %v4460
        %v4464 = vadd.f32 %v4456, %v4460
        %v4465 = vpack.c.bf16 %v4462, %v4461
        %v4466 = vpack.c.bf16 %v4464, %v4463
        %v4467 = vld [vmem:[%s1078] sm:$0xff]
        %v4468 = vld [vmem:[%s1078 + $0x8] sm:$0xff]
        %v4469 = vld [vmem:[%s1078 + $0x10] sm:$0xff]
        %v4470 = vld [vmem:[%s1078 + $0x18] sm:$0xff]
        %v4471 = vld [vmem:[%s1078 + $0x20] sm:$0xff]
        %v4472 = vld [vmem:[%s1078 + $0x28] sm:$0xff]
        %v4473 = vld [vmem:[%s1078 + $0x30] sm:$0xff]
        %v4474 = vld [vmem:[%s1078 + $0x38] sm:$0xff]
        %v4475 = vld [vmem:[%s1078 + $0x40] sm:$0xff]
        %v4476 = vld [vmem:[%s1078 + $0x48] sm:$0xff]
        %v4477 = vld [vmem:[%s1078 + $0x50] sm:$0xff]
        %v4478 = vld [vmem:[%s1078 + $0x58] sm:$0xff]
        %v4479 = vld [vmem:[%s1078 + $0x60] sm:$0xff]
        %v4480 = vld [vmem:[%s1078 + $0x68] sm:$0xff]
        %v4481 = vld [vmem:[%s1078 + $0x70] sm:$0xff]
        %v4482 = vld [vmem:[%s1078 + $0x78] sm:$0xff]
        %v4483 = vld [vmem:[%s1258] sm:$0x3]
        %v4485 = vlaneseq
        %v4486 = vshrl.u32 %v4485, 7
        %v4487 = vsub.s32 0, %v4486
        %v4488 = vrot.slane %v4483, %v4487
        %v4489 = vlaneseq
        %v4490 = vshrl.u32 %v4489, 7
        %v4491 = vsub.s32 1, %v4490
        %v4492 = vrot.slane %v4483, %v4491
        %v4511 = vunpack.c.l.b16 %v4467
        %v4512 = vunpack.c.h.b16 %v4467
        %v4513 = vunpack.c.l.b16 %v4468
        %v4514 = vunpack.c.h.b16 %v4468
        %v4515 = vunpack.c.l.b16 %v4469
        %v4516 = vunpack.c.h.b16 %v4469
        %v4517 = vunpack.c.l.b16 %v4470
        %v4518 = vunpack.c.h.b16 %v4470
        %v4519 = vunpack.c.l.b16 %v4471
        %v4520 = vunpack.c.h.b16 %v4471
        %v4521 = vunpack.c.l.b16 %v4472
        %v4522 = vunpack.c.h.b16 %v4472
        %v4523 = vunpack.c.l.b16 %v4473
        %v4524 = vunpack.c.h.b16 %v4473
        %v4525 = vunpack.c.l.b16 %v4474
        %v4526 = vunpack.c.h.b16 %v4474
        %v4527 = vunpack.c.l.b16 %v4475
        %v4528 = vunpack.c.h.b16 %v4475
        %v4529 = vunpack.c.l.b16 %v4476
        %v4530 = vunpack.c.h.b16 %v4476
        %v4531 = vunpack.c.l.b16 %v4477
        %v4532 = vunpack.c.h.b16 %v4477
        %v4533 = vunpack.c.l.b16 %v4478
        %v4534 = vunpack.c.h.b16 %v4478
        %v4535 = vunpack.c.l.b16 %v4479
        %v4536 = vunpack.c.h.b16 %v4479
        %v4537 = vunpack.c.l.b16 %v4480
        %v4538 = vunpack.c.h.b16 %v4480
        %v4539 = vunpack.c.l.b16 %v4481
        %v4540 = vunpack.c.h.b16 %v4481
        %v4541 = vunpack.c.l.b16 %v4482
        %v4542 = vunpack.c.h.b16 %v4482
        %v4543 = vpack.c.b16 %v4513, %v4511
        %v4544 = vpack.c.b16 %v4514, %v4512
        %v4545 = vpack.c.b16 %v4517, %v4515
        %v4546 = vpack.c.b16 %v4518, %v4516
        %v4547 = vpack.c.b16 %v4521, %v4519
        %v4548 = vpack.c.b16 %v4522, %v4520
        %v4549 = vpack.c.b16 %v4525, %v4523
        %v4550 = vpack.c.b16 %v4526, %v4524
        %v4551 = vpack.c.b16 %v4529, %v4527
        %v4552 = vpack.c.b16 %v4530, %v4528
        %v4553 = vpack.c.b16 %v4533, %v4531
        %v4554 = vpack.c.b16 %v4534, %v4532
        %v4555 = vpack.c.b16 %v4537, %v4535
        %v4556 = vpack.c.b16 %v4538, %v4536
        %v4557 = vpack.c.b16 %v4541, %v4539
        %v4558 = vpack.c.b16 %v4542, %v4540
        %4575 = vmatprep.subr.bf16.mxu0 %v4558
        %4576 = vmatpush1.bf16.msra.mxu0 %v4557
        %4577 = vmatprep.subr.bf16.mxu0 %v4556
        %4578 = vmatpush1.bf16.msra.mxu0 %v4555
        %4579 = vmatprep.subr.bf16.mxu0 %v4554
        %4580 = vmatpush1.bf16.msra.mxu0 %v4553
        %4581 = vmatprep.subr.bf16.mxu0 %v4552
        %4582 = vmatpush1.bf16.msra.mxu0 %v4551
        %4583 = vmatprep.subr.bf16.mxu0 %v4550
        %4584 = vmatpush1.bf16.msra.mxu0 %v4549
        %4585 = vmatprep.subr.bf16.mxu0 %v4548
        %4586 = vmatpush1.bf16.msra.mxu0 %v4547
        %4587 = vmatprep.subr.bf16.mxu0 %v4546
        %4588 = vmatpush1.bf16.msra.mxu0 %v4545
        %4589 = vmatprep.subr.bf16.mxu0 %v4544
        %4590 = vmatpush1.bf16.msra.mxu0 %v4543
        %4591 = vmatprep.subr.bf16.mxu0 0
        %4592 = vmatpush2.bf16.msra.mxu0 0
        %4593 = vmatprep.subr.bf16.mxu0 0
        %4594 = vmatpush2.bf16.msra.mxu0 0
        %4595 = vmatprep.subr.bf16.mxu0 0
        %4596 = vmatpush2.bf16.msra.mxu0 0
        %4597 = vmatprep.subr.bf16.mxu0 0
        %4598 = vmatpush2.bf16.msra.mxu0 0
        %4599 = vmatprep.subr.bf16.mxu0 0
        %4600 = vmatpush2.bf16.msra.mxu0 0
        %4601 = vmatprep.subr.bf16.mxu0 0
        %4602 = vmatpush2.bf16.msra.mxu0 0
        %4603 = vmatprep.subr.bf16.mxu0 0
        %4604 = vmatpush2.bf16.msra.mxu0 0
        %4605 = vmatprep.subr.bf16.mxu0 0
        %4606 = vmatpush2.bf16.msra.mxu0 0
        %4607 = vmatprep.mubr.bf16.mxu0 0
        %4608 = vmatmul.mubr.bf16.gmra.mxu0 %v4465
        %v4609 = vpop.f32.mrf.mxu0
        %v4610 = vadd.f32 %v4488, %v4609
        %v4611 = vpop.f32.mrf.mxu0
        %v4612 = vadd.f32 %v4492, %v4611
        %v4613 = vpop.f32.mrf.mxu0
        %v4614 = vadd.f32 %v4488, %v4613
        %v4615 = vpop.f32.mrf.mxu0
        %v4616 = vadd.f32 %v4492, %v4615
        %4617 = vmatprep.mubr.bf16.mxu0 0
        %4618 = vmatmul.mubr.bf16.gmra.mxu0 %v4466
        %v4619 = vpop.f32.mrf.mxu0
        %v4620 = vadd.f32 %v4488, %v4619
        %v4621 = vpop.f32.mrf.mxu0
        %v4622 = vadd.f32 %v4492, %v4621
        %v4623 = vpop.f32.mrf.mxu0
        %v4624 = vadd.f32 %v4488, %v4623
        %v4625 = vpop.f32.mrf.mxu0
        %v4626 = vadd.f32 %v4492, %v4625
        %4627 = vdwg.mxu0
        %v4628 = vmul.f32 %v4610, 0.5
        %v4629 = vmul.f32 %v4612, 0.5
        %v4630 = vmul.f32 %v4614, 0.5
        %v4631 = vmul.f32 %v4616, 0.5
        %v4632 = vmul.f32 %v4620, 0.5
        %v4633 = vmul.f32 %v4622, 0.5
        %v4634 = vmul.f32 %v4624, 0.5
        %v4635 = vmul.f32 %v4626, 0.5
        %v4636 = vmul.f32 %v4610, 0.044715
        %v4637 = vmul.f32 %v4612, 0.044715
        %v4638 = vmul.f32 %v4614, 0.044715
        %v4639 = vmul.f32 %v4616, 0.044715
        %v4640 = vmul.f32 %v4620, 0.044715
        %v4641 = vmul.f32 %v4622, 0.044715
        %v4642 = vmul.f32 %v4624, 0.044715
        %v4643 = vmul.f32 %v4626, 0.044715
        %v4644 = vmul.f32 %v4636, %v4610
        %v4645 = vmul.f32 %v4637, %v4612
        %v4646 = vmul.f32 %v4638, %v4614
        %v4647 = vmul.f32 %v4639, %v4616
        %v4648 = vmul.f32 %v4640, %v4620
        %v4649 = vmul.f32 %v4641, %v4622
        %v4650 = vmul.f32 %v4642, %v4624
        %v4651 = vmul.f32 %v4643, %v4626
        %v4652 = vmul.f32 %v4644, %v4610
        %v4653 = vmul.f32 %v4645, %v4612
        %v4654 = vmul.f32 %v4646, %v4614
        %v4655 = vmul.f32 %v4647, %v4616
        %v4656 = vmul.f32 %v4648, %v4620
        %v4657 = vmul.f32 %v4649, %v4622
        %v4658 = vmul.f32 %v4650, %v4624
        %v4659 = vmul.f32 %v4651, %v4626
        %v4660 = vadd.f32 %v4610, %v4652
        %v4661 = vadd.f32 %v4612, %v4653
        %v4662 = vadd.f32 %v4614, %v4654
        %v4663 = vadd.f32 %v4616, %v4655
        %v4664 = vadd.f32 %v4620, %v4656
        %v4665 = vadd.f32 %v4622, %v4657
        %v4666 = vadd.f32 %v4624, %v4658
        %v4667 = vadd.f32 %v4626, %v4659
        %v4668 = vmul.f32 %v4660, 0.7978846
        %v4669 = vmul.f32 %v4661, 0.7978846
        %v4670 = vmul.f32 %v4662, 0.7978846
        %v4671 = vmul.f32 %v4663, 0.7978846
        %v4672 = vmul.f32 %v4664, 0.7978846
        %v4673 = vmul.f32 %v4665, 0.7978846
        %v4674 = vmul.f32 %v4666, 0.7978846
        %v4675 = vmul.f32 %v4667, 0.7978846
        %v4676 = vtanh.pop %v4668
        %v4677 = vtanh.pop %v4669
        %v4678 = vtanh.pop %v4670
        %v4679 = vtanh.pop %v4671
        %v4680 = vtanh.pop %v4672
        %v4681 = vtanh.pop %v4673
        %v4682 = vtanh.pop %v4674
        %v4683 = vtanh.pop %v4675
        %v4684 = vadd.f32 %v4676, 1.0
        %v4685 = vadd.f32 %v4677, 1.0
        %v4686 = vadd.f32 %v4678, 1.0
        %v4687 = vadd.f32 %v4679, 1.0
        %v4688 = vadd.f32 %v4680, 1.0
        %v4689 = vadd.f32 %v4681, 1.0
        %v4690 = vadd.f32 %v4682, 1.0
        %v4691 = vadd.f32 %v4683, 1.0
        %v4692 = vmul.f32 %v4628, %v4684
        %v4693 = vmul.f32 %v4629, %v4685
        %v4694 = vmul.f32 %v4630, %v4686
        %v4695 = vmul.f32 %v4631, %v4687
        %v4696 = vmul.f32 %v4632, %v4688
        %v4697 = vmul.f32 %v4633, %v4689
        %v4698 = vmul.f32 %v4634, %v4690
        %v4699 = vmul.f32 %v4635, %v4691
        %v4700 = vpack.c.bf16 %v4694, %v4692
        %v4701 = vpack.c.bf16 %v4695, %v4693
        %v4702 = vpack.c.bf16 %v4698, %v4696
        %v4703 = vpack.c.bf16 %v4699, %v4697
        %v4704 = vld [vmem:[%s1087] sm:$0xf]
        %v4705 = vld [vmem:[%s1087 + $0x4] sm:$0xf]
        %v4706 = vld [vmem:[%s1087 + $0x8] sm:$0xf]
        %v4707 = vld [vmem:[%s1087 + $0xc] sm:$0xf]
        %v4708 = vld [vmem:[%s1087 + $0x10] sm:$0xf]
        %v4709 = vld [vmem:[%s1087 + $0x14] sm:$0xf]
        %v4710 = vld [vmem:[%s1087 + $0x18] sm:$0xf]
        %v4711 = vld [vmem:[%s1087 + $0x1c] sm:$0xf]
        %v4712 = vld [vmem:[%s1087 + $0x20] sm:$0xf]
        %v4713 = vld [vmem:[%s1087 + $0x24] sm:$0xf]
        %v4714 = vld [vmem:[%s1087 + $0x28] sm:$0xf]
        %v4715 = vld [vmem:[%s1087 + $0x2c] sm:$0xf]
        %v4716 = vld [vmem:[%s1087 + $0x30] sm:$0xf]
        %v4717 = vld [vmem:[%s1087 + $0x34] sm:$0xf]
        %v4718 = vld [vmem:[%s1087 + $0x38] sm:$0xf]
        %v4719 = vld [vmem:[%s1087 + $0x3c] sm:$0xf]
        %v4720 = vld [vmem:[%s1087 + $0x40] sm:$0xf]
        %v4721 = vld [vmem:[%s1087 + $0x44] sm:$0xf]
        %v4722 = vld [vmem:[%s1087 + $0x48] sm:$0xf]
        %v4723 = vld [vmem:[%s1087 + $0x4c] sm:$0xf]
        %v4724 = vld [vmem:[%s1087 + $0x50] sm:$0xf]
        %v4725 = vld [vmem:[%s1087 + $0x54] sm:$0xf]
        %v4726 = vld [vmem:[%s1087 + $0x58] sm:$0xf]
        %v4727 = vld [vmem:[%s1087 + $0x5c] sm:$0xf]
        %v4728 = vld [vmem:[%s1087 + $0x60] sm:$0xf]
        %v4729 = vld [vmem:[%s1087 + $0x64] sm:$0xf]
        %v4730 = vld [vmem:[%s1087 + $0x68] sm:$0xf]
        %v4731 = vld [vmem:[%s1087 + $0x6c] sm:$0xf]
        %v4732 = vld [vmem:[%s1087 + $0x70] sm:$0xf]
        %v4733 = vld [vmem:[%s1087 + $0x74] sm:$0xf]
        %v4734 = vld [vmem:[%s1087 + $0x78] sm:$0xf]
        %v4735 = vld [vmem:[%s1087 + $0x7c] sm:$0xf]
        %v4736 = vld [vmem:[%s1261] sm:$0x1]
        %v4738 = vlaneseq
        %v4739 = vshrl.u32 %v4738, 7
        %v4740 = vsub.s32 0, %v4739
        %v4741 = vrot.slane %v4736, %v4740
        %v4775 = vunpack.c.l.b16 %v4704
        %v4776 = vunpack.c.l.b16 %v4705
        %v4777 = vunpack.c.l.b16 %v4706
        %v4778 = vunpack.c.l.b16 %v4707
        %v4779 = vunpack.c.l.b16 %v4708
        %v4780 = vunpack.c.l.b16 %v4709
        %v4781 = vunpack.c.l.b16 %v4710
        %v4782 = vunpack.c.l.b16 %v4711
        %v4783 = vunpack.c.l.b16 %v4712
        %v4784 = vunpack.c.l.b16 %v4713
        %v4785 = vunpack.c.l.b16 %v4714
        %v4786 = vunpack.c.l.b16 %v4715
        %v4787 = vunpack.c.l.b16 %v4716
        %v4788 = vunpack.c.l.b16 %v4717
        %v4789 = vunpack.c.l.b16 %v4718
        %v4790 = vunpack.c.l.b16 %v4719
        %v4791 = vunpack.c.l.b16 %v4720
        %v4792 = vunpack.c.l.b16 %v4721
        %v4793 = vunpack.c.l.b16 %v4722
        %v4794 = vunpack.c.l.b16 %v4723
        %v4795 = vunpack.c.l.b16 %v4724
        %v4796 = vunpack.c.l.b16 %v4725
        %v4797 = vunpack.c.l.b16 %v4726
        %v4798 = vunpack.c.l.b16 %v4727
        %v4799 = vunpack.c.l.b16 %v4728
        %v4800 = vunpack.c.l.b16 %v4729
        %v4801 = vunpack.c.l.b16 %v4730
        %v4802 = vunpack.c.l.b16 %v4731
        %v4803 = vunpack.c.l.b16 %v4732
        %v4804 = vunpack.c.l.b16 %v4733
        %v4805 = vunpack.c.l.b16 %v4734
        %v4806 = vunpack.c.l.b16 %v4735
        %v4807 = vpack.c.b16 %v4776, %v4775
        %v4808 = vpack.c.b16 %v4778, %v4777
        %v4809 = vpack.c.b16 %v4780, %v4779
        %v4810 = vpack.c.b16 %v4782, %v4781
        %v4811 = vpack.c.b16 %v4784, %v4783
        %v4812 = vpack.c.b16 %v4786, %v4785
        %v4813 = vpack.c.b16 %v4788, %v4787
        %v4814 = vpack.c.b16 %v4790, %v4789
        %v4815 = vpack.c.b16 %v4792, %v4791
        %v4816 = vpack.c.b16 %v4794, %v4793
        %v4817 = vpack.c.b16 %v4796, %v4795
        %v4818 = vpack.c.b16 %v4798, %v4797
        %v4819 = vpack.c.b16 %v4800, %v4799
        %v4820 = vpack.c.b16 %v4802, %v4801
        %v4821 = vpack.c.b16 %v4804, %v4803
        %v4822 = vpack.c.b16 %v4806, %v4805
        %4839 = vmatprep.subr.bf16.mxu0 0
        %4840 = vmatpush1.bf16.msra.mxu0 %v4814
        %4841 = vmatprep.subr.bf16.mxu0 0
        %4842 = vmatpush1.bf16.msra.mxu0 %v4813
        %4843 = vmatprep.subr.bf16.mxu0 0
        %4844 = vmatpush1.bf16.msra.mxu0 %v4812
        %4845 = vmatprep.subr.bf16.mxu0 0
        %4846 = vmatpush1.bf16.msra.mxu0 %v4811
        %4847 = vmatprep.subr.bf16.mxu0 0
        %4848 = vmatpush1.bf16.msra.mxu0 %v4810
        %4849 = vmatprep.subr.bf16.mxu0 0
        %4850 = vmatpush1.bf16.msra.mxu0 %v4809
        %4851 = vmatprep.subr.bf16.mxu0 0
        %4852 = vmatpush1.bf16.msra.mxu0 %v4808
        %4853 = vmatprep.subr.bf16.mxu0 0
        %4854 = vmatpush1.bf16.msra.mxu0 %v4807
        %4855 = vmatprep.subr.bf16.mxu0 0
        %4856 = vmatpush2.bf16.msra.mxu0 %v4822
        %4857 = vmatprep.subr.bf16.mxu0 0
        %4858 = vmatpush2.bf16.msra.mxu0 %v4821
        %4859 = vmatprep.subr.bf16.mxu0 0
        %4860 = vmatpush2.bf16.msra.mxu0 %v4820
        %4861 = vmatprep.subr.bf16.mxu0 0
        %4862 = vmatpush2.bf16.msra.mxu0 %v4819
        %4863 = vmatprep.subr.bf16.mxu0 0
        %4864 = vmatpush2.bf16.msra.mxu0 %v4818
        %4865 = vmatprep.subr.bf16.mxu0 0
        %4866 = vmatpush2.bf16.msra.mxu0 %v4817
        %4867 = vmatprep.subr.bf16.mxu0 0
        %4868 = vmatpush2.bf16.msra.mxu0 %v4816
        %4869 = vmatprep.subr.bf16.mxu0 0
        %4870 = vmatpush2.bf16.msra.mxu0 %v4815
        %4871 = vmatprep.mubr.bf16.mxu0 %v4701
        %4872 = vmatmul.mubr.bf16.gmra.mxu0 %v4700
        %v4873 = vpop.f32.mrf.mxu0
        %v4874 = vadd.f32 %v4741, %v4873
        %v4875 = vpop.f32.mrf.mxu0
        %v4876 = vpop.f32.mrf.mxu0
        %v4877 = vadd.f32 %v4741, %v4876
        %v4878 = vpop.f32.mrf.mxu0
        %4879 = vmatprep.mubr.bf16.mxu0 %v4703
        %4880 = vmatmul.mubr.bf16.gmra.mxu0 %v4702
        %v4881 = vpop.f32.mrf.mxu0
        %v4882 = vadd.f32 %v4741, %v4881
        %v4883 = vpop.f32.mrf.mxu0
        %v4884 = vpop.f32.mrf.mxu0
        %v4885 = vadd.f32 %v4741, %v4884
        %v4886 = vpop.f32.mrf.mxu0
        %4887 = vdwg.mxu0
        %v4888 = vadd.f32 %v4874, %v4401
        %v4889 = vadd.f32 %v4877, %v4402
        %v4890 = vadd.f32 %v4882, %v4403
        %v4891 = vadd.f32 %v4885, %v4404
        %4892 = vst [vmem:[#allocation2] sm:$0xff] %v4888
        %4893 = vst [vmem:[#allocation2 + $0x8] sm:$0xff] %v4889
        %4894 = vst [vmem:[#allocation2 + $0x10] sm:$0xff] %v4890
        %4895 = vst [vmem:[#allocation2 + $0x18] sm:$0xff] %v4891
        %p4896 = scmp.eq.s32.totalorder %s65, 1
        // Predicated region
        $region153: #{tpu_custom_call.1} parent=95 // pred_check
          %p4897 = pneg %p4896
        $region154: #{tpu_custom_call.1} parent=95 // pred_check_branch
          %4899 = sbr.rel (%p4897) target = $region156
        $region155: #{tpu_custom_call.1} parent=95 // pred_region
          %4900 = vadd.xlane.f32.xlu0 %v4888
          %v4901 = vpop.xlane.xlu0 %4900
          %4902 = vadd.xlane.f32.xlu0 %v4889
          %v4903 = vpop.xlane.xlu0 %4902
          %4904 = vadd.xlane.f32.xlu0 %v4890
          %v4905 = vpop.xlane.xlu0 %4904
          %4906 = vadd.xlane.f32.xlu0 %v4891
          %v4907 = vpop.xlane.xlu0 %4906
          %v4908 = vmul.f32 %v4901, %v1331
          %v4909 = vmul.f32 %v4903, %v1331
          %v4910 = vmul.f32 %v4905, %v1331
          %v4911 = vmul.f32 %v4907, %v1331
          %v4912 = vsub.f32 %v4888, %v4908
          %v4913 = vsub.f32 %v4889, %v4909
          %v4914 = vsub.f32 %v4890, %v4910
          %v4915 = vsub.f32 %v4891, %v4911
          %v4916 = vmul.f32 %v4912, %v4912
          %v4917 = vmul.f32 %v4913, %v4913
          %v4918 = vmul.f32 %v4914, %v4914
          %v4919 = vmul.f32 %v4915, %v4915
          %4920 = vadd.xlane.f32.xlu0 %v4916
          %v4921 = vpop.xlane.xlu0 %4920
          %4922 = vadd.xlane.f32.xlu0 %v4917
          %v4923 = vpop.xlane.xlu0 %4922
          %4924 = vadd.xlane.f32.xlu0 %v4918
          %v4925 = vpop.xlane.xlu0 %4924
          %4926 = vadd.xlane.f32.xlu0 %v4919
          %v4927 = vpop.xlane.xlu0 %4926
          %v4928 = vmul.f32 %v4921, %v1331
          %v4929 = vmul.f32 %v4923, %v1331
          %v4930 = vmul.f32 %v4925, %v1331
          %v4931 = vmul.f32 %v4927, %v1331
          %v4932 = vadd.f32 %v4928, 1e-06
          %v4933 = vadd.f32 %v4929, 1e-06
          %v4934 = vadd.f32 %v4930, 1e-06
          %v4935 = vadd.f32 %v4931, 1e-06
          %v4936 = vrsqrt.pop %v4932
          %v4937 = vrsqrt.pop %v4933
          %v4938 = vrsqrt.pop %v4934
          %v4939 = vrsqrt.pop %v4935
          %v4940 = vmul.f32 %v4912, %v4936
          %v4941 = vmul.f32 %v4913, %v4937
          %v4942 = vmul.f32 %v4914, %v4938
          %v4943 = vmul.f32 %v4915, %v4939
          %v4944 = vlaneseq
          %v4945 = vshrl.u32 %v4944, 7
          %v4946 = vsub.s32 0, %v4945
          %v4947 = vrot.slane %v1289, %v4946
          %v4948 = vmul.f32 %v4940, %v4947
          %v4949 = vmul.f32 %v4941, %v4947
          %v4950 = vmul.f32 %v4942, %v4947
          %v4951 = vmul.f32 %v4943, %v4947
          %v4952 = vlaneseq
          %v4953 = vshrl.u32 %v4952, 7
          %v4954 = vsub.s32 1, %v4953
          %v4955 = vrot.slane %v1289, %v4954
          %v4956 = vadd.f32 %v4948, %v4955
          %v4957 = vadd.f32 %v4949, %v4955
          %v4958 = vadd.f32 %v4950, %v4955
          %v4959 = vadd.f32 %v4951, %v4955
          %4960 = vst [vmem:[%s1221] sm:$0xff] %v4956
          %4961 = vst [vmem:[%s1221 + $0x8] sm:$0xff] %v4957
          %4962 = vst [vmem:[%s1221 + $0x10] sm:$0xff] %v4958
          %4963 = vst [vmem:[%s1221 + $0x18] sm:$0xff] %v4959
        $region156: #{tpu_custom_call.1} parent=95 // pred_fallthru
          _
        %s4964 = sand.u32 %s574, 1
        %s4965 = scalar_lea.sflag [#allocation5], %s4964
        %s4966 = sand.u32 %s574, 1
        %s4967 = smul.addr %s4966, 32
        %s4968 = scalar_lea.vmem [#allocation24], %s4967
        %s4969 = sand.u32 %s60, 1
        %s4970 = scalar_lea.sflag [#allocation26], %s4969
        %s4971 = sand.u32 %s602, 1
        %s4972 = smul.addr %s4971, 16
        %s4973 = scalar_lea.vmem [#allocation25], %s4972
        %s4974 = sand.u32 %s60, 1
        %s4975 = scalar_lea.sflag [#allocation26], %s4974
        %s4976 = sand.u32 %s630, 1
        %s4977 = smul.addr %s4976, 16
        %s4978 = scalar_lea.vmem [#allocation27], %s4977
        // Predicated region
        $region157: #{tpu_custom_call.1} parent=95 // pred_check
          %p4979 = pneg %p584
        $region158: #{tpu_custom_call.1} parent=95 // pred_check_branch
          %4981 = sbr.rel (%p4979) target = $region160
        $region159: #{tpu_custom_call.1} parent=95 // pred_region
          %s4982 = smul.u32 2, %s64
          %s4984 = ssub.s32 512, 512
          %4985 = vsyncadd %s4965, %s4984
          %s4986 = smul.addr %s4982, 2
          %s4987 = smul.addr %s4986, 128
          %s4988 = scalar_lea.hbm %s19, %s4987
          %s4989 = sshll.u32 %s4968, 4
          %s4990 = int_to_ptr.vmem [resolvable:$true] %s4989
          %4995 = dma.vmem_to_hbm [thread:$0]  %s4990, 512, %s4988, %s4965, 128, 128, 8
        $region160: #{tpu_custom_call.1} parent=95 // pred_fallthru
          _
        // Predicated region
        $region161: #{tpu_custom_call.1} parent=95 // pred_check
          %p4996 = pneg %p612
        $region162: #{tpu_custom_call.1} parent=95 // pred_check_branch
          %4998 = sbr.rel (%p4996) target = $region164
        $region163: #{tpu_custom_call.1} parent=95 // pred_region
          %s4999 = smul.u32 2, %s64
          %s5001 = ssub.s32 256, 256
          %5002 = vsyncadd %s4970, %s5001
          %s5003 = smul.addr %s4999, 2
          %s5004 = smul.addr %s65, 8
          %s5005 = sadd.s32 %s5003, %s5004
          %s5006 = smul.addr %s5005, 64
          %s5007 = scalar_lea.hbm %s20, %s5006
          %s5008 = sshll.u32 %s4973, 4
          %s5009 = int_to_ptr.vmem [resolvable:$true] %s5008
          %5014 = dma.vmem_to_hbm [thread:$0]  %s5009, 256, %s5007, %s4970, 64, 64, 4
        $region164: #{tpu_custom_call.1} parent=95 // pred_fallthru
          _
        // Predicated region
        $region165: #{tpu_custom_call.1} parent=95 // pred_check
          %p5015 = pneg %p640
        $region166: #{tpu_custom_call.1} parent=95 // pred_check_branch
          %5017 = sbr.rel (%p5015) target = $region168
        $region167: #{tpu_custom_call.1} parent=95 // pred_region
          %s5018 = smul.u32 2, %s64
          %s5020 = ssub.s32 256, 256
          %5021 = vsyncadd %s4975, %s5020
          %s5022 = smul.addr %s5018, 2
          %s5023 = smul.addr %s65, 8
          %s5024 = sadd.s32 %s5022, %s5023
          %s5025 = smul.addr %s5024, 64
          %s5026 = scalar_lea.hbm %s21, %s5025
          %s5027 = sshll.u32 %s4978, 4
          %s5028 = int_to_ptr.vmem [resolvable:$true] %s5027
          %5033 = dma.vmem_to_hbm [thread:$0]  %s5028, 256, %s5026, %s4975, 64, 64, 4
        $region168: #{tpu_custom_call.1} parent=95 // pred_fallthru
          _
      $region96: #{tpu_custom_call.1} parent=5 // pred_fallthru
        _
      %p5034 = scmp.le.s32.totalorder 2, %s55
      // Predicated region
      $region169: #{tpu_custom_call.1} parent=5 // pred_check
        %p5035 = pneg %p5034
      $region170: #{tpu_custom_call.1} parent=5 // pred_check_branch
        %5037 = sbr.rel (%p5035) target = $region172
      $region171: #{tpu_custom_call.1} parent=5 // pred_region
        %s5038 = ssub.s32 %s55, 2
        // Predicated region
        $region173: #{tpu_custom_call.1} parent=171 // pred_check
          %p5039 = pneg %p590
        $region174: #{tpu_custom_call.1} parent=171 // pred_check_branch
          %5041 = sbr.rel (%p5039) target = $region176
        $region175: #{tpu_custom_call.1} parent=171 // pred_region
          %s5042 = sand.u32 %s575, 1
          %s5043 = scalar_lea.sflag [#allocation5], %s5042
          %s5044 = sand.u32 %s575, 1
          %s5045 = smul.addr %s5044, 32
          %s5046 = scalar_lea.vmem [#allocation24], %s5045
          %5047 = dma.done %s5043, 512
        $region176: #{tpu_custom_call.1} parent=171 // pred_fallthru
          _
        // Predicated region
        $region177: #{tpu_custom_call.1} parent=171 // pred_check
          %p5048 = pneg %p618
        $region178: #{tpu_custom_call.1} parent=171 // pred_check_branch
          %5050 = sbr.rel (%p5048) target = $region180
        $region179: #{tpu_custom_call.1} parent=171 // pred_region
          %s5051 = sand.u32 %s61, 1
          %s5052 = scalar_lea.sflag [#allocation26], %s5051
          %s5053 = sand.u32 %s603, 1
          %s5054 = smul.addr %s5053, 16
          %s5055 = scalar_lea.vmem [#allocation25], %s5054
          %5056 = dma.done %s5052, 256
        $region180: #{tpu_custom_call.1} parent=171 // pred_fallthru
          _
        // Predicated region
        $region181: #{tpu_custom_call.1} parent=171 // pred_check
          %p5057 = pneg %p646
        $region182: #{tpu_custom_call.1} parent=171 // pred_check_branch
          %5059 = sbr.rel (%p5057) target = $region184
        $region183: #{tpu_custom_call.1} parent=171 // pred_region
          %s5060 = sand.u32 %s61, 1
          %s5061 = scalar_lea.sflag [#allocation26], %s5060
          %s5062 = sand.u32 %s631, 1
          %s5063 = smul.addr %s5062, 16
          %s5064 = scalar_lea.vmem [#allocation27], %s5063
          %5065 = dma.done %s5061, 256
        $region184: #{tpu_custom_call.1} parent=171 // pred_fallthru
          _
      $region172: #{tpu_custom_call.1} parent=5 // pred_fallthru
        _
    $region6: #{tpu_custom_call.1} parent=1 // loop_footer
      %s59 = sadd.s32 1, %s55
    $region7: #{tpu_custom_call.1} parent=1 // loop_footer_branch
      %54 = sbr.rel target = $region3
    $region8: #{tpu_custom_call.1} parent=1 // loop_exit
      _
    %5066 = vsyncpa [#allocation4], 1
    %s5067 = scalar_lea.sflag [#allocation4], 1
    %5068 = vsyncpa %s5067, 1
    %5069 = vsyncpa [#allocation7], 1
    %s5070 = scalar_lea.sflag [#allocation7], 1
    %5071 = vsyncpa %s5070, 1
    %5072 = vsyncpa [#allocation10], 1
    %s5073 = scalar_lea.sflag [#allocation10], 1
    %5074 = vsyncpa %s5073, 1
    %5075 = vsyncpa [#allocation13], 1
    %s5076 = scalar_lea.sflag [#allocation13], 1
    %5077 = vsyncpa %s5076, 1
    %5078 = vsyncpa [#allocation16], 1
    %s5079 = scalar_lea.sflag [#allocation16], 1
    %5080 = vsyncpa %s5079, 1
    %5081 = vsyncpa [#allocation19], 1
    %s5082 = scalar_lea.sflag [#allocation19], 1
    %5083 = vsyncpa %s5082, 1
    %5084 = vsyncpa [#allocation22], 1
    %s5085 = scalar_lea.sflag [#allocation22], 1
    %5086 = vsyncpa %s5085, 1
    %5087 = vsyncpa [#allocation5], 1
    %s5088 = scalar_lea.sflag [#allocation5], 1
    %5089 = vsyncpa %s5088, 1
    %5090 = vsyncpa [#allocation26], 1
    %s5091 = scalar_lea.sflag [#allocation26], 1
    %5092 = vsyncpa %s5091, 1

</llo_original>
